<compile_context>
chip_gen: v6e
topology: v6e:2x2x1
jax: 0.10.0
libtpu: 0.0.40
codegen_flags: <defaults>
</compile_context>

<pallas_src>
import functools

import jax
import jax.numpy as jnp
from jax import lax
from jax.experimental import pallas as pl
from jax.experimental.pallas import tpu as pltpu

EPS = 1e-5
LANE = 128
DEFAULT_TILE_M = 512                 # halve-ish of a v5e/v6e-max tile; safe on v7x (64 MiB VMEM)
VMEM_LIMIT_BYTES = 32 * 1024 * 1024  # explicit scoped-VMEM budget (works on v5e/v6e/v7x)

# Matmul operand dtype. jnp.bfloat16 is the recommended setting on v6e/v7x
# (halves HBM traffic / VMEM tiles, ~2x MXU); kept at float32 here for strict
# numerical parity with the float32 PyTorch reference. BN statistics and the
# BN apply are always float32.
MATMUL_DTYPE = jnp.float32


def _round_up(x, m):
    return (x + m - 1) // m * m


# -----------------------------------------------------------------------------
# Pass 1 kernel: conv-as-matmul (MXU) + bias + optional ReLU, writes the raw
# activation tile and per-tile per-channel (sum, sumsq) partials.
# -----------------------------------------------------------------------------
def _conv_stats_kernel(*refs, apply_relu, add_bias, tile_m, valid_rows):
    if add_bias:
        x_ref, w_ref, b_ref, y_ref, s_ref = refs
    else:
        x_ref, w_ref, y_ref, s_ref = refs

    acc = jnp.dot(x_ref[...], w_ref[...], preferred_element_type=jnp.float32)
    if add_bias:
        acc = acc + b_ref[...].astype(jnp.float32)
    if apply_relu:
        acc = jnp.maximum(acc, 0.0)
    y_ref[...] = acc

    if valid_rows is not None:
        # Last tile may contain padded (fake) rows: exclude them from the stats.
        row = (pl.program_id(0) * tile_m
               + lax.broadcasted_iota(jnp.int32, acc.shape, 0))
        acc = jnp.where(row < valid_rows, acc, 0.0)

    s = jnp.sum(acc, axis=0, keepdims=True)            # (1, Cpad)
    ss = jnp.sum(acc * acc, axis=0, keepdims=True)     # (1, Cpad)
    s_ref[...] = jnp.concatenate([s, ss], axis=0)[None, :, :]   # (1, 2, Cpad)


def conv_stats_pallas(patches, w_mat, bias, *, apply_relu, add_bias, tile_m,
                      valid_rows):
    """patches: (M_pad, K_pad), w_mat: (K_pad, C_pad), bias: (C_pad,) or None.

    Returns (y, stats): y (M_pad, C_pad) f32 raw activation,
    stats (num_tiles, 2, C_pad) per-tile [sum, sumsq]."""
    m_pad, k_pad = patches.shape
    c_pad = w_mat.shape[1]
    num_tiles = m_pad // tile_m

    kernel = functools.partial(
        _conv_stats_kernel,
        apply_relu=apply_relu,
        add_bias=add_bias,
        tile_m=tile_m,
        valid_rows=None if valid_rows == m_pad else valid_rows)

    in_specs = [
        pl.BlockSpec((tile_m, k_pad), lambda i: (i, 0)),   # im2col tile
        pl.BlockSpec((k_pad, c_pad), lambda i: (0, 0)),    # weights (resident)
    ]
    args = [patches.astype(MATMUL_DTYPE), w_mat.astype(MATMUL_DTYPE)]
    if add_bias:
        in_specs.append(pl.BlockSpec((1, c_pad), lambda i: (0, 0)))
        args.append(bias.reshape(1, c_pad).astype(jnp.float32))

    y, stats = pl.pallas_call(
        kernel,
        grid=(num_tiles,),
        in_specs=in_specs,
        out_specs=(
            pl.BlockSpec((tile_m, c_pad), lambda i: (i, 0)),
            pl.BlockSpec((1, 2, c_pad), lambda i: (i, 0, 0)),
        ),
        out_shape=(
            jax.ShapeDtypeStruct((m_pad, c_pad), jnp.float32),
            jax.ShapeDtypeStruct((num_tiles, 2, c_pad), jnp.float32),
        ),
        compiler_params=pltpu.CompilerParams(
            dimension_semantics=("parallel",),           # megacore-shardable on v7x
            vmem_limit_bytes=VMEM_LIMIT_BYTES),
    )(*args)
    return y, stats


# -----------------------------------------------------------------------------
# Pass 2 kernel: BatchNorm apply as a single fused per-channel affine.
# -----------------------------------------------------------------------------
def _affine_kernel(y_ref, sc_ref, sh_ref, o_ref):
    o_ref[...] = y_ref[...] * sc_ref[...] + sh_ref[...]


def affine_pallas(y, scale, shift, *, tile_m):
    m_pad, c_pad = y.shape
    num_tiles = m_pad // tile_m
    return pl.pallas_call(
        _affine_kernel,
        grid=(num_tiles,),
        in_specs=[
            pl.BlockSpec((tile_m, c_pad), lambda i: (i, 0)),
            pl.BlockSpec((1, c_pad), lambda i: (0, 0)),
            pl.BlockSpec((1, c_pad), lambda i: (0, 0)),
        ],
        out_specs=pl.BlockSpec((tile_m, c_pad), lambda i: (i, 0)),
        out_shape=jax.ShapeDtypeStruct((m_pad, c_pad), jnp.float32),
        compiler_params=pltpu.CompilerParams(
            dimension_semantics=("parallel",),
            vmem_limit_bytes=VMEM_LIMIT_BYTES),
    )(y, scale.reshape(1, c_pad), shift.reshape(1, c_pad))


# -----------------------------------------------------------------------------
# One layer: conv (matmul) -> [relu] -> BatchNorm (training-mode batch stats)
# -----------------------------------------------------------------------------
def conv_bn_layer(patches, w_mat, bias, gamma, beta, valid_rows, *,
                  apply_relu, add_bias, tile_m):
    y, stats = conv_stats_pallas(patches, w_mat, bias,
                                 apply_relu=apply_relu, add_bias=add_bias,
                                 tile_m=tile_m, valid_rows=valid_rows)
    # Tiny cross-tile reduction + mean/var -> folded scale/shift (stays in JAX).
    tot = jnp.sum(stats, axis=0)                         # (2, C_pad)
    mean = tot[0] / valid_rows
    var = jnp.maximum(tot[1] / valid_rows - mean * mean, 0.0)
    inv = lax.rsqrt(var + EPS)
    scale = gamma * inv
    shift = beta - mean * scale
    return affine_pallas(y, scale, shift, tile_m=tile_m)


# -----------------------------------------------------------------------------
# JAX glue: im2col, weight layout / padding, full forward
# -----------------------------------------------------------------------------
def im2col_3x3(x_nhwc):
    """(N, H, W, C) -> (N*H*W, 9*C), column ordering (kh, kw, c)."""
    n, h, w, c = x_nhwc.shape
    xp = jnp.pad(x_nhwc, ((0, 0), (1, 1), (1, 1), (0, 0)))
    cols = [xp[:, dy:dy + h, dx:dx + w, :] for dy in range(3) for dx in range(3)]
    return jnp.concatenate(cols, axis=-1).reshape(n * h * w, 9 * c)


def w3x3_to_mat(w, c_in_pad, c_out_pad):
    """PyTorch (Cout, Cin, 3, 3) -> (9*c_in_pad, c_out_pad), matching im2col order."""
    c_out, c_in, kh, kw = w.shape
    wt = jnp.transpose(w, (2, 3, 1, 0))                  # (kh, kw, Cin, Cout)
    wt = jnp.pad(wt, ((0, 0), (0, 0),
                      (0, c_in_pad - c_in), (0, c_out_pad - c_out)))
    return wt.reshape(kh * kw * c_in_pad, c_out_pad)


def _pad_vec(v, c_pad):
    return jnp.pad(v, (0, c_pad - v.shape[0]))


def mynet_forward(x_nchw, params, *, tile_m=DEFAULT_TILE_M):
    x = jnp.transpose(x_nchw, (0, 2, 3, 1)).astype(jnp.float32)   # NHWC
    n, h, w, c_in = x.shape
    m = n * h * w
    m_pad = _round_up(m, tile_m)
    c = params["conv1_w"].shape[0]                 # n_channel
    c_pad = _round_up(c, LANE)                     # lane-dense channel layout

    # ---- conv1 (3x3) -> relu -> bn1 ----
    k = 9 * c_in
    k_pad = _round_up(k, LANE)
    patches = jnp.pad(im2col_3x3(x), ((0, m_pad - m), (0, k_pad - k)))
    w_mat = jnp.pad(w3x3_to_mat(params["conv1_w"], c_in, c_pad),
                    ((0, k_pad - k), (0, 0)))
    act = conv_bn_layer(patches, w_mat,
                        _pad_vec(params["conv1_b"], c_pad),
                        _pad_vec(params["bn1_g"], c_pad),
                        _pad_vec(params["bn1_b"], c_pad),
                        m, apply_relu=True, add_bias=True, tile_m=tile_m)

    # ---- (conv2 3x3 -> relu -> bn2) x (n_conv - 1) ----
    # Activations stay in the channel-padded layout (padded channels are exactly
    # zero end-to-end), so K = 9*c_pad is already a multiple of 128.
    for layer in params["conv2"]:
        x_nhwc = act[:m].reshape(n, h, w, c_pad)
        patches = jnp.pad(im2col_3x3(x_nhwc), ((0, m_pad - m), (0, 0)))
        w_mat = w3x3_to_mat(layer["w"], c_pad, c_pad)
        act = conv_bn_layer(patches, w_mat,
                            _pad_vec(layer["b"], c_pad),
                            _pad_vec(layer["g"], c_pad),
                            _pad_vec(layer["beta"], c_pad),
                            m, apply_relu=True, add_bias=True, tile_m=tile_m)

    # ---- conv3 (1x1) -> bn3 (no relu) ----
    # Bias is skipped: it is exactly cancelled by the batch-mean subtraction.
    w3 = params["conv3_w"][:, :, 0, 0].T               # (Cin, Cout)
    w_mat = jnp.pad(w3, ((0, c_pad - c), (0, c_pad - c)))
    act = conv_bn_layer(act, w_mat, None,
                        _pad_vec(params["bn3_g"], c_pad),
                        _pad_vec(params["bn3_b"], c_pad),
                        m, apply_relu=False, add_bias=False, tile_m=tile_m)

    out = act[:m, :c].reshape(n, h, w, c)
    return jnp.transpose(out, (0, 3, 1, 2))             # back to NCHW


# -----------------------------------------------------------------------------
# Pure-JAX reference (for correctness check)
# -----------------------------------------------------------------------------
def _conv2d_ref(x, w, b, pad):
    y = lax.conv_general_dilated(x, w, (1, 1), [(pad, pad), (pad, pad)],
                                 dimension_numbers=("NCHW", "OIHW", "NCHW"))
    return y + b[None, :, None, None]


def _bn_ref(x, g, beta):
    mean = x.mean(axis=(0, 2, 3), keepdims=True)
    var = ((x - mean) ** 2).mean(axis=(0, 2, 3), keepdims=True)
    return (x - mean) / jnp.sqrt(var + EPS) * g[None, :, None, None] \
        + beta[None, :, None, None]


def mynet_reference(x, params):
    x = _bn_ref(jax.nn.relu(_conv2d_ref(x, params["conv1_w"], params["conv1_b"], 1)),
                params["bn1_g"], params["bn1_b"])
    for layer in params["conv2"]:
        x = _bn_ref(jax.nn.relu(_conv2d_ref(x, layer["w"], layer["b"], 1)),
                    layer["g"], layer["beta"])
    x = _bn_ref(_conv2d_ref(x, params["conv3_w"], params["conv3_b"], 0),
                params["bn3_g"], params["bn3_b"])
    return x


# -----------------------------------------------------------------------------
# Deterministic parameter init (shapes from MyNet.__init__)
# -----------------------------------------------------------------------------
def init_params(key, input_dim, n_channel, n_conv):
    keys = jax.random.split(key, 8 + 2 * (n_conv - 1))
    k = iter(keys)
    p = {
        "conv1_w": jax.random.normal(next(k), (n_channel, input_dim, 3, 3), jnp.float32) * 0.05,
        "conv1_b": jax.random.normal(next(k), (n_channel,), jnp.float32) * 0.05,
        "bn1_g": jnp.ones((n_channel,), jnp.float32),
        "bn1_b": jnp.zeros((n_channel,), jnp.float32),
        "conv2": [],
        "conv3_w": jax.random.normal(next(k), (n_channel, n_channel, 1, 1), jnp.float32) * 0.05,
        "conv3_b": jax.random.normal(next(k), (n_channel,), jnp.float32) * 0.05,
        "bn3_g": jnp.ones((n_channel,), jnp.float32),
        "bn3_b": jnp.zeros((n_channel,), jnp.float32),
    }
    for _ in range(n_conv - 1):
        p["conv2"].append({
            "w": jax.random.normal(next(k), (n_channel, n_channel, 3, 3), jnp.float32) * 0.05,
            "b": jax.random.normal(next(k), (n_channel,), jnp.float32) * 0.05,
            "g": jnp.ones((n_channel,), jnp.float32),
            "beta": jnp.zeros((n_channel,), jnp.float32),
        })
    return p


if __name__ == "__main__":
    # Small shapes: batch=2, input_dim=4, H=W=16, n_channel=32, n_conv=2
    N, CIN, H, W = 2, 4, 16, 16
    N_CHANNEL, N_CONV = 32, 2
    TILE_M = 128   # small tile so the toy problem exercises a real multi-step grid

    key = jax.random.PRNGKey(0)
    kx, kp = jax.random.split(key)
    x = jax.random.normal(kx, (N, CIN, H, W), jnp.float32)
    params = init_params(kp, CIN, N_CHANNEL, N_CONV)

    fwd = jax.jit(functools.partial(mynet_forward, tile_m=TILE_M))
    out = jax.block_until_ready(fwd(x, params))

    assert out.shape == (N, N_CHANNEL, H, W), out.shape

    ref = jax.block_until_ready(mynet_reference(x, params))
    assert jnp.allclose(out, ref, atol=3e-3, rtol=3e-3), \
        f"max abs err {jnp.max(jnp.abs(out - ref))}"

    print("KERNEL_OK")
</pallas_src>

<mosaic_0001>
module attributes {stable_mosaic.version = 11 : i64} {
  func.func @_conv_stats_kernel(%arg0: i32, %arg1: memref<128x128xf32, #tpu.memory_space<vmem>>, %arg2: memref<128x128xf32, #tpu.memory_space<vmem>>, %arg3: memref<1x128xf32, #tpu.memory_space<vmem>>, %arg4: memref<128x128xf32, #tpu.memory_space<vmem>>, %arg5: memref<1x2x128xf32, #tpu.memory_space<vmem>>) attributes {dimension_semantics = [#tpu.dimension_semantics<parallel>], iteration_bounds = array<i64: 4>, scalar_prefetch = 0 : i64, scratch_operands = 0 : i64, tpu.core_type = #tpu.core_type<tc>, window_params = [{transform_indices = @transform_0, window_bounds = array<i64: 128, 128>}, {pipeline_mode = #tpu.pipeline_mode<synchronous>, transform_indices = @transform_1, window_bounds = array<i64: 128, 128>}, {pipeline_mode = #tpu.pipeline_mode<synchronous>, transform_indices = @transform_2, window_bounds = array<i64: 1, 128>}, {transform_indices = @transform_3, window_bounds = array<i64: 128, 128>}, {transform_indices = @transform_4, window_bounds = array<i64: 1, 2, 128>}]} {
    %c0 = arith.constant 0 : index
    %c0_0 = arith.constant 0 : index
    %0 = vector.load %arg1[%c0, %c0_0] : memref<128x128xf32, #tpu.memory_space<vmem>>, vector<128x128xf32>
    %c0_1 = arith.constant 0 : index
    %c0_2 = arith.constant 0 : index
    %1 = vector.load %arg2[%c0_1, %c0_2] : memref<128x128xf32, #tpu.memory_space<vmem>>, vector<128x128xf32>
    %cst = arith.constant dense<0.000000e+00> : vector<128x128xf32>
    %2 = tpu.matmul %0, %1, %cst {dimension_numbers = #tpu.dot_dimension_numbers<[1], [0], [0], [1], [0, 0, 1, 1], [], []>} : vector<128x128xf32>, vector<128x128xf32>, vector<128x128xf32> -> vector<128x128xf32>
    %c0_3 = arith.constant 0 : index
    %c0_4 = arith.constant 0 : index
    %3 = vector.load %arg3[%c0_3, %c0_4] : memref<1x128xf32, #tpu.memory_space<vmem>>, vector<1x128xf32>
    %4 = vector.broadcast %3 : vector<1x128xf32> to vector<128x128xf32>
    %5 = arith.addf %2, %4 : vector<128x128xf32>
    %cst_5 = arith.constant 0.000000e+00 : f32
    %6 = vector.broadcast %cst_5 : f32 to vector<128x128xf32>
    %7 = arith.maximumf %5, %6 : vector<128x128xf32>
    %c0_6 = arith.constant 0 : index
    %c0_7 = arith.constant 0 : index
    %8 = vector.load %arg4[%c0_6, %c0_7] : memref<128x128xf32, #tpu.memory_space<vmem>>, vector<128x128xf32>
    tpu.vector_store %arg4[%c0_6, %c0_7], %7 {strides = array<i32>} : memref<128x128xf32, #tpu.memory_space<vmem>>, vector<128x128xf32>,
    %cst_8 = arith.constant dense<0.000000e+00> : vector<128xf32>
    %9 = vector.multi_reduction <add>, %7, %cst_8 [0] : vector<128x128xf32> to vector<128xf32>
    %10 = vector.shape_cast %9 : vector<128xf32> to vector<1x128xf32>
    %11 = arith.mulf %7, %7 : vector<128x128xf32>
    %cst_9 = arith.constant dense<0.000000e+00> : vector<128xf32>
    %12 = vector.multi_reduction <add>, %11, %cst_9 [0] : vector<128x128xf32> to vector<128xf32>
    %13 = vector.shape_cast %12 : vector<128xf32> to vector<1x128xf32>
    %14 = tpu.concatenate %10, %13 in 0 : vector<1x128xf32>, vector<1x128xf32> -> vector<2x128xf32>
    %15 = vector.shape_cast %14 : vector<2x128xf32> to vector<1x2x128xf32>
    %c0_10 = arith.constant 0 : index
    %c0_11 = arith.constant 0 : index
    %c0_12 = arith.constant 0 : index
    %16 = vector.load %arg5[%c0_10, %c0_11, %c0_12] : memref<1x2x128xf32, #tpu.memory_space<vmem>>, vector<1x2x128xf32>
    tpu.vector_store %arg5[%c0_10, %c0_11, %c0_12], %15 {strides = array<i32>} : memref<1x2x128xf32, #tpu.memory_space<vmem>>, vector<1x2x128xf32>,
    return
  }
  func.func @transform_0(%arg0: i32) -> (i32, i32) {
    %c0_i32 = arith.constant 0 : i32
    %c0_i32_0 = arith.constant 0 : i32
    return %arg0, %c0_i32 : i32, i32
  }
  func.func @transform_1(%arg0: i32) -> (i32, i32) {
    %c0_i32 = arith.constant 0 : i32
    %c0_i32_0 = arith.constant 0 : i32
    %c0_i32_1 = arith.constant 0 : i32
    return %c0_i32, %c0_i32_0 : i32, i32
  }
  func.func @transform_2(%arg0: i32) -> (i32, i32) {
    %c0_i32 = arith.constant 0 : i32
    %c0_i32_0 = arith.constant 0 : i32
    %c0_i32_1 = arith.constant 0 : i32
    return %c0_i32, %c0_i32_0 : i32, i32
  }
  func.func @transform_3(%arg0: i32) -> (i32, i32) {
    %c0_i32 = arith.constant 0 : i32
    %c0_i32_0 = arith.constant 0 : i32
    return %arg0, %c0_i32 : i32, i32
  }
  func.func @transform_4(%arg0: i32) -> (i32, i32, i32) {
    %c0_i32 = arith.constant 0 : i32
    %c0_i32_0 = arith.constant 0 : i32
    %c0_i32_1 = arith.constant 0 : i32
    return %arg0, %c0_i32, %c0_i32_0 : i32, i32, i32
  }
}

module attributes {stable_mosaic.version = 11 : i64} {
  func.func @_affine_kernel(%arg0: i32, %arg1: memref<128x128xf32, #tpu.memory_space<vmem>>, %arg2: memref<1x128xf32, #tpu.memory_space<vmem>>, %arg3: memref<1x128xf32, #tpu.memory_space<vmem>>, %arg4: memref<128x128xf32, #tpu.memory_space<vmem>>) attributes {dimension_semantics = [#tpu.dimension_semantics<parallel>], iteration_bounds = array<i64: 4>, scalar_prefetch = 0 : i64, scratch_operands = 0 : i64, tpu.core_type = #tpu.core_type<tc>, window_params = [{transform_indices = @transform_0, window_bounds = array<i64: 128, 128>}, {pipeline_mode = #tpu.pipeline_mode<synchronous>, transform_indices = @transform_1, window_bounds = array<i64: 1, 128>}, {pipeline_mode = #tpu.pipeline_mode<synchronous>, transform_indices = @transform_2, window_bounds = array<i64: 1, 128>}, {transform_indices = @transform_3, window_bounds = array<i64: 128, 128>}]} {
    %c0 = arith.constant 0 : index
    %c0_0 = arith.constant 0 : index
    %0 = vector.load %arg1[%c0, %c0_0] : memref<128x128xf32, #tpu.memory_space<vmem>>, vector<128x128xf32>
    %c0_1 = arith.constant 0 : index
    %c0_2 = arith.constant 0 : index
    %1 = vector.load %arg2[%c0_1, %c0_2] : memref<1x128xf32, #tpu.memory_space<vmem>>, vector<1x128xf32>
    %2 = vector.broadcast %1 : vector<1x128xf32> to vector<128x128xf32>
    %3 = arith.mulf %0, %2 : vector<128x128xf32>
    %c0_3 = arith.constant 0 : index
    %c0_4 = arith.constant 0 : index
    %4 = vector.load %arg3[%c0_3, %c0_4] : memref<1x128xf32, #tpu.memory_space<vmem>>, vector<1x128xf32>
    %5 = vector.broadcast %4 : vector<1x128xf32> to vector<128x128xf32>
    %6 = arith.addf %3, %5 : vector<128x128xf32>
    %c0_5 = arith.constant 0 : index
    %c0_6 = arith.constant 0 : index
    %7 = vector.load %arg4[%c0_5, %c0_6] : memref<128x128xf32, #tpu.memory_space<vmem>>, vector<128x128xf32>
    tpu.vector_store %arg4[%c0_5, %c0_6], %6 {strides = array<i32>} : memref<128x128xf32, #tpu.memory_space<vmem>>, vector<128x128xf32>,
    return
  }
  func.func @transform_0(%arg0: i32) -> (i32, i32) {
    %c0_i32 = arith.constant 0 : i32
    %c0_i32_0 = arith.constant 0 : i32
    return %arg0, %c0_i32 : i32, i32
  }
  func.func @transform_1(%arg0: i32) -> (i32, i32) {
    %c0_i32 = arith.constant 0 : i32
    %c0_i32_0 = arith.constant 0 : i32
    %c0_i32_1 = arith.constant 0 : i32
    return %c0_i32, %c0_i32_0 : i32, i32
  }
  func.func @transform_2(%arg0: i32) -> (i32, i32) {
    %c0_i32 = arith.constant 0 : i32
    %c0_i32_0 = arith.constant 0 : i32
    %c0_i32_1 = arith.constant 0 : i32
    return %c0_i32, %c0_i32_0 : i32, i32
  }
  func.func @transform_3(%arg0: i32) -> (i32, i32) {
    %c0_i32 = arith.constant 0 : i32
    %c0_i32_0 = arith.constant 0 : i32
    return %arg0, %c0_i32 : i32, i32
  }
}

module attributes {stable_mosaic.version = 11 : i64} {
  func.func @_conv_stats_kernel(%arg0: i32, %arg1: memref<128x128xf32, #tpu.memory_space<vmem>>, %arg2: memref<128x128xf32, #tpu.memory_space<vmem>>, %arg3: memref<128x128xf32, #tpu.memory_space<vmem>>, %arg4: memref<1x2x128xf32, #tpu.memory_space<vmem>>) attributes {dimension_semantics = [#tpu.dimension_semantics<parallel>], iteration_bounds = array<i64: 4>, scalar_prefetch = 0 : i64, scratch_operands = 0 : i64, tpu.core_type = #tpu.core_type<tc>, window_params = [{transform_indices = @transform_0, window_bounds = array<i64: 128, 128>}, {pipeline_mode = #tpu.pipeline_mode<synchronous>, transform_indices = @transform_1, window_bounds = array<i64: 128, 128>}, {transform_indices = @transform_2, window_bounds = array<i64: 128, 128>}, {transform_indices = @transform_3, window_bounds = array<i64: 1, 2, 128>}]} {
    %c0 = arith.constant 0 : index
    %c0_0 = arith.constant 0 : index
    %0 = vector.load %arg1[%c0, %c0_0] : memref<128x128xf32, #tpu.memory_space<vmem>>, vector<128x128xf32>
    %c0_1 = arith.constant 0 : index
    %c0_2 = arith.constant 0 : index
    %1 = vector.load %arg2[%c0_1, %c0_2] : memref<128x128xf32, #tpu.memory_space<vmem>>, vector<128x128xf32>
    %cst = arith.constant dense<0.000000e+00> : vector<128x128xf32>
    %2 = tpu.matmul %0, %1, %cst {dimension_numbers = #tpu.dot_dimension_numbers<[1], [0], [0], [1], [0, 0, 1, 1], [], []>} : vector<128x128xf32>, vector<128x128xf32>, vector<128x128xf32> -> vector<128x128xf32>
    %c0_3 = arith.constant 0 : index
    %c0_4 = arith.constant 0 : index
    %3 = vector.load %arg3[%c0_3, %c0_4] : memref<128x128xf32, #tpu.memory_space<vmem>>, vector<128x128xf32>
    tpu.vector_store %arg3[%c0_3, %c0_4], %2 {strides = array<i32>} : memref<128x128xf32, #tpu.memory_space<vmem>>, vector<128x128xf32>,
    %cst_5 = arith.constant dense<0.000000e+00> : vector<128xf32>
    %4 = vector.multi_reduction <add>, %2, %cst_5 [0] : vector<128x128xf32> to vector<128xf32>
    %5 = vector.shape_cast %4 : vector<128xf32> to vector<1x128xf32>
    %6 = arith.mulf %2, %2 : vector<128x128xf32>
    %cst_6 = arith.constant dense<0.000000e+00> : vector<128xf32>
    %7 = vector.multi_reduction <add>, %6, %cst_6 [0] : vector<128x128xf32> to vector<128xf32>
    %8 = vector.shape_cast %7 : vector<128xf32> to vector<1x128xf32>
    %9 = tpu.concatenate %5, %8 in 0 : vector<1x128xf32>, vector<1x128xf32> -> vector<2x128xf32>
    %10 = vector.shape_cast %9 : vector<2x128xf32> to vector<1x2x128xf32>
    %c0_7 = arith.constant 0 : index
    %c0_8 = arith.constant 0 : index
    %c0_9 = arith.constant 0 : index
    %11 = vector.load %arg4[%c0_7, %c0_8, %c0_9] : memref<1x2x128xf32, #tpu.memory_space<vmem>>, vector<1x2x128xf32>
    tpu.vector_store %arg4[%c0_7, %c0_8, %c0_9], %10 {strides = array<i32>} : memref<1x2x128xf32, #tpu.memory_space<vmem>>, vector<1x2x128xf32>,
    return
  }
  func.func @transform_0(%arg0: i32) -> (i32, i32) {
    %c0_i32 = arith.constant 0 : i32
    %c0_i32_0 = arith.constant 0 : i32
    return %arg0, %c0_i32 : i32, i32
  }
  func.func @transform_1(%arg0: i32) -> (i32, i32) {
    %c0_i32 = arith.constant 0 : i32
    %c0_i32_0 = arith.constant 0 : i32
    %c0_i32_1 = arith.constant 0 : i32
    return %c0_i32, %c0_i32_0 : i32, i32
  }
  func.func @transform_2(%arg0: i32) -> (i32, i32) {
    %c0_i32 = arith.constant 0 : i32
    %c0_i32_0 = arith.constant 0 : i32
    return %arg0, %c0_i32 : i32, i32
  }
  func.func @transform_3(%arg0: i32) -> (i32, i32, i32) {
    %c0_i32 = arith.constant 0 : i32
    %c0_i32_0 = arith.constant 0 : i32
    %c0_i32_1 = arith.constant 0 : i32
    return %arg0, %c0_i32, %c0_i32_0 : i32, i32, i32
  }
}

module attributes {stable_mosaic.version = 11 : i64} {
  func.func @_conv_stats_kernel(%arg0: i32, %arg1: memref<128x1152xf32, #tpu.memory_space<vmem>>, %arg2: memref<1152x128xf32, #tpu.memory_space<vmem>>, %arg3: memref<1x128xf32, #tpu.memory_space<vmem>>, %arg4: memref<128x128xf32, #tpu.memory_space<vmem>>, %arg5: memref<1x2x128xf32, #tpu.memory_space<vmem>>) attributes {dimension_semantics = [#tpu.dimension_semantics<parallel>], iteration_bounds = array<i64: 4>, scalar_prefetch = 0 : i64, scratch_operands = 0 : i64, tpu.core_type = #tpu.core_type<tc>, window_params = [{transform_indices = @transform_0, window_bounds = array<i64: 128, 1152>}, {pipeline_mode = #tpu.pipeline_mode<synchronous>, transform_indices = @transform_1, window_bounds = array<i64: 1152, 128>}, {pipeline_mode = #tpu.pipeline_mode<synchronous>, transform_indices = @transform_2, window_bounds = array<i64: 1, 128>}, {transform_indices = @transform_3, window_bounds = array<i64: 128, 128>}, {transform_indices = @transform_4, window_bounds = array<i64: 1, 2, 128>}]} {
    %c0 = arith.constant 0 : index
    %c0_0 = arith.constant 0 : index
    %0 = vector.load %arg1[%c0, %c0_0] : memref<128x1152xf32, #tpu.memory_space<vmem>>, vector<128x1152xf32>
    %c0_1 = arith.constant 0 : index
    %c0_2 = arith.constant 0 : index
    %1 = vector.load %arg2[%c0_1, %c0_2] : memref<1152x128xf32, #tpu.memory_space<vmem>>, vector<1152x128xf32>
    %cst = arith.constant dense<0.000000e+00> : vector<128x128xf32>
    %2 = tpu.matmul %0, %1, %cst {dimension_numbers = #tpu.dot_dimension_numbers<[1], [0], [0], [1], [0, 0, 1, 1], [], []>} : vector<128x1152xf32>, vector<1152x128xf32>, vector<128x128xf32> -> vector<128x128xf32>
    %c0_3 = arith.constant 0 : index
    %c0_4 = arith.constant 0 : index
    %3 = vector.load %arg3[%c0_3, %c0_4] : memref<1x128xf32, #tpu.memory_space<vmem>>, vector<1x128xf32>
    %4 = vector.broadcast %3 : vector<1x128xf32> to vector<128x128xf32>
    %5 = arith.addf %2, %4 : vector<128x128xf32>
    %cst_5 = arith.constant 0.000000e+00 : f32
    %6 = vector.broadcast %cst_5 : f32 to vector<128x128xf32>
    %7 = arith.maximumf %5, %6 : vector<128x128xf32>
    %c0_6 = arith.constant 0 : index
    %c0_7 = arith.constant 0 : index
    %8 = vector.load %arg4[%c0_6, %c0_7] : memref<128x128xf32, #tpu.memory_space<vmem>>, vector<128x128xf32>
    tpu.vector_store %arg4[%c0_6, %c0_7], %7 {strides = array<i32>} : memref<128x128xf32, #tpu.memory_space<vmem>>, vector<128x128xf32>,
    %cst_8 = arith.constant dense<0.000000e+00> : vector<128xf32>
    %9 = vector.multi_reduction <add>, %7, %cst_8 [0] : vector<128x128xf32> to vector<128xf32>
    %10 = vector.shape_cast %9 : vector<128xf32> to vector<1x128xf32>
    %11 = arith.mulf %7, %7 : vector<128x128xf32>
    %cst_9 = arith.constant dense<0.000000e+00> : vector<128xf32>
    %12 = vector.multi_reduction <add>, %11, %cst_9 [0] : vector<128x128xf32> to vector<128xf32>
    %13 = vector.shape_cast %12 : vector<128xf32> to vector<1x128xf32>
    %14 = tpu.concatenate %10, %13 in 0 : vector<1x128xf32>, vector<1x128xf32> -> vector<2x128xf32>
    %15 = vector.shape_cast %14 : vector<2x128xf32> to vector<1x2x128xf32>
    %c0_10 = arith.constant 0 : index
    %c0_11 = arith.constant 0 : index
    %c0_12 = arith.constant 0 : index
    %16 = vector.load %arg5[%c0_10, %c0_11, %c0_12] : memref<1x2x128xf32, #tpu.memory_space<vmem>>, vector<1x2x128xf32>
    tpu.vector_store %arg5[%c0_10, %c0_11, %c0_12], %15 {strides = array<i32>} : memref<1x2x128xf32, #tpu.memory_space<vmem>>, vector<1x2x128xf32>,
    return
  }
  func.func @transform_0(%arg0: i32) -> (i32, i32) {
    %c0_i32 = arith.constant 0 : i32
    %c0_i32_0 = arith.constant 0 : i32
    return %arg0, %c0_i32 : i32, i32
  }
  func.func @transform_1(%arg0: i32) -> (i32, i32) {
    %c0_i32 = arith.constant 0 : i32
    %c0_i32_0 = arith.constant 0 : i32
    %c0_i32_1 = arith.constant 0 : i32
    return %c0_i32, %c0_i32_0 : i32, i32
  }
  func.func @transform_2(%arg0: i32) -> (i32, i32) {
    %c0_i32 = arith.constant 0 : i32
    %c0_i32_0 = arith.constant 0 : i32
    %c0_i32_1 = arith.constant 0 : i32
    return %c0_i32, %c0_i32_0 : i32, i32
  }
  func.func @transform_3(%arg0: i32) -> (i32, i32) {
    %c0_i32 = arith.constant 0 : i32
    %c0_i32_0 = arith.constant 0 : i32
    return %arg0, %c0_i32 : i32, i32
  }
  func.func @transform_4(%arg0: i32) -> (i32, i32, i32) {
    %c0_i32 = arith.constant 0 : i32
    %c0_i32_0 = arith.constant 0 : i32
    %c0_i32_1 = arith.constant 0 : i32
    return %arg0, %c0_i32, %c0_i32_0 : i32, i32, i32
  }
}

module attributes {stable_mosaic.version = 11 : i64} {
  func.func @_affine_kernel(%arg0: i32, %arg1: memref<128x128xf32, #tpu.memory_space<vmem>>, %arg2: memref<1x128xf32, #tpu.memory_space<vmem>>, %arg3: memref<1x128xf32, #tpu.memory_space<vmem>>, %arg4: memref<128x128xf32, #tpu.memory_space<vmem>>) attributes {dimension_semantics = [#tpu.dimension_semantics<parallel>], iteration_bounds = array<i64: 4>, scalar_prefetch = 0 : i64, scratch_operands = 0 : i64, tpu.core_type = #tpu.core_type<tc>, window_params = [{transform_indices = @transform_0, window_bounds = array<i64: 128, 128>}, {pipeline_mode = #tpu.pipeline_mode<synchronous>, transform_indices = @transform_1, window_bounds = array<i64: 1, 128>}, {pipeline_mode = #tpu.pipeline_mode<synchronous>, transform_indices = @transform_2, window_bounds = array<i64: 1, 128>}, {transform_indices = @transform_3, window_bounds = array<i64: 128, 128>}]} {
    %c0 = arith.constant 0 : index
    %c0_0 = arith.constant 0 : index
    %0 = vector.load %arg1[%c0, %c0_0] : memref<128x128xf32, #tpu.memory_space<vmem>>, vector<128x128xf32>
    %c0_1 = arith.constant 0 : index
    %c0_2 = arith.constant 0 : index
    %1 = vector.load %arg2[%c0_1, %c0_2] : memref<1x128xf32, #tpu.memory_space<vmem>>, vector<1x128xf32>
    %2 = vector.broadcast %1 : vector<1x128xf32> to vector<128x128xf32>
    %3 = arith.mulf %0, %2 : vector<128x128xf32>
    %c0_3 = arith.constant 0 : index
    %c0_4 = arith.constant 0 : index
    %4 = vector.load %arg3[%c0_3, %c0_4] : memref<1x128xf32, #tpu.memory_space<vmem>>, vector<1x128xf32>
    %5 = vector.broadcast %4 : vector<1x128xf32> to vector<128x128xf32>
    %6 = arith.addf %3, %5 : vector<128x128xf32>
    %c0_5 = arith.constant 0 : index
    %c0_6 = arith.constant 0 : index
    %7 = vector.load %arg4[%c0_5, %c0_6] : memref<128x128xf32, #tpu.memory_space<vmem>>, vector<128x128xf32>
    tpu.vector_store %arg4[%c0_5, %c0_6], %6 {strides = array<i32>} : memref<128x128xf32, #tpu.memory_space<vmem>>, vector<128x128xf32>,
    return
  }
  func.func @transform_0(%arg0: i32) -> (i32, i32) {
    %c0_i32 = arith.constant 0 : i32
    %c0_i32_0 = arith.constant 0 : i32
    return %arg0, %c0_i32 : i32, i32
  }
  func.func @transform_1(%arg0: i32) -> (i32, i32) {
    %c0_i32 = arith.constant 0 : i32
    %c0_i32_0 = arith.constant 0 : i32
    %c0_i32_1 = arith.constant 0 : i32
    return %c0_i32, %c0_i32_0 : i32, i32
  }
  func.func @transform_2(%arg0: i32) -> (i32, i32) {
    %c0_i32 = arith.constant 0 : i32
    %c0_i32_0 = arith.constant 0 : i32
    %c0_i32_1 = arith.constant 0 : i32
    return %c0_i32, %c0_i32_0 : i32, i32
  }
  func.func @transform_3(%arg0: i32) -> (i32, i32) {
    %c0_i32 = arith.constant 0 : i32
    %c0_i32_0 = arith.constant 0 : i32
    return %arg0, %c0_i32 : i32, i32
  }
}

</mosaic_0001>

<llo_original>
// kernel: mynet_forward.7
$region0: #{mynet_forward.7}
  #allocation0 [shape = 'u32[]', space=smem, size = 0x4, offset = 0x4, fixed_abs, tag = 'smem constant byte address 0x4 - core index']
  #allocation1 [shape = 'u32[144,128]{1,0:T(1,128)}', space=vmem, size = 0x12000, scoped, tag = 'internal scratch']
  %s0 = inlined_call_operand.vmem [shape: f32[512,128], index: 0, kind: input, shape index: {}]
  %s1 = inlined_call_operand.vmem [shape: f32[1,128], index: 1, kind: input, shape index: {}]
  %s2 = inlined_call_operand.vmem [shape: f32[1,128], index: 2, kind: input, shape index: {}]
  %s3 = inlined_call_operand.vmem [shape: f32[512,128], index: 3, kind: output, shape index: {}]
  %s4 = sld [smem:[#allocation0]]
  $region45: #{mynet_forward.7} parent=0
    _
  %s6 = ssub.s32 1, %s4
  %s7 = scalar_select 0, %s6, %s4
  loop: start=0, step=1, limit=6
  $region2: #{mynet_forward.7} parent=0 // loop_pre_header
    _
  $region3: #{mynet_forward.7} parent=0 // loop_header
    %s9 = sphi 0, %s13
    %p10 = scmp.ge.s32.totalorder %s9, 6
    %s19 = sphi 0, %s21
    %s22 = sphi 0, %s19
    %s23 = sphi 0, %s22
    %s39 = sphi 0, %s23
    %s43 = sphi 0, %s43
    %s45 = sphi 0, %s43
    %s46 = sphi 0, %s45
    %s60 = sphi 0, %s46
    %s64 = sphi 0, %s64
    %s66 = sphi 0, %s64
    %s67 = sphi 0, %s66
    %s81 = sphi 0, %s67
    %s87 = sphi 0, %s89
    %s90 = sphi 0, %s87
    %s91 = sphi 0, %s90
    %s107 = sphi 0, %s91
  $region4: #{mynet_forward.7} parent=0 // loop_header_branch
    %12 = sbr.rel (%p10) target = $region8
  $region5: #{mynet_forward.7} parent=0 // loop_body
    %s14 = ssub.s32 %s9, 1
    %s15 = ssub.s32 %s9, 2
    %s16 = sadd.s32 %s9, 1
    %s17 = ssub.s32 %s9, %s16
    %p18 = scmp.eq.s32.totalorder %s17, 0
    %s20 = sadd.s32 %s19, 1
    %s21 = scalar_select %p18, %s19, %s20
    %p24 = pneg %p18
    %p25 = scmp.eq.s32.totalorder %s9, 3
    %p26 = por %p24, %p25
    %p27 = scmp.ne.s32.totalorder %s19, %s22
    %p28 = scmp.eq.s32.totalorder %s9, 0
    %p29 = por %p27, %p28
    %p30 = scmp.ne.s32.totalorder %s19, %s22
    %p31 = scmp.eq.s32.totalorder %s14, 3
    %p32 = por %p30, %p31
    %p33 = scmp.ne.s32.totalorder %s22, %s23
    %p34 = scmp.eq.s32.totalorder %s14, 0
    %p35 = por %p33, %p34
    %p36 = scmp.ne.s32.totalorder %s22, %s23
    %p37 = scmp.eq.s32.totalorder %s15, 3
    %p38 = por %p36, %p37
    %p40 = scmp.ne.s32.totalorder %s23, %s39
    %p41 = scmp.eq.s32.totalorder %s15, 0
    %p42 = por %p40, %p41
    %s44 = sadd.s32 %s43, 1
    %p47 = scmp.eq.s32.totalorder %s9, 3
    %p48 = scmp.ne.s32.totalorder %s43, %s45
    %p49 = scmp.eq.s32.totalorder %s9, 0
    %p50 = por %p48, %p49
    %p51 = scmp.ne.s32.totalorder %s43, %s45
    %p52 = scmp.eq.s32.totalorder %s14, 3
    %p53 = por %p51, %p52
    %p54 = scmp.ne.s32.totalorder %s45, %s46
    %p55 = scmp.eq.s32.totalorder %s14, 0
    %p56 = por %p54, %p55
    %p57 = scmp.ne.s32.totalorder %s45, %s46
    %p58 = scmp.eq.s32.totalorder %s15, 3
    %p59 = por %p57, %p58
    %p61 = scmp.ne.s32.totalorder %s46, %s60
    %p62 = scmp.eq.s32.totalorder %s15, 0
    %p63 = por %p61, %p62
    %s65 = sadd.s32 %s64, 1
    %p68 = scmp.eq.s32.totalorder %s9, 3
    %p69 = scmp.ne.s32.totalorder %s64, %s66
    %p70 = scmp.eq.s32.totalorder %s9, 0
    %p71 = por %p69, %p70
    %p72 = scmp.ne.s32.totalorder %s64, %s66
    %p73 = scmp.eq.s32.totalorder %s14, 3
    %p74 = por %p72, %p73
    %p75 = scmp.ne.s32.totalorder %s66, %s67
    %p76 = scmp.eq.s32.totalorder %s14, 0
    %p77 = por %p75, %p76
    %p78 = scmp.ne.s32.totalorder %s66, %s67
    %p79 = scmp.eq.s32.totalorder %s15, 3
    %p80 = por %p78, %p79
    %p82 = scmp.ne.s32.totalorder %s67, %s81
    %p83 = scmp.eq.s32.totalorder %s15, 0
    %p84 = por %p82, %p83
    %s85 = ssub.s32 %s9, %s16
    %p86 = scmp.eq.s32.totalorder %s85, 0
    %s88 = sadd.s32 %s87, 1
    %s89 = scalar_select %p86, %s87, %s88
    %p92 = pneg %p86
    %p93 = scmp.eq.s32.totalorder %s9, 3
    %p94 = por %p92, %p93
    %p95 = scmp.ne.s32.totalorder %s87, %s90
    %p96 = scmp.eq.s32.totalorder %s9, 0
    %p97 = por %p95, %p96
    %p98 = scmp.ne.s32.totalorder %s87, %s90
    %p99 = scmp.eq.s32.totalorder %s14, 3
    %p100 = por %p98, %p99
    %p101 = scmp.ne.s32.totalorder %s90, %s91
    %p102 = scmp.eq.s32.totalorder %s14, 0
    %p103 = por %p101, %p102
    %p104 = scmp.ne.s32.totalorder %s90, %s91
    %p105 = scmp.eq.s32.totalorder %s15, 3
    %p106 = por %p104, %p105
    %p108 = scmp.ne.s32.totalorder %s91, %s107
    %p109 = scmp.eq.s32.totalorder %s15, 0
    %p110 = por %p108, %p109
    %p111 = scmp.le.s32.totalorder 1, %s9
    %p112 = scmp.lt.s32.totalorder %s9, 5
    %p113 = pnand %p111, %p112
    %p114 = pneg %p113
    // Predicated region
    $region9: #{mynet_forward.7} parent=5 // pred_check
      _
    $region10: #{mynet_forward.7} parent=5 // pred_check_branch
      %116 = sbr.rel (%p113) target = $region12
    $region11: #{mynet_forward.7} parent=5 // pred_region
      %s117 = ssub.s32 %s9, 1
      // Predicated region
      $region13: #{mynet_forward.7} parent=11 // pred_check
        %p118 = pneg %p56
      $region14: #{mynet_forward.7} parent=11 // pred_check_branch
        %120 = sbr.rel (%p118) target = $region16
      $region15: #{mynet_forward.7} parent=11 // pred_region
        _
      $region16: #{mynet_forward.7} parent=11 // pred_fallthru
        _
      // Predicated region
      $region17: #{mynet_forward.7} parent=11 // pred_check
        %p121 = pneg %p77
      $region18: #{mynet_forward.7} parent=11 // pred_check_branch
        %123 = sbr.rel (%p121) target = $region20
      $region19: #{mynet_forward.7} parent=11 // pred_region
        _
      $region20: #{mynet_forward.7} parent=11 // pred_fallthru
        _
    $region12: #{mynet_forward.7} parent=5 // pred_fallthru
      _
    %p124 = scmp.lt.s32.totalorder %s9, 4
    // Predicated region
    $region21: #{mynet_forward.7} parent=5 // pred_check
      %p125 = pneg %p124
    $region22: #{mynet_forward.7} parent=5 // pred_check_branch
      %127 = sbr.rel (%p125) target = $region24
    $region23: #{mynet_forward.7} parent=5 // pred_region
      // Predicated region
      $region25: #{mynet_forward.7} parent=23 // pred_check
        %p128 = pneg %p29
      $region26: #{mynet_forward.7} parent=23 // pred_check_branch
        %130 = sbr.rel (%p128) target = $region28
      $region27: #{mynet_forward.7} parent=23 // pred_region
        %s131 = smul.u32 16, %s9
        %p132 = scmp.lt.s32.totalorder %s131, 63
        %s133 = scalar_select %p132, %s131, 63
        %s134 = smul.addr %s133, 8
        %s135 = scalar_lea.vmem %s0, %s134
        %s136 = smul.u32 16, %s9
      $region28: #{mynet_forward.7} parent=23 // pred_fallthru
        _
    $region24: #{mynet_forward.7} parent=5 // pred_fallthru
      _
    %p137 = scmp.le.s32.totalorder 1, %s9
    %p138 = scmp.lt.s32.totalorder %s9, 5
    %p139 = pnand %p137, %p138
    %p140 = pneg %p139
    // Predicated region
    $region29: #{mynet_forward.7} parent=5 // pred_check
      _
    $region30: #{mynet_forward.7} parent=5 // pred_check_branch
      %142 = sbr.rel (%p139) target = $region32
    $region31: #{mynet_forward.7} parent=5 // pred_region
      %s143 = ssub.s32 %s9, 1
      %s144 = smul.u32 16, %s14
      %p145 = scmp.lt.s32.totalorder %s144, 63
      %s146 = scalar_select %p145, %s144, 63
      %s147 = smul.addr %s146, 8
      %s148 = scalar_lea.vmem %s0, %s147
      %p149 = pneg %p35
      %p150 = pneg %p32
      %p151 = pneg %p56
      %p152 = pneg %p53
      %p153 = pneg %p77
      %p154 = pneg %p74
      %p155 = pneg %p103
      %p156 = pneg %p100
      %s157 = smul.u32 16, %s14
      %p158 = scmp.lt.s32.totalorder %s157, 63
      %s159 = scalar_select %p158, %s157, 63
      %s160 = smul.addr %s159, 8
      %s161 = scalar_lea.vmem %s3, %s160
      %s162 = smul.u32 16, %s14
      %p163 = scmp.lt.s32.totalorder %s162, 63
      %s164 = scalar_select %p163, %s162, 63
      %s165 = smul.addr %s164, 8
      %s166 = scalar_lea.vmem %s0, %s165
      %s167 = smul.u32 16, %s14
      %s168 = smul.u32 16, %s14
      %p169 = scmp.lt.s32.totalorder %s168, 63
      %s170 = scalar_select %p169, %s168, 63
      %s171 = smul.addr %s170, 8
      %s172 = scalar_lea.vmem %s3, %s171
      %s173 = smul.u32 16, %s14
      %v174 = vld [vmem:[%s166] sm:$0xff]
      %v175 = vld [vmem:[%s166 + $0x8] sm:$0xff]
      %v176 = vld [vmem:[%s166 + $0x10] sm:$0xff]
      %v177 = vld [vmem:[%s166 + $0x18] sm:$0xff]
      %v178 = vld [vmem:[%s166 + $0x20] sm:$0xff]
      %v179 = vld [vmem:[%s166 + $0x28] sm:$0xff]
      %v180 = vld [vmem:[%s166 + $0x30] sm:$0xff]
      %v181 = vld [vmem:[%s166 + $0x38] sm:$0xff]
      %v182 = vld [vmem:[%s166 + $0x40] sm:$0xff]
      %v183 = vld [vmem:[%s166 + $0x48] sm:$0xff]
      %v184 = vld [vmem:[%s166 + $0x50] sm:$0xff]
      %v185 = vld [vmem:[%s166 + $0x58] sm:$0xff]
      %v186 = vld [vmem:[%s166 + $0x60] sm:$0xff]
      %v187 = vld [vmem:[%s166 + $0x68] sm:$0xff]
      %v188 = vld [vmem:[%s166 + $0x70] sm:$0xff]
      %v189 = vld [vmem:[%s166 + $0x78] sm:$0xff]
      %v190 = vld [vmem:[%s1] sm:$0x1]
      %v192 = vlaneseq
      %v193 = vshrl.u32 %v192, 7
      %v194 = vsub.s32 0, %v193
      %v195 = vrot.slane %v190, %v194
      %v197 = vmul.f32 %v174, %v195
      %v198 = vmul.f32 %v175, %v195
      %v199 = vmul.f32 %v176, %v195
      %v200 = vmul.f32 %v177, %v195
      %v201 = vmul.f32 %v178, %v195
      %v202 = vmul.f32 %v179, %v195
      %v203 = vmul.f32 %v180, %v195
      %v204 = vmul.f32 %v181, %v195
      %v205 = vmul.f32 %v182, %v195
      %v206 = vmul.f32 %v183, %v195
      %v207 = vmul.f32 %v184, %v195
      %v208 = vmul.f32 %v185, %v195
      %v209 = vmul.f32 %v186, %v195
      %v210 = vmul.f32 %v187, %v195
      %v211 = vmul.f32 %v188, %v195
      %v212 = vmul.f32 %v189, %v195
      %v213 = vld [vmem:[%s2] sm:$0x1]
      %v215 = vlaneseq
      %v216 = vshrl.u32 %v215, 7
      %v217 = vsub.s32 0, %v216
      %v218 = vrot.slane %v213, %v217
      %v220 = vadd.f32 %v197, %v218
      %v221 = vadd.f32 %v198, %v218
      %v222 = vadd.f32 %v199, %v218
      %v223 = vadd.f32 %v200, %v218
      %v224 = vadd.f32 %v201, %v218
      %v225 = vadd.f32 %v202, %v218
      %v226 = vadd.f32 %v203, %v218
      %v227 = vadd.f32 %v204, %v218
      %v228 = vadd.f32 %v205, %v218
      %v229 = vadd.f32 %v206, %v218
      %v230 = vadd.f32 %v207, %v218
      %v231 = vadd.f32 %v208, %v218
      %v232 = vadd.f32 %v209, %v218
      %v233 = vadd.f32 %v210, %v218
      %v234 = vadd.f32 %v211, %v218
      %v235 = vadd.f32 %v212, %v218
      %236 = vst [vmem:[%s172] sm:$0xff] %v220
      %237 = vst [vmem:[%s172 + $0x8] sm:$0xff] %v221
      %238 = vst [vmem:[%s172 + $0x10] sm:$0xff] %v222
      %239 = vst [vmem:[%s172 + $0x18] sm:$0xff] %v223
      %240 = vst [vmem:[%s172 + $0x20] sm:$0xff] %v224
      %241 = vst [vmem:[%s172 + $0x28] sm:$0xff] %v225
      %242 = vst [vmem:[%s172 + $0x30] sm:$0xff] %v226
      %243 = vst [vmem:[%s172 + $0x38] sm:$0xff] %v227
      %244 = vst [vmem:[%s172 + $0x40] sm:$0xff] %v228
      %245 = vst [vmem:[%s172 + $0x48] sm:$0xff] %v229
      %246 = vst [vmem:[%s172 + $0x50] sm:$0xff] %v230
      %247 = vst [vmem:[%s172 + $0x58] sm:$0xff] %v231
      %248 = vst [vmem:[%s172 + $0x60] sm:$0xff] %v232
      %249 = vst [vmem:[%s172 + $0x68] sm:$0xff] %v233
      %250 = vst [vmem:[%s172 + $0x70] sm:$0xff] %v234
      %251 = vst [vmem:[%s172 + $0x78] sm:$0xff] %v235
      %s252 = smul.u32 16, %s14
      %p253 = scmp.lt.s32.totalorder %s252, 63
      %s254 = scalar_select %p253, %s252, 63
      %s255 = smul.addr %s254, 8
      %s256 = scalar_lea.vmem %s3, %s255
      // Predicated region
      $region33: #{mynet_forward.7} parent=31 // pred_check
        %p257 = pneg %p100
      $region34: #{mynet_forward.7} parent=31 // pred_check_branch
        %259 = sbr.rel (%p257) target = $region36
      $region35: #{mynet_forward.7} parent=31 // pred_region
        %s260 = smul.u32 16, %s14
      $region36: #{mynet_forward.7} parent=31 // pred_fallthru
        _
    $region32: #{mynet_forward.7} parent=5 // pred_fallthru
      _
    %p261 = scmp.le.s32.totalorder 2, %s9
    // Predicated region
    $region37: #{mynet_forward.7} parent=5 // pred_check
      %p262 = pneg %p261
    $region38: #{mynet_forward.7} parent=5 // pred_check_branch
      %264 = sbr.rel (%p262) target = $region40
    $region39: #{mynet_forward.7} parent=5 // pred_region
      %s265 = ssub.s32 %s9, 2
      // Predicated region
      $region41: #{mynet_forward.7} parent=39 // pred_check
        %p266 = pneg %p106
      $region42: #{mynet_forward.7} parent=39 // pred_check_branch
        %268 = sbr.rel (%p266) target = $region44
      $region43: #{mynet_forward.7} parent=39 // pred_region
        %s269 = smul.u32 16, %s15
        %p270 = scmp.lt.s32.totalorder %s269, 63
        %s271 = scalar_select %p270, %s269, 63
        %s272 = smul.addr %s271, 8
        %s273 = scalar_lea.vmem %s3, %s272
      $region44: #{mynet_forward.7} parent=39 // pred_fallthru
        _
    $region40: #{mynet_forward.7} parent=5 // pred_fallthru
      _
  $region6: #{mynet_forward.7} parent=0 // loop_footer
    %s13 = sadd.s32 1, %s9
  $region7: #{mynet_forward.7} parent=0 // loop_footer_branch
    %8 = sbr.rel target = $region3
  $region8: #{mynet_forward.7} parent=0 // loop_exit
    _

// kernel: mynet_forward.6
$region0: #{mynet_forward.6}
  #allocation0 [shape = 'u32[]', space=smem, size = 0x4, offset = 0x4, fixed_abs, tag = 'smem constant byte address 0x4 - core index']
  #allocation1 [shape = 'u32[144,128]{1,0:T(1,128)}', space=vmem, size = 0x12000, scoped, tag = 'internal scratch']
  %s0 = inlined_call_operand.vmem [shape: f32[512,128], index: 0, kind: input, shape index: {}]
  %s1 = inlined_call_operand.vmem [shape: f32[128,128], index: 1, kind: input, shape index: {}]
  %s2 = inlined_call_operand.vmem [shape: f32[1,128], index: 2, kind: input, shape index: {}]
  %s3 = inlined_call_operand.vmem [shape: f32[512,128], index: 3, kind: output, shape index: {0}]
  %s4 = inlined_call_operand.vmem [shape: f32[4,2,128], index: 4, kind: output, shape index: {1}]
  %5 = xla_tuple %s3, %s4
  %s6 = sld [smem:[#allocation0]]
  $region53: #{mynet_forward.6} parent=0
    _
  %s8 = ssub.s32 1, %s6
  %s9 = scalar_select 0, %s8, %s6
  loop: start=0, step=1, limit=6
  $region2: #{mynet_forward.6} parent=0 // loop_pre_header
    _
  $region3: #{mynet_forward.6} parent=0 // loop_header
    %s11 = sphi 0, %s15
    %p12 = scmp.ge.s32.totalorder %s11, 6
    %s21 = sphi 0, %s23
    %s24 = sphi 0, %s21
    %s25 = sphi 0, %s24
    %s41 = sphi 0, %s25
    %s45 = sphi 0, %s45
    %s47 = sphi 0, %s45
    %s48 = sphi 0, %s47
    %s62 = sphi 0, %s48
    %s66 = sphi 0, %s66
    %s68 = sphi 0, %s66
    %s69 = sphi 0, %s68
    %s83 = sphi 0, %s69
    %s89 = sphi 0, %s91
    %s92 = sphi 0, %s89
    %s93 = sphi 0, %s92
    %s109 = sphi 0, %s93
    %s115 = sphi 0, %s117
    %s118 = sphi 0, %s115
    %s119 = sphi 0, %s118
    %s135 = sphi 0, %s119
  $region4: #{mynet_forward.6} parent=0 // loop_header_branch
    %14 = sbr.rel (%p12) target = $region8
  $region5: #{mynet_forward.6} parent=0 // loop_body
    %s16 = ssub.s32 %s11, 1
    %s17 = ssub.s32 %s11, 2
    %s18 = sadd.s32 %s11, 1
    %s19 = ssub.s32 %s11, %s18
    %p20 = scmp.eq.s32.totalorder %s19, 0
    %s22 = sadd.s32 %s21, 1
    %s23 = scalar_select %p20, %s21, %s22
    %p26 = pneg %p20
    %p27 = scmp.eq.s32.totalorder %s11, 3
    %p28 = por %p26, %p27
    %p29 = scmp.ne.s32.totalorder %s21, %s24
    %p30 = scmp.eq.s32.totalorder %s11, 0
    %p31 = por %p29, %p30
    %p32 = scmp.ne.s32.totalorder %s21, %s24
    %p33 = scmp.eq.s32.totalorder %s16, 3
    %p34 = por %p32, %p33
    %p35 = scmp.ne.s32.totalorder %s24, %s25
    %p36 = scmp.eq.s32.totalorder %s16, 0
    %p37 = por %p35, %p36
    %p38 = scmp.ne.s32.totalorder %s24, %s25
    %p39 = scmp.eq.s32.totalorder %s17, 3
    %p40 = por %p38, %p39
    %p42 = scmp.ne.s32.totalorder %s25, %s41
    %p43 = scmp.eq.s32.totalorder %s17, 0
    %p44 = por %p42, %p43
    %s46 = sadd.s32 %s45, 1
    %p49 = scmp.eq.s32.totalorder %s11, 3
    %p50 = scmp.ne.s32.totalorder %s45, %s47
    %p51 = scmp.eq.s32.totalorder %s11, 0
    %p52 = por %p50, %p51
    %p53 = scmp.ne.s32.totalorder %s45, %s47
    %p54 = scmp.eq.s32.totalorder %s16, 3
    %p55 = por %p53, %p54
    %p56 = scmp.ne.s32.totalorder %s47, %s48
    %p57 = scmp.eq.s32.totalorder %s16, 0
    %p58 = por %p56, %p57
    %p59 = scmp.ne.s32.totalorder %s47, %s48
    %p60 = scmp.eq.s32.totalorder %s17, 3
    %p61 = por %p59, %p60
    %p63 = scmp.ne.s32.totalorder %s48, %s62
    %p64 = scmp.eq.s32.totalorder %s17, 0
    %p65 = por %p63, %p64
    %s67 = sadd.s32 %s66, 1
    %p70 = scmp.eq.s32.totalorder %s11, 3
    %p71 = scmp.ne.s32.totalorder %s66, %s68
    %p72 = scmp.eq.s32.totalorder %s11, 0
    %p73 = por %p71, %p72
    %p74 = scmp.ne.s32.totalorder %s66, %s68
    %p75 = scmp.eq.s32.totalorder %s16, 3
    %p76 = por %p74, %p75
    %p77 = scmp.ne.s32.totalorder %s68, %s69
    %p78 = scmp.eq.s32.totalorder %s16, 0
    %p79 = por %p77, %p78
    %p80 = scmp.ne.s32.totalorder %s68, %s69
    %p81 = scmp.eq.s32.totalorder %s17, 3
    %p82 = por %p80, %p81
    %p84 = scmp.ne.s32.totalorder %s69, %s83
    %p85 = scmp.eq.s32.totalorder %s17, 0
    %p86 = por %p84, %p85
    %s87 = ssub.s32 %s11, %s18
    %p88 = scmp.eq.s32.totalorder %s87, 0
    %s90 = sadd.s32 %s89, 1
    %s91 = scalar_select %p88, %s89, %s90
    %p94 = pneg %p88
    %p95 = scmp.eq.s32.totalorder %s11, 3
    %p96 = por %p94, %p95
    %p97 = scmp.ne.s32.totalorder %s89, %s92
    %p98 = scmp.eq.s32.totalorder %s11, 0
    %p99 = por %p97, %p98
    %p100 = scmp.ne.s32.totalorder %s89, %s92
    %p101 = scmp.eq.s32.totalorder %s16, 3
    %p102 = por %p100, %p101
    %p103 = scmp.ne.s32.totalorder %s92, %s93
    %p104 = scmp.eq.s32.totalorder %s16, 0
    %p105 = por %p103, %p104
    %p106 = scmp.ne.s32.totalorder %s92, %s93
    %p107 = scmp.eq.s32.totalorder %s17, 3
    %p108 = por %p106, %p107
    %p110 = scmp.ne.s32.totalorder %s93, %s109
    %p111 = scmp.eq.s32.totalorder %s17, 0
    %p112 = por %p110, %p111
    %s113 = ssub.s32 %s11, %s18
    %p114 = scmp.eq.s32.totalorder %s113, 0
    %s116 = sadd.s32 %s115, 1
    %s117 = scalar_select %p114, %s115, %s116
    %p120 = pneg %p114
    %p121 = scmp.eq.s32.totalorder %s11, 3
    %p122 = por %p120, %p121
    %p123 = scmp.ne.s32.totalorder %s115, %s118
    %p124 = scmp.eq.s32.totalorder %s11, 0
    %p125 = por %p123, %p124
    %p126 = scmp.ne.s32.totalorder %s115, %s118
    %p127 = scmp.eq.s32.totalorder %s16, 3
    %p128 = por %p126, %p127
    %p129 = scmp.ne.s32.totalorder %s118, %s119
    %p130 = scmp.eq.s32.totalorder %s16, 0
    %p131 = por %p129, %p130
    %p132 = scmp.ne.s32.totalorder %s118, %s119
    %p133 = scmp.eq.s32.totalorder %s17, 3
    %p134 = por %p132, %p133
    %p136 = scmp.ne.s32.totalorder %s119, %s135
    %p137 = scmp.eq.s32.totalorder %s17, 0
    %p138 = por %p136, %p137
    %p139 = scmp.le.s32.totalorder 1, %s11
    %p140 = scmp.lt.s32.totalorder %s11, 5
    %p141 = pnand %p139, %p140
    %p142 = pneg %p141
    // Predicated region
    $region9: #{mynet_forward.6} parent=5 // pred_check
      _
    $region10: #{mynet_forward.6} parent=5 // pred_check_branch
      %144 = sbr.rel (%p141) target = $region12
    $region11: #{mynet_forward.6} parent=5 // pred_region
      %s145 = ssub.s32 %s11, 1
      // Predicated region
      $region13: #{mynet_forward.6} parent=11 // pred_check
        %p146 = pneg %p58
      $region14: #{mynet_forward.6} parent=11 // pred_check_branch
        %148 = sbr.rel (%p146) target = $region16
      $region15: #{mynet_forward.6} parent=11 // pred_region
        _
      $region16: #{mynet_forward.6} parent=11 // pred_fallthru
        _
      // Predicated region
      $region17: #{mynet_forward.6} parent=11 // pred_check
        %p149 = pneg %p79
      $region18: #{mynet_forward.6} parent=11 // pred_check_branch
        %151 = sbr.rel (%p149) target = $region20
      $region19: #{mynet_forward.6} parent=11 // pred_region
        _
      $region20: #{mynet_forward.6} parent=11 // pred_fallthru
        _
    $region12: #{mynet_forward.6} parent=5 // pred_fallthru
      _
    %p152 = scmp.lt.s32.totalorder %s11, 4
    // Predicated region
    $region21: #{mynet_forward.6} parent=5 // pred_check
      %p153 = pneg %p152
    $region22: #{mynet_forward.6} parent=5 // pred_check_branch
      %155 = sbr.rel (%p153) target = $region24
    $region23: #{mynet_forward.6} parent=5 // pred_region
      // Predicated region
      $region25: #{mynet_forward.6} parent=23 // pred_check
        %p156 = pneg %p31
      $region26: #{mynet_forward.6} parent=23 // pred_check_branch
        %158 = sbr.rel (%p156) target = $region28
      $region27: #{mynet_forward.6} parent=23 // pred_region
        %s159 = smul.u32 16, %s11
        %p160 = scmp.lt.s32.totalorder %s159, 63
        %s161 = scalar_select %p160, %s159, 63
        %s162 = smul.addr %s161, 8
        %s163 = scalar_lea.vmem %s0, %s162
        %s164 = smul.u32 16, %s11
      $region28: #{mynet_forward.6} parent=23 // pred_fallthru
        _
    $region24: #{mynet_forward.6} parent=5 // pred_fallthru
      _
    %p165 = scmp.le.s32.totalorder 1, %s11
    %p166 = scmp.lt.s32.totalorder %s11, 5
    %p167 = pnand %p165, %p166
    %p168 = pneg %p167
    // Predicated region
    $region29: #{mynet_forward.6} parent=5 // pred_check
      _
    $region30: #{mynet_forward.6} parent=5 // pred_check_branch
      %170 = sbr.rel (%p167) target = $region32
    $region31: #{mynet_forward.6} parent=5 // pred_region
      %s171 = ssub.s32 %s11, 1
      %s172 = smul.u32 16, %s16
      %p173 = scmp.lt.s32.totalorder %s172, 63
      %s174 = scalar_select %p173, %s172, 63
      %s175 = smul.addr %s174, 8
      %s176 = scalar_lea.vmem %s0, %s175
      %p177 = pneg %p37
      %p178 = pneg %p34
      %p179 = pneg %p58
      %p180 = pneg %p55
      %p181 = pneg %p79
      %p182 = pneg %p76
      %p183 = pneg %p105
      %p184 = pneg %p102
      %s185 = smul.u32 16, %s16
      %p186 = scmp.lt.s32.totalorder %s185, 63
      %s187 = scalar_select %p186, %s185, 63
      %s188 = smul.addr %s187, 8
      %s189 = scalar_lea.vmem %s3, %s188
      %p190 = pneg %p131
      %p191 = pneg %p128
      %p192 = scmp.lt.s32.totalorder %s16, 3
      %s193 = scalar_select %p192, %s16, 3
      %s194 = smul.addr %s193, 2
      %s195 = scalar_lea.vmem %s4, %s194
      %s196 = smul.u32 16, %s16
      %p197 = scmp.lt.s32.totalorder %s196, 63
      %s198 = scalar_select %p197, %s196, 63
      %s199 = smul.addr %s198, 8
      %s200 = scalar_lea.vmem %s0, %s199
      %s201 = smul.u32 16, %s16
      %s202 = smul.u32 16, %s16
      %p203 = scmp.lt.s32.totalorder %s202, 63
      %s204 = scalar_select %p203, %s202, 63
      %s205 = smul.addr %s204, 8
      %s206 = scalar_lea.vmem %s3, %s205
      %s207 = smul.u32 16, %s16
      %p208 = scmp.lt.s32.totalorder %s16, 3
      %s209 = scalar_select %p208, %s16, 3
      %s210 = smul.addr %s209, 2
      %s211 = scalar_lea.vmem %s4, %s210
      %v212 = vld [vmem:[%s200] sm:$0xff]
      %v213 = vld [vmem:[%s200 + $0x8] sm:$0xff]
      %v214 = vld [vmem:[%s200 + $0x10] sm:$0xff]
      %v215 = vld [vmem:[%s200 + $0x18] sm:$0xff]
      %v216 = vld [vmem:[%s200 + $0x20] sm:$0xff]
      %v217 = vld [vmem:[%s200 + $0x28] sm:$0xff]
      %v218 = vld [vmem:[%s200 + $0x30] sm:$0xff]
      %v219 = vld [vmem:[%s200 + $0x38] sm:$0xff]
      %v220 = vld [vmem:[%s200 + $0x40] sm:$0xff]
      %v221 = vld [vmem:[%s200 + $0x48] sm:$0xff]
      %v222 = vld [vmem:[%s200 + $0x50] sm:$0xff]
      %v223 = vld [vmem:[%s200 + $0x58] sm:$0xff]
      %v224 = vld [vmem:[%s200 + $0x60] sm:$0xff]
      %v225 = vld [vmem:[%s200 + $0x68] sm:$0xff]
      %v226 = vld [vmem:[%s200 + $0x70] sm:$0xff]
      %v227 = vld [vmem:[%s200 + $0x78] sm:$0xff]
      %v228 = vld [vmem:[%s1] sm:$0xff]
      %v229 = vld [vmem:[%s1 + $0x8] sm:$0xff]
      %v230 = vld [vmem:[%s1 + $0x10] sm:$0xff]
      %v231 = vld [vmem:[%s1 + $0x18] sm:$0xff]
      %v232 = vld [vmem:[%s1 + $0x20] sm:$0xff]
      %v233 = vld [vmem:[%s1 + $0x28] sm:$0xff]
      %v234 = vld [vmem:[%s1 + $0x30] sm:$0xff]
      %v235 = vld [vmem:[%s1 + $0x38] sm:$0xff]
      %v236 = vld [vmem:[%s1 + $0x40] sm:$0xff]
      %v237 = vld [vmem:[%s1 + $0x48] sm:$0xff]
      %v238 = vld [vmem:[%s1 + $0x50] sm:$0xff]
      %v239 = vld [vmem:[%s1 + $0x58] sm:$0xff]
      %v240 = vld [vmem:[%s1 + $0x60] sm:$0xff]
      %v241 = vld [vmem:[%s1 + $0x68] sm:$0xff]
      %v242 = vld [vmem:[%s1 + $0x70] sm:$0xff]
      %v243 = vld [vmem:[%s1 + $0x78] sm:$0xff]
      %v244 = vld [vmem:[%s2] sm:$0x1]
      %v246 = vlaneseq
      %v247 = vshrl.u32 %v246, 7
      %v248 = vsub.s32 0, %v247
      %v249 = vrot.slane %v244, %v248
      %251 = vmatprep.subr.mxu0 0.0
      %252 = vmatpush1.msra.mxu0 %v243
      %253 = vmatprep.subr.mxu0 0.0
      %254 = vmatpush1.msra.mxu0 %v242
      %255 = vmatprep.subr.mxu0 0.0
      %256 = vmatpush1.msra.mxu0 %v241
      %257 = vmatprep.subr.mxu0 0.0
      %258 = vmatpush1.msra.mxu0 %v240
      %259 = vmatprep.subr.mxu0 0.0
      %260 = vmatpush1.msra.mxu0 %v239
      %261 = vmatprep.subr.mxu0 0.0
      %262 = vmatpush1.msra.mxu0 %v238
      %263 = vmatprep.subr.mxu0 0.0
      %264 = vmatpush1.msra.mxu0 %v237
      %265 = vmatprep.subr.mxu0 0.0
      %266 = vmatpush1.msra.mxu0 %v236
      %267 = vmatprep.subr.mxu0 0.0
      %268 = vmatpush1.msra.mxu0 %v235
      %269 = vmatprep.subr.mxu0 0.0
      %270 = vmatpush1.msra.mxu0 %v234
      %271 = vmatprep.subr.mxu0 0.0
      %272 = vmatpush1.msra.mxu0 %v233
      %273 = vmatprep.subr.mxu0 0.0
      %274 = vmatpush1.msra.mxu0 %v232
      %275 = vmatprep.subr.mxu0 0.0
      %276 = vmatpush1.msra.mxu0 %v231
      %277 = vmatprep.subr.mxu0 0.0
      %278 = vmatpush1.msra.mxu0 %v230
      %279 = vmatprep.subr.mxu0 0.0
      %280 = vmatpush1.msra.mxu0 %v229
      %281 = vmatprep.subr.mxu0 0.0
      %282 = vmatpush1.msra.mxu0 %v228
      %283 = vmatprep.subr.mxu0 0.0
      %284 = vmatpush2.msra.mxu0 0.0
      %285 = vmatprep.subr.mxu0 0.0
      %286 = vmatpush2.msra.mxu0 0.0
      %287 = vmatprep.subr.mxu0 0.0
      %288 = vmatpush2.msra.mxu0 0.0
      %289 = vmatprep.subr.mxu0 0.0
      %290 = vmatpush2.msra.mxu0 0.0
      %291 = vmatprep.subr.mxu0 0.0
      %292 = vmatpush2.msra.mxu0 0.0
      %293 = vmatprep.subr.mxu0 0.0
      %294 = vmatpush2.msra.mxu0 0.0
      %295 = vmatprep.subr.mxu0 0.0
      %296 = vmatpush2.msra.mxu0 0.0
      %297 = vmatprep.subr.mxu0 0.0
      %298 = vmatpush2.msra.mxu0 0.0
      %299 = vmatprep.subr.mxu0 0.0
      %300 = vmatpush2.msra.mxu0 0.0
      %301 = vmatprep.subr.mxu0 0.0
      %302 = vmatpush2.msra.mxu0 0.0
      %303 = vmatprep.subr.mxu0 0.0
      %304 = vmatpush2.msra.mxu0 0.0
      %305 = vmatprep.subr.mxu0 0.0
      %306 = vmatpush2.msra.mxu0 0.0
      %307 = vmatprep.subr.mxu0 0.0
      %308 = vmatpush2.msra.mxu0 0.0
      %309 = vmatprep.subr.mxu0 0.0
      %310 = vmatpush2.msra.mxu0 0.0
      %311 = vmatprep.subr.mxu0 0.0
      %312 = vmatpush2.msra.mxu0 0.0
      %313 = vmatprep.subr.mxu0 0.0
      %314 = vmatpush2.msra.mxu0 0.0
      %315 = vmatprep.mubr.f32.mxu0 0.0
      %316 = vmatmul.mubr.f32.gmra.mxu0 %v212
      %v317 = vpop.f32.mrf.mxu0
      %v318 = vadd.f32 %v249, %v317
      %v319 = vpop.f32.mrf.mxu0
      %320 = vmatprep.mubr.f32.mxu0 0.0
      %321 = vmatmul.mubr.f32.gmra.mxu0 %v213
      %v322 = vpop.f32.mrf.mxu0
      %v323 = vadd.f32 %v249, %v322
      %v324 = vpop.f32.mrf.mxu0
      %325 = vmatprep.mubr.f32.mxu0 0.0
      %326 = vmatmul.mubr.f32.gmra.mxu0 %v214
      %v327 = vpop.f32.mrf.mxu0
      %v328 = vadd.f32 %v249, %v327
      %v329 = vpop.f32.mrf.mxu0
      %330 = vmatprep.mubr.f32.mxu0 0.0
      %331 = vmatmul.mubr.f32.gmra.mxu0 %v215
      %v332 = vpop.f32.mrf.mxu0
      %v333 = vadd.f32 %v249, %v332
      %v334 = vpop.f32.mrf.mxu0
      %335 = vmatprep.mubr.f32.mxu0 0.0
      %336 = vmatmul.mubr.f32.gmra.mxu0 %v216
      %v337 = vpop.f32.mrf.mxu0
      %v338 = vadd.f32 %v249, %v337
      %v339 = vpop.f32.mrf.mxu0
      %340 = vmatprep.mubr.f32.mxu0 0.0
      %341 = vmatmul.mubr.f32.gmra.mxu0 %v217
      %v342 = vpop.f32.mrf.mxu0
      %v343 = vadd.f32 %v249, %v342
      %v344 = vpop.f32.mrf.mxu0
      %345 = vmatprep.mubr.f32.mxu0 0.0
      %346 = vmatmul.mubr.f32.gmra.mxu0 %v218
      %v347 = vpop.f32.mrf.mxu0
      %v348 = vadd.f32 %v249, %v347
      %v349 = vpop.f32.mrf.mxu0
      %350 = vmatprep.mubr.f32.mxu0 0.0
      %351 = vmatmul.mubr.f32.gmra.mxu0 %v219
      %v352 = vpop.f32.mrf.mxu0
      %v353 = vadd.f32 %v249, %v352
      %v354 = vpop.f32.mrf.mxu0
      %355 = vmatprep.mubr.f32.mxu0 0.0
      %356 = vmatmul.mubr.f32.gmra.mxu0 %v220
      %v357 = vpop.f32.mrf.mxu0
      %v358 = vadd.f32 %v249, %v357
      %v359 = vpop.f32.mrf.mxu0
      %360 = vmatprep.mubr.f32.mxu0 0.0
      %361 = vmatmul.mubr.f32.gmra.mxu0 %v221
      %v362 = vpop.f32.mrf.mxu0
      %v363 = vadd.f32 %v249, %v362
      %v364 = vpop.f32.mrf.mxu0
      %365 = vmatprep.mubr.f32.mxu0 0.0
      %366 = vmatmul.mubr.f32.gmra.mxu0 %v222
      %v367 = vpop.f32.mrf.mxu0
      %v368 = vadd.f32 %v249, %v367
      %v369 = vpop.f32.mrf.mxu0
      %370 = vmatprep.mubr.f32.mxu0 0.0
      %371 = vmatmul.mubr.f32.gmra.mxu0 %v223
      %v372 = vpop.f32.mrf.mxu0
      %v373 = vadd.f32 %v249, %v372
      %v374 = vpop.f32.mrf.mxu0
      %375 = vmatprep.mubr.f32.mxu0 0.0
      %376 = vmatmul.mubr.f32.gmra.mxu0 %v224
      %v377 = vpop.f32.mrf.mxu0
      %v378 = vadd.f32 %v249, %v377
      %v379 = vpop.f32.mrf.mxu0
      %380 = vmatprep.mubr.f32.mxu0 0.0
      %381 = vmatmul.mubr.f32.gmra.mxu0 %v225
      %v382 = vpop.f32.mrf.mxu0
      %v383 = vadd.f32 %v249, %v382
      %v384 = vpop.f32.mrf.mxu0
      %385 = vmatprep.mubr.f32.mxu0 0.0
      %386 = vmatmul.mubr.f32.gmra.mxu0 %v226
      %v387 = vpop.f32.mrf.mxu0
      %v388 = vadd.f32 %v249, %v387
      %v389 = vpop.f32.mrf.mxu0
      %390 = vmatprep.mubr.f32.mxu0 0.0
      %391 = vmatmul.mubr.f32.gmra.mxu0 %v227
      %v392 = vpop.f32.mrf.mxu0
      %v393 = vadd.f32 %v249, %v392
      %v394 = vpop.f32.mrf.mxu0
      %395 = vdwg.mxu0
      %v396 = vmax.f32 %v318, 0.0
      %v397 = vmax.f32 %v323, 0.0
      %v398 = vmax.f32 %v328, 0.0
      %v399 = vmax.f32 %v333, 0.0
      %v400 = vmax.f32 %v338, 0.0
      %v401 = vmax.f32 %v343, 0.0
      %v402 = vmax.f32 %v348, 0.0
      %v403 = vmax.f32 %v353, 0.0
      %v404 = vmax.f32 %v358, 0.0
      %v405 = vmax.f32 %v363, 0.0
      %v406 = vmax.f32 %v368, 0.0
      %v407 = vmax.f32 %v373, 0.0
      %v408 = vmax.f32 %v378, 0.0
      %v409 = vmax.f32 %v383, 0.0
      %v410 = vmax.f32 %v388, 0.0
      %v411 = vmax.f32 %v393, 0.0
      %412 = vst [vmem:[%s206] sm:$0xff] %v396
      %413 = vst [vmem:[%s206 + $0x8] sm:$0xff] %v397
      %414 = vst [vmem:[%s206 + $0x10] sm:$0xff] %v398
      %415 = vst [vmem:[%s206 + $0x18] sm:$0xff] %v399
      %416 = vst [vmem:[%s206 + $0x20] sm:$0xff] %v400
      %417 = vst [vmem:[%s206 + $0x28] sm:$0xff] %v401
      %418 = vst [vmem:[%s206 + $0x30] sm:$0xff] %v402
      %419 = vst [vmem:[%s206 + $0x38] sm:$0xff] %v403
      %420 = vst [vmem:[%s206 + $0x40] sm:$0xff] %v404
      %421 = vst [vmem:[%s206 + $0x48] sm:$0xff] %v405
      %422 = vst [vmem:[%s206 + $0x50] sm:$0xff] %v406
      %423 = vst [vmem:[%s206 + $0x58] sm:$0xff] %v407
      %424 = vst [vmem:[%s206 + $0x60] sm:$0xff] %v408
      %425 = vst [vmem:[%s206 + $0x68] sm:$0xff] %v409
      %426 = vst [vmem:[%s206 + $0x70] sm:$0xff] %v410
      %427 = vst [vmem:[%s206 + $0x78] sm:$0xff] %v411
      %v428 = vadd.f32 %v396, %v397
      %v429 = vadd.f32 %v428, %v398
      %v430 = vadd.f32 %v429, %v399
      %v431 = vadd.f32 %v430, %v400
      %v432 = vadd.f32 %v431, %v401
      %v433 = vadd.f32 %v432, %v402
      %v434 = vadd.f32 %v433, %v403
      %v435 = vadd.f32 %v434, %v404
      %v436 = vadd.f32 %v435, %v405
      %v437 = vadd.f32 %v436, %v406
      %v438 = vadd.f32 %v437, %v407
      %v439 = vadd.f32 %v438, %v408
      %v440 = vadd.f32 %v439, %v409
      %v441 = vadd.f32 %v440, %v410
      %v442 = vadd.f32 %v441, %v411
      %v443 = vrot.slane %v442, 4
      %v444 = vadd.f32 %v442, %v443
      %v445 = vrot.slane %v444, 2
      %v446 = vadd.f32 %v444, %v445
      %v447 = vrot.slane %v446, 1
      %v448 = vadd.f32 %v446, %v447
      %v449 = vmul.f32 %v396, %v396
      %v450 = vmul.f32 %v397, %v397
      %v451 = vmul.f32 %v398, %v398
      %v452 = vmul.f32 %v399, %v399
      %v453 = vmul.f32 %v400, %v400
      %v454 = vmul.f32 %v401, %v401
      %v455 = vmul.f32 %v402, %v402
      %v456 = vmul.f32 %v403, %v403
      %v457 = vmul.f32 %v404, %v404
      %v458 = vmul.f32 %v405, %v405
      %v459 = vmul.f32 %v406, %v406
      %v460 = vmul.f32 %v407, %v407
      %v461 = vmul.f32 %v408, %v408
      %v462 = vmul.f32 %v409, %v409
      %v463 = vmul.f32 %v410, %v410
      %v464 = vmul.f32 %v411, %v411
      %v465 = vadd.f32 %v449, %v450
      %v466 = vadd.f32 %v465, %v451
      %v467 = vadd.f32 %v466, %v452
      %v468 = vadd.f32 %v467, %v453
      %v469 = vadd.f32 %v468, %v454
      %v470 = vadd.f32 %v469, %v455
      %v471 = vadd.f32 %v470, %v456
      %v472 = vadd.f32 %v471, %v457
      %v473 = vadd.f32 %v472, %v458
      %v474 = vadd.f32 %v473, %v459
      %v475 = vadd.f32 %v474, %v460
      %v476 = vadd.f32 %v475, %v461
      %v477 = vadd.f32 %v476, %v462
      %v478 = vadd.f32 %v477, %v463
      %v479 = vadd.f32 %v478, %v464
      %v480 = vrot.slane %v479, 4
      %v481 = vadd.f32 %v479, %v480
      %v482 = vrot.slane %v481, 2
      %v483 = vadd.f32 %v481, %v482
      %v484 = vrot.slane %v483, 1
      %v485 = vadd.f32 %v483, %v484
      %vm486 = vcmask 1040384
      %v487 = vsel %vm486, %v448, %v485
      %488 = vst [vmem:[%s211] sm:$0x3] %v487
      %s489 = smul.u32 16, %s16
      %p490 = scmp.lt.s32.totalorder %s489, 63
      %s491 = scalar_select %p490, %s489, 63
      %s492 = smul.addr %s491, 8
      %s493 = scalar_lea.vmem %s3, %s492
      %p494 = scmp.lt.s32.totalorder %s16, 3
      %s495 = scalar_select %p494, %s16, 3
      %s496 = smul.addr %s495, 2
      %s497 = scalar_lea.vmem %s4, %s496
      // Predicated region
      $region33: #{mynet_forward.6} parent=31 // pred_check
        %p498 = pneg %p102
      $region34: #{mynet_forward.6} parent=31 // pred_check_branch
        %500 = sbr.rel (%p498) target = $region36
      $region35: #{mynet_forward.6} parent=31 // pred_region
        %s501 = smul.u32 16, %s16
      $region36: #{mynet_forward.6} parent=31 // pred_fallthru
        _
      // Predicated region
      $region37: #{mynet_forward.6} parent=31 // pred_check
        %p502 = pneg %p128
      $region38: #{mynet_forward.6} parent=31 // pred_check_branch
        %504 = sbr.rel (%p502) target = $region40
      $region39: #{mynet_forward.6} parent=31 // pred_region
        _
      $region40: #{mynet_forward.6} parent=31 // pred_fallthru
        _
    $region32: #{mynet_forward.6} parent=5 // pred_fallthru
      _
    %p505 = scmp.le.s32.totalorder 2, %s11
    // Predicated region
    $region41: #{mynet_forward.6} parent=5 // pred_check
      %p506 = pneg %p505
    $region42: #{mynet_forward.6} parent=5 // pred_check_branch
      %508 = sbr.rel (%p506) target = $region44
    $region43: #{mynet_forward.6} parent=5 // pred_region
      %s509 = ssub.s32 %s11, 2
      // Predicated region
      $region45: #{mynet_forward.6} parent=43 // pred_check
        %p510 = pneg %p108
      $region46: #{mynet_forward.6} parent=43 // pred_check_branch
        %512 = sbr.rel (%p510) target = $region48
      $region47: #{mynet_forward.6} parent=43 // pred_region
        %s513 = smul.u32 16, %s17
        %p514 = scmp.lt.s32.totalorder %s513, 63
        %s515 = scalar_select %p514, %s513, 63
        %s516 = smul.addr %s515, 8
        %s517 = scalar_lea.vmem %s3, %s516
      $region48: #{mynet_forward.6} parent=43 // pred_fallthru
        _
      // Predicated region
      $region49: #{mynet_forward.6} parent=43 // pred_check
        %p518 = pneg %p134
      $region50: #{mynet_forward.6} parent=43 // pred_check_branch
        %520 = sbr.rel (%p518) target = $region52
      $region51: #{mynet_forward.6} parent=43 // pred_region
        %p521 = scmp.lt.s32.totalorder %s17, 3
        %s522 = scalar_select %p521, %s17, 3
        %s523 = smul.addr %s522, 2
        %s524 = scalar_lea.vmem %s4, %s523
      $region52: #{mynet_forward.6} parent=43 // pred_fallthru
        _
    $region44: #{mynet_forward.6} parent=5 // pred_fallthru
      _
  $region6: #{mynet_forward.6} parent=0 // loop_footer
    %s15 = sadd.s32 1, %s11
  $region7: #{mynet_forward.6} parent=0 // loop_footer_branch
    %10 = sbr.rel target = $region3
  $region8: #{mynet_forward.6} parent=0 // loop_exit
    _

// kernel: mynet_forward.11
$region0: #{mynet_forward.11}
  #allocation0 [shape = 'u32[]', space=smem, size = 0x4, offset = 0x4, fixed_abs, tag = 'smem constant byte address 0x4 - core index']
  #allocation1 [shape = 'u32[144,128]{1,0:T(1,128)}', space=vmem, size = 0x12000, scoped, tag = 'internal scratch']
  %s0 = inlined_call_operand.vmem [shape: f32[512,128], index: 0, kind: input, shape index: {}]
  %s1 = inlined_call_operand.vmem [shape: f32[1,128], index: 1, kind: input, shape index: {}]
  %s2 = inlined_call_operand.vmem [shape: f32[1,128], index: 2, kind: input, shape index: {}]
  %s3 = inlined_call_operand.hbm [shape: f32[512,128], index: 3, kind: output, shape index: {}]
  %s4 = sld [smem:[#allocation0]]
  $region45: #{mynet_forward.11} parent=0
    _
  %s6 = ssub.s32 1, %s4
  %s7 = scalar_select 0, %s6, %s4
  $region1: #{mynet_forward.11} parent=0
    #allocation2 [shape = 'u8[131072]{0}', space=vmem, size = 0x20000, scoped, tag = 'output window, operand 0']
    #allocation3 [shape = 's32[2]{0}', space=sflag, size = 0x8, scoped, tag = 'scoped memory for mynet_forward.11']
    %8 = vsyncpa [#allocation3], 0
    %s9 = scalar_lea.sflag [#allocation3], 1
    %10 = vsyncpa %s9, 0
    loop: start=0, step=1, limit=6
    $region2: #{mynet_forward.11} parent=1 // loop_pre_header
      _
    $region3: #{mynet_forward.11} parent=1 // loop_header
      %s12 = sphi 0, %s16
      %p13 = scmp.ge.s32.totalorder %s12, 6
      %s22 = sphi 0, %s24
      %s25 = sphi 0, %s22
      %s26 = sphi 0, %s25
      %s42 = sphi 0, %s26
      %s46 = sphi 0, %s46
      %s48 = sphi 0, %s46
      %s49 = sphi 0, %s48
      %s63 = sphi 0, %s49
      %s67 = sphi 0, %s67
      %s69 = sphi 0, %s67
      %s70 = sphi 0, %s69
      %s84 = sphi 0, %s70
      %s90 = sphi 0, %s92
      %s93 = sphi 0, %s90
      %s94 = sphi 0, %s93
      %s110 = sphi 0, %s94
    $region4: #{mynet_forward.11} parent=1 // loop_header_branch
      %15 = sbr.rel (%p13) target = $region8
    $region5: #{mynet_forward.11} parent=1 // loop_body
      %s17 = ssub.s32 %s12, 1
      %s18 = ssub.s32 %s12, 2
      %s19 = sadd.s32 %s12, 1
      %s20 = ssub.s32 %s12, %s19
      %p21 = scmp.eq.s32.totalorder %s20, 0
      %s23 = sadd.s32 %s22, 1
      %s24 = scalar_select %p21, %s22, %s23
      %p27 = pneg %p21
      %p28 = scmp.eq.s32.totalorder %s12, 3
      %p29 = por %p27, %p28
      %p30 = scmp.ne.s32.totalorder %s22, %s25
      %p31 = scmp.eq.s32.totalorder %s12, 0
      %p32 = por %p30, %p31
      %p33 = scmp.ne.s32.totalorder %s22, %s25
      %p34 = scmp.eq.s32.totalorder %s17, 3
      %p35 = por %p33, %p34
      %p36 = scmp.ne.s32.totalorder %s25, %s26
      %p37 = scmp.eq.s32.totalorder %s17, 0
      %p38 = por %p36, %p37
      %p39 = scmp.ne.s32.totalorder %s25, %s26
      %p40 = scmp.eq.s32.totalorder %s18, 3
      %p41 = por %p39, %p40
      %p43 = scmp.ne.s32.totalorder %s26, %s42
      %p44 = scmp.eq.s32.totalorder %s18, 0
      %p45 = por %p43, %p44
      %s47 = sadd.s32 %s46, 1
      %p50 = scmp.eq.s32.totalorder %s12, 3
      %p51 = scmp.ne.s32.totalorder %s46, %s48
      %p52 = scmp.eq.s32.totalorder %s12, 0
      %p53 = por %p51, %p52
      %p54 = scmp.ne.s32.totalorder %s46, %s48
      %p55 = scmp.eq.s32.totalorder %s17, 3
      %p56 = por %p54, %p55
      %p57 = scmp.ne.s32.totalorder %s48, %s49
      %p58 = scmp.eq.s32.totalorder %s17, 0
      %p59 = por %p57, %p58
      %p60 = scmp.ne.s32.totalorder %s48, %s49
      %p61 = scmp.eq.s32.totalorder %s18, 3
      %p62 = por %p60, %p61
      %p64 = scmp.ne.s32.totalorder %s49, %s63
      %p65 = scmp.eq.s32.totalorder %s18, 0
      %p66 = por %p64, %p65
      %s68 = sadd.s32 %s67, 1
      %p71 = scmp.eq.s32.totalorder %s12, 3
      %p72 = scmp.ne.s32.totalorder %s67, %s69
      %p73 = scmp.eq.s32.totalorder %s12, 0
      %p74 = por %p72, %p73
      %p75 = scmp.ne.s32.totalorder %s67, %s69
      %p76 = scmp.eq.s32.totalorder %s17, 3
      %p77 = por %p75, %p76
      %p78 = scmp.ne.s32.totalorder %s69, %s70
      %p79 = scmp.eq.s32.totalorder %s17, 0
      %p80 = por %p78, %p79
      %p81 = scmp.ne.s32.totalorder %s69, %s70
      %p82 = scmp.eq.s32.totalorder %s18, 3
      %p83 = por %p81, %p82
      %p85 = scmp.ne.s32.totalorder %s70, %s84
      %p86 = scmp.eq.s32.totalorder %s18, 0
      %p87 = por %p85, %p86
      %s88 = ssub.s32 %s12, %s19
      %p89 = scmp.eq.s32.totalorder %s88, 0
      %s91 = sadd.s32 %s90, 1
      %s92 = scalar_select %p89, %s90, %s91
      %p95 = pneg %p89
      %p96 = scmp.eq.s32.totalorder %s12, 3
      %p97 = por %p95, %p96
      %p98 = scmp.ne.s32.totalorder %s90, %s93
      %p99 = scmp.eq.s32.totalorder %s12, 0
      %p100 = por %p98, %p99
      %p101 = scmp.ne.s32.totalorder %s90, %s93
      %p102 = scmp.eq.s32.totalorder %s17, 3
      %p103 = por %p101, %p102
      %p104 = scmp.ne.s32.totalorder %s93, %s94
      %p105 = scmp.eq.s32.totalorder %s17, 0
      %p106 = por %p104, %p105
      %p107 = scmp.ne.s32.totalorder %s93, %s94
      %p108 = scmp.eq.s32.totalorder %s18, 3
      %p109 = por %p107, %p108
      %p111 = scmp.ne.s32.totalorder %s94, %s110
      %p112 = scmp.eq.s32.totalorder %s18, 0
      %p113 = por %p111, %p112
      %p114 = scmp.le.s32.totalorder 1, %s12
      %p115 = scmp.lt.s32.totalorder %s12, 5
      %p116 = pnand %p114, %p115
      %p117 = pneg %p116
      // Predicated region
      $region9: #{mynet_forward.11} parent=5 // pred_check
        _
      $region10: #{mynet_forward.11} parent=5 // pred_check_branch
        %119 = sbr.rel (%p116) target = $region12
      $region11: #{mynet_forward.11} parent=5 // pred_region
        %s120 = ssub.s32 %s12, 1
        // Predicated region
        $region13: #{mynet_forward.11} parent=11 // pred_check
          %p121 = pneg %p59
        $region14: #{mynet_forward.11} parent=11 // pred_check_branch
          %123 = sbr.rel (%p121) target = $region16
        $region15: #{mynet_forward.11} parent=11 // pred_region
          _
        $region16: #{mynet_forward.11} parent=11 // pred_fallthru
          _
        // Predicated region
        $region17: #{mynet_forward.11} parent=11 // pred_check
          %p124 = pneg %p80
        $region18: #{mynet_forward.11} parent=11 // pred_check_branch
          %126 = sbr.rel (%p124) target = $region20
        $region19: #{mynet_forward.11} parent=11 // pred_region
          _
        $region20: #{mynet_forward.11} parent=11 // pred_fallthru
          _
      $region12: #{mynet_forward.11} parent=5 // pred_fallthru
        _
      %p127 = scmp.lt.s32.totalorder %s12, 4
      // Predicated region
      $region21: #{mynet_forward.11} parent=5 // pred_check
        %p128 = pneg %p127
      $region22: #{mynet_forward.11} parent=5 // pred_check_branch
        %130 = sbr.rel (%p128) target = $region24
      $region23: #{mynet_forward.11} parent=5 // pred_region
        // Predicated region
        $region25: #{mynet_forward.11} parent=23 // pred_check
          %p131 = pneg %p32
        $region26: #{mynet_forward.11} parent=23 // pred_check_branch
          %133 = sbr.rel (%p131) target = $region28
        $region27: #{mynet_forward.11} parent=23 // pred_region
          %s134 = smul.u32 16, %s12
          %p135 = scmp.lt.s32.totalorder %s134, 63
          %s136 = scalar_select %p135, %s134, 63
          %s137 = smul.addr %s136, 8
          %s138 = scalar_lea.vmem %s0, %s137
          %s139 = smul.u32 16, %s12
        $region28: #{mynet_forward.11} parent=23 // pred_fallthru
          _
      $region24: #{mynet_forward.11} parent=5 // pred_fallthru
        _
      %p140 = scmp.le.s32.totalorder 1, %s12
      %p141 = scmp.lt.s32.totalorder %s12, 5
      %p142 = pnand %p140, %p141
      %p143 = pneg %p142
      // Predicated region
      $region29: #{mynet_forward.11} parent=5 // pred_check
        _
      $region30: #{mynet_forward.11} parent=5 // pred_check_branch
        %145 = sbr.rel (%p142) target = $region32
      $region31: #{mynet_forward.11} parent=5 // pred_region
        %s146 = ssub.s32 %s12, 1
        %s147 = smul.u32 16, %s17
        %p148 = scmp.lt.s32.totalorder %s147, 63
        %s149 = scalar_select %p148, %s147, 63
        %s150 = smul.addr %s149, 8
        %s151 = scalar_lea.vmem %s0, %s150
        %p152 = pneg %p38
        %p153 = pneg %p35
        %p154 = pneg %p59
        %p155 = pneg %p56
        %p156 = pneg %p80
        %p157 = pneg %p77
        %p158 = pneg %p106
        %p159 = pneg %p103
        %s160 = sand.u32 %s93, 1
        %s161 = scalar_lea.sflag [#allocation3], %s160
        %s162 = sand.u32 %s93, 1
        %s163 = smul.addr %s162, 128
        %s164 = scalar_lea.vmem [#allocation2], %s163
        %s165 = smul.u32 16, %s17
        %p166 = scmp.lt.s32.totalorder %s165, 63
        %s167 = scalar_select %p166, %s165, 63
        %s168 = smul.addr %s167, 8
        %s169 = scalar_lea.vmem %s0, %s168
        %s170 = smul.u32 16, %s17
        %s171 = smul.u32 16, %s17
        %v172 = vld [vmem:[%s169] sm:$0xff]
        %v173 = vld [vmem:[%s169 + $0x8] sm:$0xff]
        %v174 = vld [vmem:[%s169 + $0x10] sm:$0xff]
        %v175 = vld [vmem:[%s169 + $0x18] sm:$0xff]
        %v176 = vld [vmem:[%s169 + $0x20] sm:$0xff]
        %v177 = vld [vmem:[%s169 + $0x28] sm:$0xff]
        %v178 = vld [vmem:[%s169 + $0x30] sm:$0xff]
        %v179 = vld [vmem:[%s169 + $0x38] sm:$0xff]
        %v180 = vld [vmem:[%s169 + $0x40] sm:$0xff]
        %v181 = vld [vmem:[%s169 + $0x48] sm:$0xff]
        %v182 = vld [vmem:[%s169 + $0x50] sm:$0xff]
        %v183 = vld [vmem:[%s169 + $0x58] sm:$0xff]
        %v184 = vld [vmem:[%s169 + $0x60] sm:$0xff]
        %v185 = vld [vmem:[%s169 + $0x68] sm:$0xff]
        %v186 = vld [vmem:[%s169 + $0x70] sm:$0xff]
        %v187 = vld [vmem:[%s169 + $0x78] sm:$0xff]
        %v188 = vld [vmem:[%s1] sm:$0x1]
        %v190 = vlaneseq
        %v191 = vshrl.u32 %v190, 7
        %v192 = vsub.s32 0, %v191
        %v193 = vrot.slane %v188, %v192
        %v195 = vmul.f32 %v172, %v193
        %v196 = vmul.f32 %v173, %v193
        %v197 = vmul.f32 %v174, %v193
        %v198 = vmul.f32 %v175, %v193
        %v199 = vmul.f32 %v176, %v193
        %v200 = vmul.f32 %v177, %v193
        %v201 = vmul.f32 %v178, %v193
        %v202 = vmul.f32 %v179, %v193
        %v203 = vmul.f32 %v180, %v193
        %v204 = vmul.f32 %v181, %v193
        %v205 = vmul.f32 %v182, %v193
        %v206 = vmul.f32 %v183, %v193
        %v207 = vmul.f32 %v184, %v193
        %v208 = vmul.f32 %v185, %v193
        %v209 = vmul.f32 %v186, %v193
        %v210 = vmul.f32 %v187, %v193
        %v211 = vld [vmem:[%s2] sm:$0x1]
        %v213 = vlaneseq
        %v214 = vshrl.u32 %v213, 7
        %v215 = vsub.s32 0, %v214
        %v216 = vrot.slane %v211, %v215
        %v218 = vadd.f32 %v195, %v216
        %v219 = vadd.f32 %v196, %v216
        %v220 = vadd.f32 %v197, %v216
        %v221 = vadd.f32 %v198, %v216
        %v222 = vadd.f32 %v199, %v216
        %v223 = vadd.f32 %v200, %v216
        %v224 = vadd.f32 %v201, %v216
        %v225 = vadd.f32 %v202, %v216
        %v226 = vadd.f32 %v203, %v216
        %v227 = vadd.f32 %v204, %v216
        %v228 = vadd.f32 %v205, %v216
        %v229 = vadd.f32 %v206, %v216
        %v230 = vadd.f32 %v207, %v216
        %v231 = vadd.f32 %v208, %v216
        %v232 = vadd.f32 %v209, %v216
        %v233 = vadd.f32 %v210, %v216
        %234 = vst [vmem:[%s164] sm:$0xff] %v218
        %235 = vst [vmem:[%s164 + $0x8] sm:$0xff] %v219
        %236 = vst [vmem:[%s164 + $0x10] sm:$0xff] %v220
        %237 = vst [vmem:[%s164 + $0x18] sm:$0xff] %v221
        %238 = vst [vmem:[%s164 + $0x20] sm:$0xff] %v222
        %239 = vst [vmem:[%s164 + $0x28] sm:$0xff] %v223
        %240 = vst [vmem:[%s164 + $0x30] sm:$0xff] %v224
        %241 = vst [vmem:[%s164 + $0x38] sm:$0xff] %v225
        %242 = vst [vmem:[%s164 + $0x40] sm:$0xff] %v226
        %243 = vst [vmem:[%s164 + $0x48] sm:$0xff] %v227
        %244 = vst [vmem:[%s164 + $0x50] sm:$0xff] %v228
        %245 = vst [vmem:[%s164 + $0x58] sm:$0xff] %v229
        %246 = vst [vmem:[%s164 + $0x60] sm:$0xff] %v230
        %247 = vst [vmem:[%s164 + $0x68] sm:$0xff] %v231
        %248 = vst [vmem:[%s164 + $0x70] sm:$0xff] %v232
        %249 = vst [vmem:[%s164 + $0x78] sm:$0xff] %v233
        %s250 = sand.u32 %s93, 1
        %s251 = scalar_lea.sflag [#allocation3], %s250
        %s252 = sand.u32 %s93, 1
        %s253 = smul.addr %s252, 128
        %s254 = scalar_lea.vmem [#allocation2], %s253
        // Predicated region
        $region33: #{mynet_forward.11} parent=31 // pred_check
          %p255 = pneg %p103
        $region34: #{mynet_forward.11} parent=31 // pred_check_branch
          %257 = sbr.rel (%p255) target = $region36
        $region35: #{mynet_forward.11} parent=31 // pred_region
          %s258 = smul.u32 16, %s17
          %s260 = ssub.s32 2048, 2048
          %261 = vsyncadd %s251, %s260
          %s262 = smul.addr %s258, 128
          %s263 = scalar_lea.hbm %s3, %s262
          %s264 = sshll.u32 %s254, 4
          %s265 = int_to_ptr.vmem [resolvable:$true] %s264
          %270 = dma.vmem_to_hbm [thread:$0]  %s265, 2048, %s263, %s251, 128, 128, 8
        $region36: #{mynet_forward.11} parent=31 // pred_fallthru
          _
      $region32: #{mynet_forward.11} parent=5 // pred_fallthru
        _
      %p271 = scmp.le.s32.totalorder 2, %s12
      // Predicated region
      $region37: #{mynet_forward.11} parent=5 // pred_check
        %p272 = pneg %p271
      $region38: #{mynet_forward.11} parent=5 // pred_check_branch
        %274 = sbr.rel (%p272) target = $region40
      $region39: #{mynet_forward.11} parent=5 // pred_region
        %s275 = ssub.s32 %s12, 2
        // Predicated region
        $region41: #{mynet_forward.11} parent=39 // pred_check
          %p276 = pneg %p109
        $region42: #{mynet_forward.11} parent=39 // pred_check_branch
          %278 = sbr.rel (%p276) target = $region44
        $region43: #{mynet_forward.11} parent=39 // pred_region
          %s279 = sand.u32 %s94, 1
          %s280 = scalar_lea.sflag [#allocation3], %s279
          %s281 = sand.u32 %s94, 1
          %s282 = smul.addr %s281, 128
          %s283 = scalar_lea.vmem [#allocation2], %s282
          %284 = dma.done %s280, 2048
        $region44: #{mynet_forward.11} parent=39 // pred_fallthru
          _
      $region40: #{mynet_forward.11} parent=5 // pred_fallthru
        _
    $region6: #{mynet_forward.11} parent=1 // loop_footer
      %s16 = sadd.s32 1, %s12
    $region7: #{mynet_forward.11} parent=1 // loop_footer_branch
      %11 = sbr.rel target = $region3
    $region8: #{mynet_forward.11} parent=1 // loop_exit
      _
    %285 = vsyncpa [#allocation3], 1
    %s286 = scalar_lea.sflag [#allocation3], 1
    %287 = vsyncpa %s286, 1

// kernel: mynet_forward.10
$region0: #{mynet_forward.10}
  #allocation0 [shape = 'u32[]', space=smem, size = 0x4, offset = 0x4, fixed_abs, tag = 'smem constant byte address 0x4 - core index']
  #allocation1 [shape = 'u32[144,128]{1,0:T(1,128)}', space=vmem, size = 0x12000, scoped, tag = 'internal scratch']
  %s0 = inlined_call_operand.vmem [shape: f32[512,128], index: 0, kind: input, shape index: {}]
  %s1 = inlined_call_operand.vmem [shape: f32[128,128], index: 1, kind: input, shape index: {}]
  %s2 = inlined_call_operand.vmem [shape: f32[512,128], index: 2, kind: output, shape index: {0}]
  %s3 = inlined_call_operand.vmem [shape: f32[4,2,128], index: 3, kind: output, shape index: {1}]
  %4 = xla_tuple %s2, %s3
  %s5 = sld [smem:[#allocation0]]
  $region49: #{mynet_forward.10} parent=0
    _
  %s7 = ssub.s32 1, %s5
  %s8 = scalar_select 0, %s7, %s5
  loop: start=0, step=1, limit=6
  $region2: #{mynet_forward.10} parent=0 // loop_pre_header
    _
  $region3: #{mynet_forward.10} parent=0 // loop_header
    %s10 = sphi 0, %s14
    %p11 = scmp.ge.s32.totalorder %s10, 6
    %s20 = sphi 0, %s22
    %s23 = sphi 0, %s20
    %s24 = sphi 0, %s23
    %s40 = sphi 0, %s24
    %s44 = sphi 0, %s44
    %s46 = sphi 0, %s44
    %s47 = sphi 0, %s46
    %s61 = sphi 0, %s47
    %s67 = sphi 0, %s69
    %s70 = sphi 0, %s67
    %s71 = sphi 0, %s70
    %s87 = sphi 0, %s71
    %s93 = sphi 0, %s95
    %s96 = sphi 0, %s93
    %s97 = sphi 0, %s96
    %s113 = sphi 0, %s97
  $region4: #{mynet_forward.10} parent=0 // loop_header_branch
    %13 = sbr.rel (%p11) target = $region8
  $region5: #{mynet_forward.10} parent=0 // loop_body
    %s15 = ssub.s32 %s10, 1
    %s16 = ssub.s32 %s10, 2
    %s17 = sadd.s32 %s10, 1
    %s18 = ssub.s32 %s10, %s17
    %p19 = scmp.eq.s32.totalorder %s18, 0
    %s21 = sadd.s32 %s20, 1
    %s22 = scalar_select %p19, %s20, %s21
    %p25 = pneg %p19
    %p26 = scmp.eq.s32.totalorder %s10, 3
    %p27 = por %p25, %p26
    %p28 = scmp.ne.s32.totalorder %s20, %s23
    %p29 = scmp.eq.s32.totalorder %s10, 0
    %p30 = por %p28, %p29
    %p31 = scmp.ne.s32.totalorder %s20, %s23
    %p32 = scmp.eq.s32.totalorder %s15, 3
    %p33 = por %p31, %p32
    %p34 = scmp.ne.s32.totalorder %s23, %s24
    %p35 = scmp.eq.s32.totalorder %s15, 0
    %p36 = por %p34, %p35
    %p37 = scmp.ne.s32.totalorder %s23, %s24
    %p38 = scmp.eq.s32.totalorder %s16, 3
    %p39 = por %p37, %p38
    %p41 = scmp.ne.s32.totalorder %s24, %s40
    %p42 = scmp.eq.s32.totalorder %s16, 0
    %p43 = por %p41, %p42
    %s45 = sadd.s32 %s44, 1
    %p48 = scmp.eq.s32.totalorder %s10, 3
    %p49 = scmp.ne.s32.totalorder %s44, %s46
    %p50 = scmp.eq.s32.totalorder %s10, 0
    %p51 = por %p49, %p50
    %p52 = scmp.ne.s32.totalorder %s44, %s46
    %p53 = scmp.eq.s32.totalorder %s15, 3
    %p54 = por %p52, %p53
    %p55 = scmp.ne.s32.totalorder %s46, %s47
    %p56 = scmp.eq.s32.totalorder %s15, 0
    %p57 = por %p55, %p56
    %p58 = scmp.ne.s32.totalorder %s46, %s47
    %p59 = scmp.eq.s32.totalorder %s16, 3
    %p60 = por %p58, %p59
    %p62 = scmp.ne.s32.totalorder %s47, %s61
    %p63 = scmp.eq.s32.totalorder %s16, 0
    %p64 = por %p62, %p63
    %s65 = ssub.s32 %s10, %s17
    %p66 = scmp.eq.s32.totalorder %s65, 0
    %s68 = sadd.s32 %s67, 1
    %s69 = scalar_select %p66, %s67, %s68
    %p72 = pneg %p66
    %p73 = scmp.eq.s32.totalorder %s10, 3
    %p74 = por %p72, %p73
    %p75 = scmp.ne.s32.totalorder %s67, %s70
    %p76 = scmp.eq.s32.totalorder %s10, 0
    %p77 = por %p75, %p76
    %p78 = scmp.ne.s32.totalorder %s67, %s70
    %p79 = scmp.eq.s32.totalorder %s15, 3
    %p80 = por %p78, %p79
    %p81 = scmp.ne.s32.totalorder %s70, %s71
    %p82 = scmp.eq.s32.totalorder %s15, 0
    %p83 = por %p81, %p82
    %p84 = scmp.ne.s32.totalorder %s70, %s71
    %p85 = scmp.eq.s32.totalorder %s16, 3
    %p86 = por %p84, %p85
    %p88 = scmp.ne.s32.totalorder %s71, %s87
    %p89 = scmp.eq.s32.totalorder %s16, 0
    %p90 = por %p88, %p89
    %s91 = ssub.s32 %s10, %s17
    %p92 = scmp.eq.s32.totalorder %s91, 0
    %s94 = sadd.s32 %s93, 1
    %s95 = scalar_select %p92, %s93, %s94
    %p98 = pneg %p92
    %p99 = scmp.eq.s32.totalorder %s10, 3
    %p100 = por %p98, %p99
    %p101 = scmp.ne.s32.totalorder %s93, %s96
    %p102 = scmp.eq.s32.totalorder %s10, 0
    %p103 = por %p101, %p102
    %p104 = scmp.ne.s32.totalorder %s93, %s96
    %p105 = scmp.eq.s32.totalorder %s15, 3
    %p106 = por %p104, %p105
    %p107 = scmp.ne.s32.totalorder %s96, %s97
    %p108 = scmp.eq.s32.totalorder %s15, 0
    %p109 = por %p107, %p108
    %p110 = scmp.ne.s32.totalorder %s96, %s97
    %p111 = scmp.eq.s32.totalorder %s16, 3
    %p112 = por %p110, %p111
    %p114 = scmp.ne.s32.totalorder %s97, %s113
    %p115 = scmp.eq.s32.totalorder %s16, 0
    %p116 = por %p114, %p115
    %p117 = scmp.le.s32.totalorder 1, %s10
    %p118 = scmp.lt.s32.totalorder %s10, 5
    %p119 = pnand %p117, %p118
    %p120 = pneg %p119
    // Predicated region
    $region9: #{mynet_forward.10} parent=5 // pred_check
      _
    $region10: #{mynet_forward.10} parent=5 // pred_check_branch
      %122 = sbr.rel (%p119) target = $region12
    $region11: #{mynet_forward.10} parent=5 // pred_region
      %s123 = ssub.s32 %s10, 1
      // Predicated region
      $region13: #{mynet_forward.10} parent=11 // pred_check
        %p124 = pneg %p57
      $region14: #{mynet_forward.10} parent=11 // pred_check_branch
        %126 = sbr.rel (%p124) target = $region16
      $region15: #{mynet_forward.10} parent=11 // pred_region
        _
      $region16: #{mynet_forward.10} parent=11 // pred_fallthru
        _
    $region12: #{mynet_forward.10} parent=5 // pred_fallthru
      _
    %p127 = scmp.lt.s32.totalorder %s10, 4
    // Predicated region
    $region17: #{mynet_forward.10} parent=5 // pred_check
      %p128 = pneg %p127
    $region18: #{mynet_forward.10} parent=5 // pred_check_branch
      %130 = sbr.rel (%p128) target = $region20
    $region19: #{mynet_forward.10} parent=5 // pred_region
      // Predicated region
      $region21: #{mynet_forward.10} parent=19 // pred_check
        %p131 = pneg %p30
      $region22: #{mynet_forward.10} parent=19 // pred_check_branch
        %133 = sbr.rel (%p131) target = $region24
      $region23: #{mynet_forward.10} parent=19 // pred_region
        %s134 = smul.u32 16, %s10
        %p135 = scmp.lt.s32.totalorder %s134, 63
        %s136 = scalar_select %p135, %s134, 63
        %s137 = smul.addr %s136, 8
        %s138 = scalar_lea.vmem %s0, %s137
        %s139 = smul.u32 16, %s10
      $region24: #{mynet_forward.10} parent=19 // pred_fallthru
        _
    $region20: #{mynet_forward.10} parent=5 // pred_fallthru
      _
    %p140 = scmp.le.s32.totalorder 1, %s10
    %p141 = scmp.lt.s32.totalorder %s10, 5
    %p142 = pnand %p140, %p141
    %p143 = pneg %p142
    // Predicated region
    $region25: #{mynet_forward.10} parent=5 // pred_check
      _
    $region26: #{mynet_forward.10} parent=5 // pred_check_branch
      %145 = sbr.rel (%p142) target = $region28
    $region27: #{mynet_forward.10} parent=5 // pred_region
      %s146 = ssub.s32 %s10, 1
      %s147 = smul.u32 16, %s15
      %p148 = scmp.lt.s32.totalorder %s147, 63
      %s149 = scalar_select %p148, %s147, 63
      %s150 = smul.addr %s149, 8
      %s151 = scalar_lea.vmem %s0, %s150
      %p152 = pneg %p36
      %p153 = pneg %p33
      %p154 = pneg %p57
      %p155 = pneg %p54
      %p156 = pneg %p83
      %p157 = pneg %p80
      %s158 = smul.u32 16, %s15
      %p159 = scmp.lt.s32.totalorder %s158, 63
      %s160 = scalar_select %p159, %s158, 63
      %s161 = smul.addr %s160, 8
      %s162 = scalar_lea.vmem %s2, %s161
      %p163 = pneg %p109
      %p164 = pneg %p106
      %p165 = scmp.lt.s32.totalorder %s15, 3
      %s166 = scalar_select %p165, %s15, 3
      %s167 = smul.addr %s166, 2
      %s168 = scalar_lea.vmem %s3, %s167
      %s169 = smul.u32 16, %s15
      %p170 = scmp.lt.s32.totalorder %s169, 63
      %s171 = scalar_select %p170, %s169, 63
      %s172 = smul.addr %s171, 8
      %s173 = scalar_lea.vmem %s0, %s172
      %s174 = smul.u32 16, %s15
      %s175 = smul.u32 16, %s15
      %p176 = scmp.lt.s32.totalorder %s175, 63
      %s177 = scalar_select %p176, %s175, 63
      %s178 = smul.addr %s177, 8
      %s179 = scalar_lea.vmem %s2, %s178
      %s180 = smul.u32 16, %s15
      %p181 = scmp.lt.s32.totalorder %s15, 3
      %s182 = scalar_select %p181, %s15, 3
      %s183 = smul.addr %s182, 2
      %s184 = scalar_lea.vmem %s3, %s183
      %v185 = vld [vmem:[%s173] sm:$0xff]
      %v186 = vld [vmem:[%s173 + $0x8] sm:$0xff]
      %v187 = vld [vmem:[%s173 + $0x10] sm:$0xff]
      %v188 = vld [vmem:[%s173 + $0x18] sm:$0xff]
      %v189 = vld [vmem:[%s173 + $0x20] sm:$0xff]
      %v190 = vld [vmem:[%s173 + $0x28] sm:$0xff]
      %v191 = vld [vmem:[%s173 + $0x30] sm:$0xff]
      %v192 = vld [vmem:[%s173 + $0x38] sm:$0xff]
      %v193 = vld [vmem:[%s173 + $0x40] sm:$0xff]
      %v194 = vld [vmem:[%s173 + $0x48] sm:$0xff]
      %v195 = vld [vmem:[%s173 + $0x50] sm:$0xff]
      %v196 = vld [vmem:[%s173 + $0x58] sm:$0xff]
      %v197 = vld [vmem:[%s173 + $0x60] sm:$0xff]
      %v198 = vld [vmem:[%s173 + $0x68] sm:$0xff]
      %v199 = vld [vmem:[%s173 + $0x70] sm:$0xff]
      %v200 = vld [vmem:[%s173 + $0x78] sm:$0xff]
      %v201 = vld [vmem:[%s1] sm:$0xff]
      %v202 = vld [vmem:[%s1 + $0x8] sm:$0xff]
      %v203 = vld [vmem:[%s1 + $0x10] sm:$0xff]
      %v204 = vld [vmem:[%s1 + $0x18] sm:$0xff]
      %v205 = vld [vmem:[%s1 + $0x20] sm:$0xff]
      %v206 = vld [vmem:[%s1 + $0x28] sm:$0xff]
      %v207 = vld [vmem:[%s1 + $0x30] sm:$0xff]
      %v208 = vld [vmem:[%s1 + $0x38] sm:$0xff]
      %v209 = vld [vmem:[%s1 + $0x40] sm:$0xff]
      %v210 = vld [vmem:[%s1 + $0x48] sm:$0xff]
      %v211 = vld [vmem:[%s1 + $0x50] sm:$0xff]
      %v212 = vld [vmem:[%s1 + $0x58] sm:$0xff]
      %v213 = vld [vmem:[%s1 + $0x60] sm:$0xff]
      %v214 = vld [vmem:[%s1 + $0x68] sm:$0xff]
      %v215 = vld [vmem:[%s1 + $0x70] sm:$0xff]
      %v216 = vld [vmem:[%s1 + $0x78] sm:$0xff]
      %217 = vmatprep.subr.mxu0 0.0
      %218 = vmatpush1.msra.mxu0 %v216
      %219 = vmatprep.subr.mxu0 0.0
      %220 = vmatpush1.msra.mxu0 %v215
      %221 = vmatprep.subr.mxu0 0.0
      %222 = vmatpush1.msra.mxu0 %v214
      %223 = vmatprep.subr.mxu0 0.0
      %224 = vmatpush1.msra.mxu0 %v213
      %225 = vmatprep.subr.mxu0 0.0
      %226 = vmatpush1.msra.mxu0 %v212
      %227 = vmatprep.subr.mxu0 0.0
      %228 = vmatpush1.msra.mxu0 %v211
      %229 = vmatprep.subr.mxu0 0.0
      %230 = vmatpush1.msra.mxu0 %v210
      %231 = vmatprep.subr.mxu0 0.0
      %232 = vmatpush1.msra.mxu0 %v209
      %233 = vmatprep.subr.mxu0 0.0
      %234 = vmatpush1.msra.mxu0 %v208
      %235 = vmatprep.subr.mxu0 0.0
      %236 = vmatpush1.msra.mxu0 %v207
      %237 = vmatprep.subr.mxu0 0.0
      %238 = vmatpush1.msra.mxu0 %v206
      %239 = vmatprep.subr.mxu0 0.0
      %240 = vmatpush1.msra.mxu0 %v205
      %241 = vmatprep.subr.mxu0 0.0
      %242 = vmatpush1.msra.mxu0 %v204
      %243 = vmatprep.subr.mxu0 0.0
      %244 = vmatpush1.msra.mxu0 %v203
      %245 = vmatprep.subr.mxu0 0.0
      %246 = vmatpush1.msra.mxu0 %v202
      %247 = vmatprep.subr.mxu0 0.0
      %248 = vmatpush1.msra.mxu0 %v201
      %249 = vmatprep.subr.mxu0 0.0
      %250 = vmatpush2.msra.mxu0 0.0
      %251 = vmatprep.subr.mxu0 0.0
      %252 = vmatpush2.msra.mxu0 0.0
      %253 = vmatprep.subr.mxu0 0.0
      %254 = vmatpush2.msra.mxu0 0.0
      %255 = vmatprep.subr.mxu0 0.0
      %256 = vmatpush2.msra.mxu0 0.0
      %257 = vmatprep.subr.mxu0 0.0
      %258 = vmatpush2.msra.mxu0 0.0
      %259 = vmatprep.subr.mxu0 0.0
      %260 = vmatpush2.msra.mxu0 0.0
      %261 = vmatprep.subr.mxu0 0.0
      %262 = vmatpush2.msra.mxu0 0.0
      %263 = vmatprep.subr.mxu0 0.0
      %264 = vmatpush2.msra.mxu0 0.0
      %265 = vmatprep.subr.mxu0 0.0
      %266 = vmatpush2.msra.mxu0 0.0
      %267 = vmatprep.subr.mxu0 0.0
      %268 = vmatpush2.msra.mxu0 0.0
      %269 = vmatprep.subr.mxu0 0.0
      %270 = vmatpush2.msra.mxu0 0.0
      %271 = vmatprep.subr.mxu0 0.0
      %272 = vmatpush2.msra.mxu0 0.0
      %273 = vmatprep.subr.mxu0 0.0
      %274 = vmatpush2.msra.mxu0 0.0
      %275 = vmatprep.subr.mxu0 0.0
      %276 = vmatpush2.msra.mxu0 0.0
      %277 = vmatprep.subr.mxu0 0.0
      %278 = vmatpush2.msra.mxu0 0.0
      %279 = vmatprep.subr.mxu0 0.0
      %280 = vmatpush2.msra.mxu0 0.0
      %281 = vmatprep.mubr.f32.mxu0 0.0
      %282 = vmatmul.mubr.f32.gmra.mxu0 %v185
      %v283 = vpop.f32.mrf.mxu0
      %v284 = vadd.f32 0.0, %v283
      %v285 = vpop.f32.mrf.mxu0
      %286 = vmatprep.mubr.f32.mxu0 0.0
      %287 = vmatmul.mubr.f32.gmra.mxu0 %v186
      %v288 = vpop.f32.mrf.mxu0
      %v289 = vadd.f32 0.0, %v288
      %v290 = vpop.f32.mrf.mxu0
      %291 = vmatprep.mubr.f32.mxu0 0.0
      %292 = vmatmul.mubr.f32.gmra.mxu0 %v187
      %v293 = vpop.f32.mrf.mxu0
      %v294 = vadd.f32 0.0, %v293
      %v295 = vpop.f32.mrf.mxu0
      %296 = vmatprep.mubr.f32.mxu0 0.0
      %297 = vmatmul.mubr.f32.gmra.mxu0 %v188
      %v298 = vpop.f32.mrf.mxu0
      %v299 = vadd.f32 0.0, %v298
      %v300 = vpop.f32.mrf.mxu0
      %301 = vmatprep.mubr.f32.mxu0 0.0
      %302 = vmatmul.mubr.f32.gmra.mxu0 %v189
      %v303 = vpop.f32.mrf.mxu0
      %v304 = vadd.f32 0.0, %v303
      %v305 = vpop.f32.mrf.mxu0
      %306 = vmatprep.mubr.f32.mxu0 0.0
      %307 = vmatmul.mubr.f32.gmra.mxu0 %v190
      %v308 = vpop.f32.mrf.mxu0
      %v309 = vadd.f32 0.0, %v308
      %v310 = vpop.f32.mrf.mxu0
      %311 = vmatprep.mubr.f32.mxu0 0.0
      %312 = vmatmul.mubr.f32.gmra.mxu0 %v191
      %v313 = vpop.f32.mrf.mxu0
      %v314 = vadd.f32 0.0, %v313
      %v315 = vpop.f32.mrf.mxu0
      %316 = vmatprep.mubr.f32.mxu0 0.0
      %317 = vmatmul.mubr.f32.gmra.mxu0 %v192
      %v318 = vpop.f32.mrf.mxu0
      %v319 = vadd.f32 0.0, %v318
      %v320 = vpop.f32.mrf.mxu0
      %321 = vmatprep.mubr.f32.mxu0 0.0
      %322 = vmatmul.mubr.f32.gmra.mxu0 %v193
      %v323 = vpop.f32.mrf.mxu0
      %v324 = vadd.f32 0.0, %v323
      %v325 = vpop.f32.mrf.mxu0
      %326 = vmatprep.mubr.f32.mxu0 0.0
      %327 = vmatmul.mubr.f32.gmra.mxu0 %v194
      %v328 = vpop.f32.mrf.mxu0
      %v329 = vadd.f32 0.0, %v328
      %v330 = vpop.f32.mrf.mxu0
      %331 = vmatprep.mubr.f32.mxu0 0.0
      %332 = vmatmul.mubr.f32.gmra.mxu0 %v195
      %v333 = vpop.f32.mrf.mxu0
      %v334 = vadd.f32 0.0, %v333
      %v335 = vpop.f32.mrf.mxu0
      %336 = vmatprep.mubr.f32.mxu0 0.0
      %337 = vmatmul.mubr.f32.gmra.mxu0 %v196
      %v338 = vpop.f32.mrf.mxu0
      %v339 = vadd.f32 0.0, %v338
      %v340 = vpop.f32.mrf.mxu0
      %341 = vmatprep.mubr.f32.mxu0 0.0
      %342 = vmatmul.mubr.f32.gmra.mxu0 %v197
      %v343 = vpop.f32.mrf.mxu0
      %v344 = vadd.f32 0.0, %v343
      %v345 = vpop.f32.mrf.mxu0
      %346 = vmatprep.mubr.f32.mxu0 0.0
      %347 = vmatmul.mubr.f32.gmra.mxu0 %v198
      %v348 = vpop.f32.mrf.mxu0
      %v349 = vadd.f32 0.0, %v348
      %v350 = vpop.f32.mrf.mxu0
      %351 = vmatprep.mubr.f32.mxu0 0.0
      %352 = vmatmul.mubr.f32.gmra.mxu0 %v199
      %v353 = vpop.f32.mrf.mxu0
      %v354 = vadd.f32 0.0, %v353
      %v355 = vpop.f32.mrf.mxu0
      %356 = vmatprep.mubr.f32.mxu0 0.0
      %357 = vmatmul.mubr.f32.gmra.mxu0 %v200
      %v358 = vpop.f32.mrf.mxu0
      %v359 = vadd.f32 0.0, %v358
      %v360 = vpop.f32.mrf.mxu0
      %361 = vdwg.mxu0
      %362 = vst [vmem:[%s179] sm:$0xff] %v284
      %363 = vst [vmem:[%s179 + $0x8] sm:$0xff] %v289
      %364 = vst [vmem:[%s179 + $0x10] sm:$0xff] %v294
      %365 = vst [vmem:[%s179 + $0x18] sm:$0xff] %v299
      %366 = vst [vmem:[%s179 + $0x20] sm:$0xff] %v304
      %367 = vst [vmem:[%s179 + $0x28] sm:$0xff] %v309
      %368 = vst [vmem:[%s179 + $0x30] sm:$0xff] %v314
      %369 = vst [vmem:[%s179 + $0x38] sm:$0xff] %v319
      %370 = vst [vmem:[%s179 + $0x40] sm:$0xff] %v324
      %371 = vst [vmem:[%s179 + $0x48] sm:$0xff] %v329
      %372 = vst [vmem:[%s179 + $0x50] sm:$0xff] %v334
      %373 = vst [vmem:[%s179 + $0x58] sm:$0xff] %v339
      %374 = vst [vmem:[%s179 + $0x60] sm:$0xff] %v344
      %375 = vst [vmem:[%s179 + $0x68] sm:$0xff] %v349
      %376 = vst [vmem:[%s179 + $0x70] sm:$0xff] %v354
      %377 = vst [vmem:[%s179 + $0x78] sm:$0xff] %v359
      %v378 = vadd.f32 %v284, %v289
      %v379 = vadd.f32 %v378, %v294
      %v380 = vadd.f32 %v379, %v299
      %v381 = vadd.f32 %v380, %v304
      %v382 = vadd.f32 %v381, %v309
      %v383 = vadd.f32 %v382, %v314
      %v384 = vadd.f32 %v383, %v319
      %v385 = vadd.f32 %v384, %v324
      %v386 = vadd.f32 %v385, %v329
      %v387 = vadd.f32 %v386, %v334
      %v388 = vadd.f32 %v387, %v339
      %v389 = vadd.f32 %v388, %v344
      %v390 = vadd.f32 %v389, %v349
      %v391 = vadd.f32 %v390, %v354
      %v392 = vadd.f32 %v391, %v359
      %v393 = vrot.slane %v392, 4
      %v394 = vadd.f32 %v392, %v393
      %v395 = vrot.slane %v394, 2
      %v396 = vadd.f32 %v394, %v395
      %v397 = vrot.slane %v396, 1
      %v398 = vadd.f32 %v396, %v397
      %v399 = vmul.f32 %v284, %v284
      %v400 = vmul.f32 %v289, %v289
      %v401 = vmul.f32 %v294, %v294
      %v402 = vmul.f32 %v299, %v299
      %v403 = vmul.f32 %v304, %v304
      %v404 = vmul.f32 %v309, %v309
      %v405 = vmul.f32 %v314, %v314
      %v406 = vmul.f32 %v319, %v319
      %v407 = vmul.f32 %v324, %v324
      %v408 = vmul.f32 %v329, %v329
      %v409 = vmul.f32 %v334, %v334
      %v410 = vmul.f32 %v339, %v339
      %v411 = vmul.f32 %v344, %v344
      %v412 = vmul.f32 %v349, %v349
      %v413 = vmul.f32 %v354, %v354
      %v414 = vmul.f32 %v359, %v359
      %v415 = vadd.f32 %v399, %v400
      %v416 = vadd.f32 %v415, %v401
      %v417 = vadd.f32 %v416, %v402
      %v418 = vadd.f32 %v417, %v403
      %v419 = vadd.f32 %v418, %v404
      %v420 = vadd.f32 %v419, %v405
      %v421 = vadd.f32 %v420, %v406
      %v422 = vadd.f32 %v421, %v407
      %v423 = vadd.f32 %v422, %v408
      %v424 = vadd.f32 %v423, %v409
      %v425 = vadd.f32 %v424, %v410
      %v426 = vadd.f32 %v425, %v411
      %v427 = vadd.f32 %v426, %v412
      %v428 = vadd.f32 %v427, %v413
      %v429 = vadd.f32 %v428, %v414
      %v430 = vrot.slane %v429, 4
      %v431 = vadd.f32 %v429, %v430
      %v432 = vrot.slane %v431, 2
      %v433 = vadd.f32 %v431, %v432
      %v434 = vrot.slane %v433, 1
      %v435 = vadd.f32 %v433, %v434
      %vm436 = vcmask 1040384
      %v437 = vsel %vm436, %v398, %v435
      %438 = vst [vmem:[%s184] sm:$0x3] %v437
      %s439 = smul.u32 16, %s15
      %p440 = scmp.lt.s32.totalorder %s439, 63
      %s441 = scalar_select %p440, %s439, 63
      %s442 = smul.addr %s441, 8
      %s443 = scalar_lea.vmem %s2, %s442
      %p444 = scmp.lt.s32.totalorder %s15, 3
      %s445 = scalar_select %p444, %s15, 3
      %s446 = smul.addr %s445, 2
      %s447 = scalar_lea.vmem %s3, %s446
      // Predicated region
      $region29: #{mynet_forward.10} parent=27 // pred_check
        %p448 = pneg %p80
      $region30: #{mynet_forward.10} parent=27 // pred_check_branch
        %450 = sbr.rel (%p448) target = $region32
      $region31: #{mynet_forward.10} parent=27 // pred_region
        %s451 = smul.u32 16, %s15
      $region32: #{mynet_forward.10} parent=27 // pred_fallthru
        _
      // Predicated region
      $region33: #{mynet_forward.10} parent=27 // pred_check
        %p452 = pneg %p106
      $region34: #{mynet_forward.10} parent=27 // pred_check_branch
        %454 = sbr.rel (%p452) target = $region36
      $region35: #{mynet_forward.10} parent=27 // pred_region
        _
      $region36: #{mynet_forward.10} parent=27 // pred_fallthru
        _
    $region28: #{mynet_forward.10} parent=5 // pred_fallthru
      _
    %p455 = scmp.le.s32.totalorder 2, %s10
    // Predicated region
    $region37: #{mynet_forward.10} parent=5 // pred_check
      %p456 = pneg %p455
    $region38: #{mynet_forward.10} parent=5 // pred_check_branch
      %458 = sbr.rel (%p456) target = $region40
    $region39: #{mynet_forward.10} parent=5 // pred_region
      %s459 = ssub.s32 %s10, 2
      // Predicated region
      $region41: #{mynet_forward.10} parent=39 // pred_check
        %p460 = pneg %p86
      $region42: #{mynet_forward.10} parent=39 // pred_check_branch
        %462 = sbr.rel (%p460) target = $region44
      $region43: #{mynet_forward.10} parent=39 // pred_region
        %s463 = smul.u32 16, %s16
        %p464 = scmp.lt.s32.totalorder %s463, 63
        %s465 = scalar_select %p464, %s463, 63
        %s466 = smul.addr %s465, 8
        %s467 = scalar_lea.vmem %s2, %s466
      $region44: #{mynet_forward.10} parent=39 // pred_fallthru
        _
      // Predicated region
      $region45: #{mynet_forward.10} parent=39 // pred_check
        %p468 = pneg %p112
      $region46: #{mynet_forward.10} parent=39 // pred_check_branch
        %470 = sbr.rel (%p468) target = $region48
      $region47: #{mynet_forward.10} parent=39 // pred_region
        %p471 = scmp.lt.s32.totalorder %s16, 3
        %s472 = scalar_select %p471, %s16, 3
        %s473 = smul.addr %s472, 2
        %s474 = scalar_lea.vmem %s3, %s473
      $region48: #{mynet_forward.10} parent=39 // pred_fallthru
        _
    $region40: #{mynet_forward.10} parent=5 // pred_fallthru
      _
  $region6: #{mynet_forward.10} parent=0 // loop_footer
    %s14 = sadd.s32 1, %s10
  $region7: #{mynet_forward.10} parent=0 // loop_footer_branch
    %9 = sbr.rel target = $region3
  $region8: #{mynet_forward.10} parent=0 // loop_exit
    _

// kernel: mynet_forward.8
$region0: #{mynet_forward.8}
  #allocation0 [shape = 'u32[]', space=smem, size = 0x4, offset = 0x4, fixed_abs, tag = 'smem constant byte address 0x4 - core index']
  #allocation1 [shape = 'u32[144,128]{1,0:T(1,128)}', space=vmem, size = 0x12000, scoped, tag = 'internal scratch']
  %s0 = inlined_call_operand.vmem [shape: f32[512,1152], index: 0, kind: input, shape index: {}]
  %s1 = inlined_call_operand.vmem [shape: f32[1152,128], index: 1, kind: input, shape index: {}]
  %s2 = inlined_call_operand.vmem [shape: f32[1,128], index: 2, kind: input, shape index: {}]
  %s3 = inlined_call_operand.vmem [shape: f32[512,128], index: 3, kind: output, shape index: {0}]
  %s4 = inlined_call_operand.vmem [shape: f32[4,2,128], index: 4, kind: output, shape index: {1}]
  %5 = xla_tuple %s3, %s4
  %s6 = sld [smem:[#allocation0]]
  $region53: #{mynet_forward.8} parent=0
    _
  %s8 = ssub.s32 1, %s6
  %s9 = scalar_select 0, %s8, %s6
  loop: start=0, step=1, limit=6
  $region2: #{mynet_forward.8} parent=0 // loop_pre_header
    _
  $region3: #{mynet_forward.8} parent=0 // loop_header
    %s11 = sphi 0, %s15
    %p12 = scmp.ge.s32.totalorder %s11, 6
    %s21 = sphi 0, %s23
    %s24 = sphi 0, %s21
    %s25 = sphi 0, %s24
    %s41 = sphi 0, %s25
    %s45 = sphi 0, %s45
    %s47 = sphi 0, %s45
    %s48 = sphi 0, %s47
    %s62 = sphi 0, %s48
    %s66 = sphi 0, %s66
    %s68 = sphi 0, %s66
    %s69 = sphi 0, %s68
    %s83 = sphi 0, %s69
    %s89 = sphi 0, %s91
    %s92 = sphi 0, %s89
    %s93 = sphi 0, %s92
    %s109 = sphi 0, %s93
    %s115 = sphi 0, %s117
    %s118 = sphi 0, %s115
    %s119 = sphi 0, %s118
    %s135 = sphi 0, %s119
  $region4: #{mynet_forward.8} parent=0 // loop_header_branch
    %14 = sbr.rel (%p12) target = $region8
  $region5: #{mynet_forward.8} parent=0 // loop_body
    %s16 = ssub.s32 %s11, 1
    %s17 = ssub.s32 %s11, 2
    %s18 = sadd.s32 %s11, 1
    %s19 = ssub.s32 %s11, %s18
    %p20 = scmp.eq.s32.totalorder %s19, 0
    %s22 = sadd.s32 %s21, 1
    %s23 = scalar_select %p20, %s21, %s22
    %p26 = pneg %p20
    %p27 = scmp.eq.s32.totalorder %s11, 3
    %p28 = por %p26, %p27
    %p29 = scmp.ne.s32.totalorder %s21, %s24
    %p30 = scmp.eq.s32.totalorder %s11, 0
    %p31 = por %p29, %p30
    %p32 = scmp.ne.s32.totalorder %s21, %s24
    %p33 = scmp.eq.s32.totalorder %s16, 3
    %p34 = por %p32, %p33
    %p35 = scmp.ne.s32.totalorder %s24, %s25
    %p36 = scmp.eq.s32.totalorder %s16, 0
    %p37 = por %p35, %p36
    %p38 = scmp.ne.s32.totalorder %s24, %s25
    %p39 = scmp.eq.s32.totalorder %s17, 3
    %p40 = por %p38, %p39
    %p42 = scmp.ne.s32.totalorder %s25, %s41
    %p43 = scmp.eq.s32.totalorder %s17, 0
    %p44 = por %p42, %p43
    %s46 = sadd.s32 %s45, 1
    %p49 = scmp.eq.s32.totalorder %s11, 3
    %p50 = scmp.ne.s32.totalorder %s45, %s47
    %p51 = scmp.eq.s32.totalorder %s11, 0
    %p52 = por %p50, %p51
    %p53 = scmp.ne.s32.totalorder %s45, %s47
    %p54 = scmp.eq.s32.totalorder %s16, 3
    %p55 = por %p53, %p54
    %p56 = scmp.ne.s32.totalorder %s47, %s48
    %p57 = scmp.eq.s32.totalorder %s16, 0
    %p58 = por %p56, %p57
    %p59 = scmp.ne.s32.totalorder %s47, %s48
    %p60 = scmp.eq.s32.totalorder %s17, 3
    %p61 = por %p59, %p60
    %p63 = scmp.ne.s32.totalorder %s48, %s62
    %p64 = scmp.eq.s32.totalorder %s17, 0
    %p65 = por %p63, %p64
    %s67 = sadd.s32 %s66, 1
    %p70 = scmp.eq.s32.totalorder %s11, 3
    %p71 = scmp.ne.s32.totalorder %s66, %s68
    %p72 = scmp.eq.s32.totalorder %s11, 0
    %p73 = por %p71, %p72
    %p74 = scmp.ne.s32.totalorder %s66, %s68
    %p75 = scmp.eq.s32.totalorder %s16, 3
    %p76 = por %p74, %p75
    %p77 = scmp.ne.s32.totalorder %s68, %s69
    %p78 = scmp.eq.s32.totalorder %s16, 0
    %p79 = por %p77, %p78
    %p80 = scmp.ne.s32.totalorder %s68, %s69
    %p81 = scmp.eq.s32.totalorder %s17, 3
    %p82 = por %p80, %p81
    %p84 = scmp.ne.s32.totalorder %s69, %s83
    %p85 = scmp.eq.s32.totalorder %s17, 0
    %p86 = por %p84, %p85
    %s87 = ssub.s32 %s11, %s18
    %p88 = scmp.eq.s32.totalorder %s87, 0
    %s90 = sadd.s32 %s89, 1
    %s91 = scalar_select %p88, %s89, %s90
    %p94 = pneg %p88
    %p95 = scmp.eq.s32.totalorder %s11, 3
    %p96 = por %p94, %p95
    %p97 = scmp.ne.s32.totalorder %s89, %s92
    %p98 = scmp.eq.s32.totalorder %s11, 0
    %p99 = por %p97, %p98
    %p100 = scmp.ne.s32.totalorder %s89, %s92
    %p101 = scmp.eq.s32.totalorder %s16, 3
    %p102 = por %p100, %p101
    %p103 = scmp.ne.s32.totalorder %s92, %s93
    %p104 = scmp.eq.s32.totalorder %s16, 0
    %p105 = por %p103, %p104
    %p106 = scmp.ne.s32.totalorder %s92, %s93
    %p107 = scmp.eq.s32.totalorder %s17, 3
    %p108 = por %p106, %p107
    %p110 = scmp.ne.s32.totalorder %s93, %s109
    %p111 = scmp.eq.s32.totalorder %s17, 0
    %p112 = por %p110, %p111
    %s113 = ssub.s32 %s11, %s18
    %p114 = scmp.eq.s32.totalorder %s113, 0
    %s116 = sadd.s32 %s115, 1
    %s117 = scalar_select %p114, %s115, %s116
    %p120 = pneg %p114
    %p121 = scmp.eq.s32.totalorder %s11, 3
    %p122 = por %p120, %p121
    %p123 = scmp.ne.s32.totalorder %s115, %s118
    %p124 = scmp.eq.s32.totalorder %s11, 0
    %p125 = por %p123, %p124
    %p126 = scmp.ne.s32.totalorder %s115, %s118
    %p127 = scmp.eq.s32.totalorder %s16, 3
    %p128 = por %p126, %p127
    %p129 = scmp.ne.s32.totalorder %s118, %s119
    %p130 = scmp.eq.s32.totalorder %s16, 0
    %p131 = por %p129, %p130
    %p132 = scmp.ne.s32.totalorder %s118, %s119
    %p133 = scmp.eq.s32.totalorder %s17, 3
    %p134 = por %p132, %p133
    %p136 = scmp.ne.s32.totalorder %s119, %s135
    %p137 = scmp.eq.s32.totalorder %s17, 0
    %p138 = por %p136, %p137
    %p139 = scmp.le.s32.totalorder 1, %s11
    %p140 = scmp.lt.s32.totalorder %s11, 5
    %p141 = pnand %p139, %p140
    %p142 = pneg %p141
    // Predicated region
    $region9: #{mynet_forward.8} parent=5 // pred_check
      _
    $region10: #{mynet_forward.8} parent=5 // pred_check_branch
      %144 = sbr.rel (%p141) target = $region12
    $region11: #{mynet_forward.8} parent=5 // pred_region
      %s145 = ssub.s32 %s11, 1
      // Predicated region
      $region13: #{mynet_forward.8} parent=11 // pred_check
        %p146 = pneg %p58
      $region14: #{mynet_forward.8} parent=11 // pred_check_branch
        %148 = sbr.rel (%p146) target = $region16
      $region15: #{mynet_forward.8} parent=11 // pred_region
        _
      $region16: #{mynet_forward.8} parent=11 // pred_fallthru
        _
      // Predicated region
      $region17: #{mynet_forward.8} parent=11 // pred_check
        %p149 = pneg %p79
      $region18: #{mynet_forward.8} parent=11 // pred_check_branch
        %151 = sbr.rel (%p149) target = $region20
      $region19: #{mynet_forward.8} parent=11 // pred_region
        _
      $region20: #{mynet_forward.8} parent=11 // pred_fallthru
        _
    $region12: #{mynet_forward.8} parent=5 // pred_fallthru
      _
    %p152 = scmp.lt.s32.totalorder %s11, 4
    // Predicated region
    $region21: #{mynet_forward.8} parent=5 // pred_check
      %p153 = pneg %p152
    $region22: #{mynet_forward.8} parent=5 // pred_check_branch
      %155 = sbr.rel (%p153) target = $region24
    $region23: #{mynet_forward.8} parent=5 // pred_region
      // Predicated region
      $region25: #{mynet_forward.8} parent=23 // pred_check
        %p156 = pneg %p31
      $region26: #{mynet_forward.8} parent=23 // pred_check_branch
        %158 = sbr.rel (%p156) target = $region28
      $region27: #{mynet_forward.8} parent=23 // pred_region
        %s159 = smul.u32 16, %s11
        %p160 = scmp.lt.s32.totalorder %s159, 63
        %s161 = scalar_select %p160, %s159, 63
        %s162 = smul.addr %s161, 9
        %s163 = smul.addr %s162, 8
        %s164 = scalar_lea.vmem %s0, %s163
        %s165 = smul.u32 16, %s11
      $region28: #{mynet_forward.8} parent=23 // pred_fallthru
        _
    $region24: #{mynet_forward.8} parent=5 // pred_fallthru
      _
    %p166 = scmp.le.s32.totalorder 1, %s11
    %p167 = scmp.lt.s32.totalorder %s11, 5
    %p168 = pnand %p166, %p167
    %p169 = pneg %p168
    // Predicated region
    $region29: #{mynet_forward.8} parent=5 // pred_check
      _
    $region30: #{mynet_forward.8} parent=5 // pred_check_branch
      %171 = sbr.rel (%p168) target = $region32
    $region31: #{mynet_forward.8} parent=5 // pred_region
      %s172 = ssub.s32 %s11, 1
      %s173 = smul.u32 16, %s16
      %p174 = scmp.lt.s32.totalorder %s173, 63
      %s175 = scalar_select %p174, %s173, 63
      %s176 = smul.addr %s175, 9
      %s177 = smul.addr %s176, 8
      %s178 = scalar_lea.vmem %s0, %s177
      %p179 = pneg %p37
      %p180 = pneg %p34
      %p181 = pneg %p58
      %p182 = pneg %p55
      %p183 = pneg %p79
      %p184 = pneg %p76
      %p185 = pneg %p105
      %p186 = pneg %p102
      %s187 = smul.u32 16, %s16
      %p188 = scmp.lt.s32.totalorder %s187, 63
      %s189 = scalar_select %p188, %s187, 63
      %s190 = smul.addr %s189, 8
      %s191 = scalar_lea.vmem %s3, %s190
      %p192 = pneg %p131
      %p193 = pneg %p128
      %p194 = scmp.lt.s32.totalorder %s16, 3
      %s195 = scalar_select %p194, %s16, 3
      %s196 = smul.addr %s195, 2
      %s197 = scalar_lea.vmem %s4, %s196
      %s198 = smul.u32 16, %s16
      %p199 = scmp.lt.s32.totalorder %s198, 63
      %s200 = scalar_select %p199, %s198, 63
      %s201 = smul.addr %s200, 9
      %s202 = smul.addr %s201, 8
      %s203 = scalar_lea.vmem %s0, %s202
      %s204 = smul.u32 16, %s16
      %s205 = smul.u32 16, %s16
      %p206 = scmp.lt.s32.totalorder %s205, 63
      %s207 = scalar_select %p206, %s205, 63
      %s208 = smul.addr %s207, 8
      %s209 = scalar_lea.vmem %s3, %s208
      %s210 = smul.u32 16, %s16
      %p211 = scmp.lt.s32.totalorder %s16, 3
      %s212 = scalar_select %p211, %s16, 3
      %s213 = smul.addr %s212, 2
      %s214 = scalar_lea.vmem %s4, %s213
      %v215 = vld [vmem:[%s203] sm:$0xff]
      %v216 = vld [vmem:[%s203 + $0x8] sm:$0xff]
      %v217 = vld [vmem:[%s203 + $0x10] sm:$0xff]
      %v218 = vld [vmem:[%s203 + $0x18] sm:$0xff]
      %v219 = vld [vmem:[%s203 + $0x20] sm:$0xff]
      %v220 = vld [vmem:[%s203 + $0x28] sm:$0xff]
      %v221 = vld [vmem:[%s203 + $0x30] sm:$0xff]
      %v222 = vld [vmem:[%s203 + $0x38] sm:$0xff]
      %v223 = vld [vmem:[%s203 + $0x40] sm:$0xff]
      %v224 = vld [vmem:[%s203 + $0x48] sm:$0xff]
      %v225 = vld [vmem:[%s203 + $0x50] sm:$0xff]
      %v226 = vld [vmem:[%s203 + $0x58] sm:$0xff]
      %v227 = vld [vmem:[%s203 + $0x60] sm:$0xff]
      %v228 = vld [vmem:[%s203 + $0x68] sm:$0xff]
      %v229 = vld [vmem:[%s203 + $0x70] sm:$0xff]
      %v230 = vld [vmem:[%s203 + $0x78] sm:$0xff]
      %v231 = vld [vmem:[%s203 + $0x80] sm:$0xff]
      %v232 = vld [vmem:[%s203 + $0x88] sm:$0xff]
      %v233 = vld [vmem:[%s203 + $0x90] sm:$0xff]
      %v234 = vld [vmem:[%s203 + $0x98] sm:$0xff]
      %v235 = vld [vmem:[%s203 + $0xa0] sm:$0xff]
      %v236 = vld [vmem:[%s203 + $0xa8] sm:$0xff]
      %v237 = vld [vmem:[%s203 + $0xb0] sm:$0xff]
      %v238 = vld [vmem:[%s203 + $0xb8] sm:$0xff]
      %v239 = vld [vmem:[%s203 + $0xc0] sm:$0xff]
      %v240 = vld [vmem:[%s203 + $0xc8] sm:$0xff]
      %v241 = vld [vmem:[%s203 + $0xd0] sm:$0xff]
      %v242 = vld [vmem:[%s203 + $0xd8] sm:$0xff]
      %v243 = vld [vmem:[%s203 + $0xe0] sm:$0xff]
      %v244 = vld [vmem:[%s203 + $0xe8] sm:$0xff]
      %v245 = vld [vmem:[%s203 + $0xf0] sm:$0xff]
      %v246 = vld [vmem:[%s203 + $0xf8] sm:$0xff]
      %v247 = vld [vmem:[%s203 + $0x100] sm:$0xff]
      %v248 = vld [vmem:[%s203 + $0x108] sm:$0xff]
      %v249 = vld [vmem:[%s203 + $0x110] sm:$0xff]
      %v250 = vld [vmem:[%s203 + $0x118] sm:$0xff]
      %v251 = vld [vmem:[%s203 + $0x120] sm:$0xff]
      %v252 = vld [vmem:[%s203 + $0x128] sm:$0xff]
      %v253 = vld [vmem:[%s203 + $0x130] sm:$0xff]
      %v254 = vld [vmem:[%s203 + $0x138] sm:$0xff]
      %v255 = vld [vmem:[%s203 + $0x140] sm:$0xff]
      %v256 = vld [vmem:[%s203 + $0x148] sm:$0xff]
      %v257 = vld [vmem:[%s203 + $0x150] sm:$0xff]
      %v258 = vld [vmem:[%s203 + $0x158] sm:$0xff]
      %v259 = vld [vmem:[%s203 + $0x160] sm:$0xff]
      %v260 = vld [vmem:[%s203 + $0x168] sm:$0xff]
      %v261 = vld [vmem:[%s203 + $0x170] sm:$0xff]
      %v262 = vld [vmem:[%s203 + $0x178] sm:$0xff]
      %v263 = vld [vmem:[%s203 + $0x180] sm:$0xff]
      %v264 = vld [vmem:[%s203 + $0x188] sm:$0xff]
      %v265 = vld [vmem:[%s203 + $0x190] sm:$0xff]
      %v266 = vld [vmem:[%s203 + $0x198] sm:$0xff]
      %v267 = vld [vmem:[%s203 + $0x1a0] sm:$0xff]
      %v268 = vld [vmem:[%s203 + $0x1a8] sm:$0xff]
      %v269 = vld [vmem:[%s203 + $0x1b0] sm:$0xff]
      %v270 = vld [vmem:[%s203 + $0x1b8] sm:$0xff]
      %v271 = vld [vmem:[%s203 + $0x1c0] sm:$0xff]
      %v272 = vld [vmem:[%s203 + $0x1c8] sm:$0xff]
      %v273 = vld [vmem:[%s203 + $0x1d0] sm:$0xff]
      %v274 = vld [vmem:[%s203 + $0x1d8] sm:$0xff]
      %v275 = vld [vmem:[%s203 + $0x1e0] sm:$0xff]
      %v276 = vld [vmem:[%s203 + $0x1e8] sm:$0xff]
      %v277 = vld [vmem:[%s203 + $0x1f0] sm:$0xff]
      %v278 = vld [vmem:[%s203 + $0x1f8] sm:$0xff]
      %v279 = vld [vmem:[%s203 + $0x200] sm:$0xff]
      %v280 = vld [vmem:[%s203 + $0x208] sm:$0xff]
      %v281 = vld [vmem:[%s203 + $0x210] sm:$0xff]
      %v282 = vld [vmem:[%s203 + $0x218] sm:$0xff]
      %v283 = vld [vmem:[%s203 + $0x220] sm:$0xff]
      %v284 = vld [vmem:[%s203 + $0x228] sm:$0xff]
      %v285 = vld [vmem:[%s203 + $0x230] sm:$0xff]
      %v286 = vld [vmem:[%s203 + $0x238] sm:$0xff]
      %v287 = vld [vmem:[%s203 + $0x240] sm:$0xff]
      %v288 = vld [vmem:[%s203 + $0x248] sm:$0xff]
      %v289 = vld [vmem:[%s203 + $0x250] sm:$0xff]
      %v290 = vld [vmem:[%s203 + $0x258] sm:$0xff]
      %v291 = vld [vmem:[%s203 + $0x260] sm:$0xff]
      %v292 = vld [vmem:[%s203 + $0x268] sm:$0xff]
      %v293 = vld [vmem:[%s203 + $0x270] sm:$0xff]
      %v294 = vld [vmem:[%s203 + $0x278] sm:$0xff]
      %v295 = vld [vmem:[%s203 + $0x280] sm:$0xff]
      %v296 = vld [vmem:[%s203 + $0x288] sm:$0xff]
      %v297 = vld [vmem:[%s203 + $0x290] sm:$0xff]
      %v298 = vld [vmem:[%s203 + $0x298] sm:$0xff]
      %v299 = vld [vmem:[%s203 + $0x2a0] sm:$0xff]
      %v300 = vld [vmem:[%s203 + $0x2a8] sm:$0xff]
      %v301 = vld [vmem:[%s203 + $0x2b0] sm:$0xff]
      %v302 = vld [vmem:[%s203 + $0x2b8] sm:$0xff]
      %v303 = vld [vmem:[%s203 + $0x2c0] sm:$0xff]
      %v304 = vld [vmem:[%s203 + $0x2c8] sm:$0xff]
      %v305 = vld [vmem:[%s203 + $0x2d0] sm:$0xff]
      %v306 = vld [vmem:[%s203 + $0x2d8] sm:$0xff]
      %v307 = vld [vmem:[%s203 + $0x2e0] sm:$0xff]
      %v308 = vld [vmem:[%s203 + $0x2e8] sm:$0xff]
      %v309 = vld [vmem:[%s203 + $0x2f0] sm:$0xff]
      %v310 = vld [vmem:[%s203 + $0x2f8] sm:$0xff]
      %v311 = vld [vmem:[%s203 + $0x300] sm:$0xff]
      %v312 = vld [vmem:[%s203 + $0x308] sm:$0xff]
      %v313 = vld [vmem:[%s203 + $0x310] sm:$0xff]
      %v314 = vld [vmem:[%s203 + $0x318] sm:$0xff]
      %v315 = vld [vmem:[%s203 + $0x320] sm:$0xff]
      %v316 = vld [vmem:[%s203 + $0x328] sm:$0xff]
      %v317 = vld [vmem:[%s203 + $0x330] sm:$0xff]
      %v318 = vld [vmem:[%s203 + $0x338] sm:$0xff]
      %v319 = vld [vmem:[%s203 + $0x340] sm:$0xff]
      %v320 = vld [vmem:[%s203 + $0x348] sm:$0xff]
      %v321 = vld [vmem:[%s203 + $0x350] sm:$0xff]
      %v322 = vld [vmem:[%s203 + $0x358] sm:$0xff]
      %v323 = vld [vmem:[%s203 + $0x360] sm:$0xff]
      %v324 = vld [vmem:[%s203 + $0x368] sm:$0xff]
      %v325 = vld [vmem:[%s203 + $0x370] sm:$0xff]
      %v326 = vld [vmem:[%s203 + $0x378] sm:$0xff]
      %v327 = vld [vmem:[%s203 + $0x380] sm:$0xff]
      %v328 = vld [vmem:[%s203 + $0x388] sm:$0xff]
      %v329 = vld [vmem:[%s203 + $0x390] sm:$0xff]
      %v330 = vld [vmem:[%s203 + $0x398] sm:$0xff]
      %v331 = vld [vmem:[%s203 + $0x3a0] sm:$0xff]
      %v332 = vld [vmem:[%s203 + $0x3a8] sm:$0xff]
      %v333 = vld [vmem:[%s203 + $0x3b0] sm:$0xff]
      %v334 = vld [vmem:[%s203 + $0x3b8] sm:$0xff]
      %v335 = vld [vmem:[%s203 + $0x3c0] sm:$0xff]
      %v336 = vld [vmem:[%s203 + $0x3c8] sm:$0xff]
      %v337 = vld [vmem:[%s203 + $0x3d0] sm:$0xff]
      %v338 = vld [vmem:[%s203 + $0x3d8] sm:$0xff]
      %v339 = vld [vmem:[%s203 + $0x3e0] sm:$0xff]
      %v340 = vld [vmem:[%s203 + $0x3e8] sm:$0xff]
      %v341 = vld [vmem:[%s203 + $0x3f0] sm:$0xff]
      %v342 = vld [vmem:[%s203 + $0x3f8] sm:$0xff]
      %v343 = vld [vmem:[%s203 + $0x400] sm:$0xff]
      %v344 = vld [vmem:[%s203 + $0x408] sm:$0xff]
      %v345 = vld [vmem:[%s203 + $0x410] sm:$0xff]
      %v346 = vld [vmem:[%s203 + $0x418] sm:$0xff]
      %v347 = vld [vmem:[%s203 + $0x420] sm:$0xff]
      %v348 = vld [vmem:[%s203 + $0x428] sm:$0xff]
      %v349 = vld [vmem:[%s203 + $0x430] sm:$0xff]
      %v350 = vld [vmem:[%s203 + $0x438] sm:$0xff]
      %v351 = vld [vmem:[%s203 + $0x440] sm:$0xff]
      %v352 = vld [vmem:[%s203 + $0x448] sm:$0xff]
      %v353 = vld [vmem:[%s203 + $0x450] sm:$0xff]
      %v354 = vld [vmem:[%s203 + $0x458] sm:$0xff]
      %v355 = vld [vmem:[%s203 + $0x460] sm:$0xff]
      %v356 = vld [vmem:[%s203 + $0x468] sm:$0xff]
      %v357 = vld [vmem:[%s203 + $0x470] sm:$0xff]
      %v358 = vld [vmem:[%s203 + $0x478] sm:$0xff]
      %v359 = vld [vmem:[%s1] sm:$0xff]
      %v360 = vld [vmem:[%s1 + $0x8] sm:$0xff]
      %v361 = vld [vmem:[%s1 + $0x10] sm:$0xff]
      %v362 = vld [vmem:[%s1 + $0x18] sm:$0xff]
      %v363 = vld [vmem:[%s1 + $0x20] sm:$0xff]
      %v364 = vld [vmem:[%s1 + $0x28] sm:$0xff]
      %v365 = vld [vmem:[%s1 + $0x30] sm:$0xff]
      %v366 = vld [vmem:[%s1 + $0x38] sm:$0xff]
      %v367 = vld [vmem:[%s1 + $0x40] sm:$0xff]
      %v368 = vld [vmem:[%s1 + $0x48] sm:$0xff]
      %v369 = vld [vmem:[%s1 + $0x50] sm:$0xff]
      %v370 = vld [vmem:[%s1 + $0x58] sm:$0xff]
      %v371 = vld [vmem:[%s1 + $0x60] sm:$0xff]
      %v372 = vld [vmem:[%s1 + $0x68] sm:$0xff]
      %v373 = vld [vmem:[%s1 + $0x70] sm:$0xff]
      %v374 = vld [vmem:[%s1 + $0x78] sm:$0xff]
      %v375 = vld [vmem:[%s1 + $0x80] sm:$0xff]
      %v376 = vld [vmem:[%s1 + $0x88] sm:$0xff]
      %v377 = vld [vmem:[%s1 + $0x90] sm:$0xff]
      %v378 = vld [vmem:[%s1 + $0x98] sm:$0xff]
      %v379 = vld [vmem:[%s1 + $0xa0] sm:$0xff]
      %v380 = vld [vmem:[%s1 + $0xa8] sm:$0xff]
      %v381 = vld [vmem:[%s1 + $0xb0] sm:$0xff]
      %v382 = vld [vmem:[%s1 + $0xb8] sm:$0xff]
      %v383 = vld [vmem:[%s1 + $0xc0] sm:$0xff]
      %v384 = vld [vmem:[%s1 + $0xc8] sm:$0xff]
      %v385 = vld [vmem:[%s1 + $0xd0] sm:$0xff]
      %v386 = vld [vmem:[%s1 + $0xd8] sm:$0xff]
      %v387 = vld [vmem:[%s1 + $0xe0] sm:$0xff]
      %v388 = vld [vmem:[%s1 + $0xe8] sm:$0xff]
      %v389 = vld [vmem:[%s1 + $0xf0] sm:$0xff]
      %v390 = vld [vmem:[%s1 + $0xf8] sm:$0xff]
      %v391 = vld [vmem:[%s1 + $0x100] sm:$0xff]
      %v392 = vld [vmem:[%s1 + $0x108] sm:$0xff]
      %v393 = vld [vmem:[%s1 + $0x110] sm:$0xff]
      %v394 = vld [vmem:[%s1 + $0x118] sm:$0xff]
      %v395 = vld [vmem:[%s1 + $0x120] sm:$0xff]
      %v396 = vld [vmem:[%s1 + $0x128] sm:$0xff]
      %v397 = vld [vmem:[%s1 + $0x130] sm:$0xff]
      %v398 = vld [vmem:[%s1 + $0x138] sm:$0xff]
      %v399 = vld [vmem:[%s1 + $0x140] sm:$0xff]
      %v400 = vld [vmem:[%s1 + $0x148] sm:$0xff]
      %v401 = vld [vmem:[%s1 + $0x150] sm:$0xff]
      %v402 = vld [vmem:[%s1 + $0x158] sm:$0xff]
      %v403 = vld [vmem:[%s1 + $0x160] sm:$0xff]
      %v404 = vld [vmem:[%s1 + $0x168] sm:$0xff]
      %v405 = vld [vmem:[%s1 + $0x170] sm:$0xff]
      %v406 = vld [vmem:[%s1 + $0x178] sm:$0xff]
      %v407 = vld [vmem:[%s1 + $0x180] sm:$0xff]
      %v408 = vld [vmem:[%s1 + $0x188] sm:$0xff]
      %v409 = vld [vmem:[%s1 + $0x190] sm:$0xff]
      %v410 = vld [vmem:[%s1 + $0x198] sm:$0xff]
      %v411 = vld [vmem:[%s1 + $0x1a0] sm:$0xff]
      %v412 = vld [vmem:[%s1 + $0x1a8] sm:$0xff]
      %v413 = vld [vmem:[%s1 + $0x1b0] sm:$0xff]
      %v414 = vld [vmem:[%s1 + $0x1b8] sm:$0xff]
      %v415 = vld [vmem:[%s1 + $0x1c0] sm:$0xff]
      %v416 = vld [vmem:[%s1 + $0x1c8] sm:$0xff]
      %v417 = vld [vmem:[%s1 + $0x1d0] sm:$0xff]
      %v418 = vld [vmem:[%s1 + $0x1d8] sm:$0xff]
      %v419 = vld [vmem:[%s1 + $0x1e0] sm:$0xff]
      %v420 = vld [vmem:[%s1 + $0x1e8] sm:$0xff]
      %v421 = vld [vmem:[%s1 + $0x1f0] sm:$0xff]
      %v422 = vld [vmem:[%s1 + $0x1f8] sm:$0xff]
      %v423 = vld [vmem:[%s1 + $0x200] sm:$0xff]
      %v424 = vld [vmem:[%s1 + $0x208] sm:$0xff]
      %v425 = vld [vmem:[%s1 + $0x210] sm:$0xff]
      %v426 = vld [vmem:[%s1 + $0x218] sm:$0xff]
      %v427 = vld [vmem:[%s1 + $0x220] sm:$0xff]
      %v428 = vld [vmem:[%s1 + $0x228] sm:$0xff]
      %v429 = vld [vmem:[%s1 + $0x230] sm:$0xff]
      %v430 = vld [vmem:[%s1 + $0x238] sm:$0xff]
      %v431 = vld [vmem:[%s1 + $0x240] sm:$0xff]
      %v432 = vld [vmem:[%s1 + $0x248] sm:$0xff]
      %v433 = vld [vmem:[%s1 + $0x250] sm:$0xff]
      %v434 = vld [vmem:[%s1 + $0x258] sm:$0xff]
      %v435 = vld [vmem:[%s1 + $0x260] sm:$0xff]
      %v436 = vld [vmem:[%s1 + $0x268] sm:$0xff]
      %v437 = vld [vmem:[%s1 + $0x270] sm:$0xff]
      %v438 = vld [vmem:[%s1 + $0x278] sm:$0xff]
      %v439 = vld [vmem:[%s1 + $0x280] sm:$0xff]
      %v440 = vld [vmem:[%s1 + $0x288] sm:$0xff]
      %v441 = vld [vmem:[%s1 + $0x290] sm:$0xff]
      %v442 = vld [vmem:[%s1 + $0x298] sm:$0xff]
      %v443 = vld [vmem:[%s1 + $0x2a0] sm:$0xff]
      %v444 = vld [vmem:[%s1 + $0x2a8] sm:$0xff]
      %v445 = vld [vmem:[%s1 + $0x2b0] sm:$0xff]
      %v446 = vld [vmem:[%s1 + $0x2b8] sm:$0xff]
      %v447 = vld [vmem:[%s1 + $0x2c0] sm:$0xff]
      %v448 = vld [vmem:[%s1 + $0x2c8] sm:$0xff]
      %v449 = vld [vmem:[%s1 + $0x2d0] sm:$0xff]
      %v450 = vld [vmem:[%s1 + $0x2d8] sm:$0xff]
      %v451 = vld [vmem:[%s1 + $0x2e0] sm:$0xff]
      %v452 = vld [vmem:[%s1 + $0x2e8] sm:$0xff]
      %v453 = vld [vmem:[%s1 + $0x2f0] sm:$0xff]
      %v454 = vld [vmem:[%s1 + $0x2f8] sm:$0xff]
      %v455 = vld [vmem:[%s1 + $0x300] sm:$0xff]
      %v456 = vld [vmem:[%s1 + $0x308] sm:$0xff]
      %v457 = vld [vmem:[%s1 + $0x310] sm:$0xff]
      %v458 = vld [vmem:[%s1 + $0x318] sm:$0xff]
      %v459 = vld [vmem:[%s1 + $0x320] sm:$0xff]
      %v460 = vld [vmem:[%s1 + $0x328] sm:$0xff]
      %v461 = vld [vmem:[%s1 + $0x330] sm:$0xff]
      %v462 = vld [vmem:[%s1 + $0x338] sm:$0xff]
      %v463 = vld [vmem:[%s1 + $0x340] sm:$0xff]
      %v464 = vld [vmem:[%s1 + $0x348] sm:$0xff]
      %v465 = vld [vmem:[%s1 + $0x350] sm:$0xff]
      %v466 = vld [vmem:[%s1 + $0x358] sm:$0xff]
      %v467 = vld [vmem:[%s1 + $0x360] sm:$0xff]
      %v468 = vld [vmem:[%s1 + $0x368] sm:$0xff]
      %v469 = vld [vmem:[%s1 + $0x370] sm:$0xff]
      %v470 = vld [vmem:[%s1 + $0x378] sm:$0xff]
      %v471 = vld [vmem:[%s1 + $0x380] sm:$0xff]
      %v472 = vld [vmem:[%s1 + $0x388] sm:$0xff]
      %v473 = vld [vmem:[%s1 + $0x390] sm:$0xff]
      %v474 = vld [vmem:[%s1 + $0x398] sm:$0xff]
      %v475 = vld [vmem:[%s1 + $0x3a0] sm:$0xff]
      %v476 = vld [vmem:[%s1 + $0x3a8] sm:$0xff]
      %v477 = vld [vmem:[%s1 + $0x3b0] sm:$0xff]
      %v478 = vld [vmem:[%s1 + $0x3b8] sm:$0xff]
      %v479 = vld [vmem:[%s1 + $0x3c0] sm:$0xff]
      %v480 = vld [vmem:[%s1 + $0x3c8] sm:$0xff]
      %v481 = vld [vmem:[%s1 + $0x3d0] sm:$0xff]
      %v482 = vld [vmem:[%s1 + $0x3d8] sm:$0xff]
      %v483 = vld [vmem:[%s1 + $0x3e0] sm:$0xff]
      %v484 = vld [vmem:[%s1 + $0x3e8] sm:$0xff]
      %v485 = vld [vmem:[%s1 + $0x3f0] sm:$0xff]
      %v486 = vld [vmem:[%s1 + $0x3f8] sm:$0xff]
      %v487 = vld [vmem:[%s1 + $0x400] sm:$0xff]
      %v488 = vld [vmem:[%s1 + $0x408] sm:$0xff]
      %v489 = vld [vmem:[%s1 + $0x410] sm:$0xff]
      %v490 = vld [vmem:[%s1 + $0x418] sm:$0xff]
      %v491 = vld [vmem:[%s1 + $0x420] sm:$0xff]
      %v492 = vld [vmem:[%s1 + $0x428] sm:$0xff]
      %v493 = vld [vmem:[%s1 + $0x430] sm:$0xff]
      %v494 = vld [vmem:[%s1 + $0x438] sm:$0xff]
      %v495 = vld [vmem:[%s1 + $0x440] sm:$0xff]
      %v496 = vld [vmem:[%s1 + $0x448] sm:$0xff]
      %v497 = vld [vmem:[%s1 + $0x450] sm:$0xff]
      %v498 = vld [vmem:[%s1 + $0x458] sm:$0xff]
      %v499 = vld [vmem:[%s1 + $0x460] sm:$0xff]
      %v500 = vld [vmem:[%s1 + $0x468] sm:$0xff]
      %v501 = vld [vmem:[%s1 + $0x470] sm:$0xff]
      %v502 = vld [vmem:[%s1 + $0x478] sm:$0xff]
      %v503 = vld [vmem:[%s2] sm:$0x1]
      %v505 = vlaneseq
      %v506 = vshrl.u32 %v505, 7
      %v507 = vsub.s32 0, %v506
      %v508 = vrot.slane %v503, %v507
      %510 = vmatprep.subr.mxu0 0.0
      %511 = vmatpush1.msra.mxu0 %v374
      %512 = vmatprep.subr.mxu0 0.0
      %513 = vmatpush1.msra.mxu0 %v373
      %514 = vmatprep.subr.mxu0 0.0
      %515 = vmatpush1.msra.mxu0 %v372
      %516 = vmatprep.subr.mxu0 0.0
      %517 = vmatpush1.msra.mxu0 %v371
      %518 = vmatprep.subr.mxu0 0.0
      %519 = vmatpush1.msra.mxu0 %v370
      %520 = vmatprep.subr.mxu0 0.0
      %521 = vmatpush1.msra.mxu0 %v369
      %522 = vmatprep.subr.mxu0 0.0
      %523 = vmatpush1.msra.mxu0 %v368
      %524 = vmatprep.subr.mxu0 0.0
      %525 = vmatpush1.msra.mxu0 %v367
      %526 = vmatprep.subr.mxu0 0.0
      %527 = vmatpush1.msra.mxu0 %v366
      %528 = vmatprep.subr.mxu0 0.0
      %529 = vmatpush1.msra.mxu0 %v365
      %530 = vmatprep.subr.mxu0 0.0
      %531 = vmatpush1.msra.mxu0 %v364
      %532 = vmatprep.subr.mxu0 0.0
      %533 = vmatpush1.msra.mxu0 %v363
      %534 = vmatprep.subr.mxu0 0.0
      %535 = vmatpush1.msra.mxu0 %v362
      %536 = vmatprep.subr.mxu0 0.0
      %537 = vmatpush1.msra.mxu0 %v361
      %538 = vmatprep.subr.mxu0 0.0
      %539 = vmatpush1.msra.mxu0 %v360
      %540 = vmatprep.subr.mxu0 0.0
      %541 = vmatpush1.msra.mxu0 %v359
      %542 = vmatprep.subr.mxu0 0.0
      %543 = vmatpush2.msra.mxu0 %v390
      %544 = vmatprep.subr.mxu0 0.0
      %545 = vmatpush2.msra.mxu0 %v389
      %546 = vmatprep.subr.mxu0 0.0
      %547 = vmatpush2.msra.mxu0 %v388
      %548 = vmatprep.subr.mxu0 0.0
      %549 = vmatpush2.msra.mxu0 %v387
      %550 = vmatprep.subr.mxu0 0.0
      %551 = vmatpush2.msra.mxu0 %v386
      %552 = vmatprep.subr.mxu0 0.0
      %553 = vmatpush2.msra.mxu0 %v385
      %554 = vmatprep.subr.mxu0 0.0
      %555 = vmatpush2.msra.mxu0 %v384
      %556 = vmatprep.subr.mxu0 0.0
      %557 = vmatpush2.msra.mxu0 %v383
      %558 = vmatprep.subr.mxu0 0.0
      %559 = vmatpush2.msra.mxu0 %v382
      %560 = vmatprep.subr.mxu0 0.0
      %561 = vmatpush2.msra.mxu0 %v381
      %562 = vmatprep.subr.mxu0 0.0
      %563 = vmatpush2.msra.mxu0 %v380
      %564 = vmatprep.subr.mxu0 0.0
      %565 = vmatpush2.msra.mxu0 %v379
      %566 = vmatprep.subr.mxu0 0.0
      %567 = vmatpush2.msra.mxu0 %v378
      %568 = vmatprep.subr.mxu0 0.0
      %569 = vmatpush2.msra.mxu0 %v377
      %570 = vmatprep.subr.mxu0 0.0
      %571 = vmatpush2.msra.mxu0 %v376
      %572 = vmatprep.subr.mxu0 0.0
      %573 = vmatpush2.msra.mxu0 %v375
      %574 = vmatprep.mubr.f32.mxu0 %v216
      %575 = vmatmul.mubr.f32.gmra.mxu0 %v215
      %v576 = vpop.f32.mrf.mxu0
      %v577 = vadd.f32 %v508, %v576
      %v578 = vpop.f32.mrf.mxu0
      %579 = vmatprep.mubr.f32.mxu0 %v225
      %580 = vmatmul.mubr.f32.gmra.mxu0 %v224
      %v581 = vpop.f32.mrf.mxu0
      %v582 = vadd.f32 %v508, %v581
      %v583 = vpop.f32.mrf.mxu0
      %584 = vmatprep.mubr.f32.mxu0 %v234
      %585 = vmatmul.mubr.f32.gmra.mxu0 %v233
      %v586 = vpop.f32.mrf.mxu0
      %v587 = vadd.f32 %v508, %v586
      %v588 = vpop.f32.mrf.mxu0
      %589 = vmatprep.mubr.f32.mxu0 %v243
      %590 = vmatmul.mubr.f32.gmra.mxu0 %v242
      %v591 = vpop.f32.mrf.mxu0
      %v592 = vadd.f32 %v508, %v591
      %v593 = vpop.f32.mrf.mxu0
      %594 = vmatprep.mubr.f32.mxu0 %v252
      %595 = vmatmul.mubr.f32.gmra.mxu0 %v251
      %v596 = vpop.f32.mrf.mxu0
      %v597 = vadd.f32 %v508, %v596
      %v598 = vpop.f32.mrf.mxu0
      %599 = vmatprep.mubr.f32.mxu0 %v261
      %600 = vmatmul.mubr.f32.gmra.mxu0 %v260
      %v601 = vpop.f32.mrf.mxu0
      %v602 = vadd.f32 %v508, %v601
      %v603 = vpop.f32.mrf.mxu0
      %604 = vmatprep.mubr.f32.mxu0 %v270
      %605 = vmatmul.mubr.f32.gmra.mxu0 %v269
      %v606 = vpop.f32.mrf.mxu0
      %v607 = vadd.f32 %v508, %v606
      %v608 = vpop.f32.mrf.mxu0
      %609 = vmatprep.mubr.f32.mxu0 %v279
      %610 = vmatmul.mubr.f32.gmra.mxu0 %v278
      %v611 = vpop.f32.mrf.mxu0
      %v612 = vadd.f32 %v508, %v611
      %v613 = vpop.f32.mrf.mxu0
      %614 = vmatprep.mubr.f32.mxu0 %v288
      %615 = vmatmul.mubr.f32.gmra.mxu0 %v287
      %v616 = vpop.f32.mrf.mxu0
      %v617 = vadd.f32 %v508, %v616
      %v618 = vpop.f32.mrf.mxu0
      %619 = vmatprep.mubr.f32.mxu0 %v297
      %620 = vmatmul.mubr.f32.gmra.mxu0 %v296
      %v621 = vpop.f32.mrf.mxu0
      %v622 = vadd.f32 %v508, %v621
      %v623 = vpop.f32.mrf.mxu0
      %624 = vmatprep.mubr.f32.mxu0 %v306
      %625 = vmatmul.mubr.f32.gmra.mxu0 %v305
      %v626 = vpop.f32.mrf.mxu0
      %v627 = vadd.f32 %v508, %v626
      %v628 = vpop.f32.mrf.mxu0
      %629 = vmatprep.mubr.f32.mxu0 %v315
      %630 = vmatmul.mubr.f32.gmra.mxu0 %v314
      %v631 = vpop.f32.mrf.mxu0
      %v632 = vadd.f32 %v508, %v631
      %v633 = vpop.f32.mrf.mxu0
      %634 = vmatprep.mubr.f32.mxu0 %v324
      %635 = vmatmul.mubr.f32.gmra.mxu0 %v323
      %v636 = vpop.f32.mrf.mxu0
      %v637 = vadd.f32 %v508, %v636
      %v638 = vpop.f32.mrf.mxu0
      %639 = vmatprep.mubr.f32.mxu0 %v333
      %640 = vmatmul.mubr.f32.gmra.mxu0 %v332
      %v641 = vpop.f32.mrf.mxu0
      %v642 = vadd.f32 %v508, %v641
      %v643 = vpop.f32.mrf.mxu0
      %644 = vmatprep.mubr.f32.mxu0 %v342
      %645 = vmatmul.mubr.f32.gmra.mxu0 %v341
      %v646 = vpop.f32.mrf.mxu0
      %v647 = vadd.f32 %v508, %v646
      %v648 = vpop.f32.mrf.mxu0
      %649 = vmatprep.mubr.f32.mxu0 %v351
      %650 = vmatmul.mubr.f32.gmra.mxu0 %v350
      %v651 = vpop.f32.mrf.mxu0
      %v652 = vadd.f32 %v508, %v651
      %v653 = vpop.f32.mrf.mxu0
      %654 = vdwg.mxu0
      %655 = vmatprep.subr.mxu0 0.0
      %656 = vmatpush1.msra.mxu0 %v406
      %657 = vmatprep.subr.mxu0 0.0
      %658 = vmatpush1.msra.mxu0 %v405
      %659 = vmatprep.subr.mxu0 0.0
      %660 = vmatpush1.msra.mxu0 %v404
      %661 = vmatprep.subr.mxu0 0.0
      %662 = vmatpush1.msra.mxu0 %v403
      %663 = vmatprep.subr.mxu0 0.0
      %664 = vmatpush1.msra.mxu0 %v402
      %665 = vmatprep.subr.mxu0 0.0
      %666 = vmatpush1.msra.mxu0 %v401
      %667 = vmatprep.subr.mxu0 0.0
      %668 = vmatpush1.msra.mxu0 %v400
      %669 = vmatprep.subr.mxu0 0.0
      %670 = vmatpush1.msra.mxu0 %v399
      %671 = vmatprep.subr.mxu0 0.0
      %672 = vmatpush1.msra.mxu0 %v398
      %673 = vmatprep.subr.mxu0 0.0
      %674 = vmatpush1.msra.mxu0 %v397
      %675 = vmatprep.subr.mxu0 0.0
      %676 = vmatpush1.msra.mxu0 %v396
      %677 = vmatprep.subr.mxu0 0.0
      %678 = vmatpush1.msra.mxu0 %v395
      %679 = vmatprep.subr.mxu0 0.0
      %680 = vmatpush1.msra.mxu0 %v394
      %681 = vmatprep.subr.mxu0 0.0
      %682 = vmatpush1.msra.mxu0 %v393
      %683 = vmatprep.subr.mxu0 0.0
      %684 = vmatpush1.msra.mxu0 %v392
      %685 = vmatprep.subr.mxu0 0.0
      %686 = vmatpush1.msra.mxu0 %v391
      %687 = vmatprep.subr.mxu0 0.0
      %688 = vmatpush2.msra.mxu0 %v422
      %689 = vmatprep.subr.mxu0 0.0
      %690 = vmatpush2.msra.mxu0 %v421
      %691 = vmatprep.subr.mxu0 0.0
      %692 = vmatpush2.msra.mxu0 %v420
      %693 = vmatprep.subr.mxu0 0.0
      %694 = vmatpush2.msra.mxu0 %v419
      %695 = vmatprep.subr.mxu0 0.0
      %696 = vmatpush2.msra.mxu0 %v418
      %697 = vmatprep.subr.mxu0 0.0
      %698 = vmatpush2.msra.mxu0 %v417
      %699 = vmatprep.subr.mxu0 0.0
      %700 = vmatpush2.msra.mxu0 %v416
      %701 = vmatprep.subr.mxu0 0.0
      %702 = vmatpush2.msra.mxu0 %v415
      %703 = vmatprep.subr.mxu0 0.0
      %704 = vmatpush2.msra.mxu0 %v414
      %705 = vmatprep.subr.mxu0 0.0
      %706 = vmatpush2.msra.mxu0 %v413
      %707 = vmatprep.subr.mxu0 0.0
      %708 = vmatpush2.msra.mxu0 %v412
      %709 = vmatprep.subr.mxu0 0.0
      %710 = vmatpush2.msra.mxu0 %v411
      %711 = vmatprep.subr.mxu0 0.0
      %712 = vmatpush2.msra.mxu0 %v410
      %713 = vmatprep.subr.mxu0 0.0
      %714 = vmatpush2.msra.mxu0 %v409
      %715 = vmatprep.subr.mxu0 0.0
      %716 = vmatpush2.msra.mxu0 %v408
      %717 = vmatprep.subr.mxu0 0.0
      %718 = vmatpush2.msra.mxu0 %v407
      %719 = vmatprep.mubr.f32.mxu0 %v218
      %720 = vmatmul.mubr.f32.gmra.mxu0 %v217
      %v721 = vpop.f32.mrf.mxu0
      %v722 = vadd.f32 %v577, %v721
      %v723 = vpop.f32.mrf.mxu0
      %724 = vmatprep.mubr.f32.mxu0 %v227
      %725 = vmatmul.mubr.f32.gmra.mxu0 %v226
      %v726 = vpop.f32.mrf.mxu0
      %v727 = vadd.f32 %v582, %v726
      %v728 = vpop.f32.mrf.mxu0
      %729 = vmatprep.mubr.f32.mxu0 %v236
      %730 = vmatmul.mubr.f32.gmra.mxu0 %v235
      %v731 = vpop.f32.mrf.mxu0
      %v732 = vadd.f32 %v587, %v731
      %v733 = vpop.f32.mrf.mxu0
      %734 = vmatprep.mubr.f32.mxu0 %v245
      %735 = vmatmul.mubr.f32.gmra.mxu0 %v244
      %v736 = vpop.f32.mrf.mxu0
      %v737 = vadd.f32 %v592, %v736
      %v738 = vpop.f32.mrf.mxu0
      %739 = vmatprep.mubr.f32.mxu0 %v254
      %740 = vmatmul.mubr.f32.gmra.mxu0 %v253
      %v741 = vpop.f32.mrf.mxu0
      %v742 = vadd.f32 %v597, %v741
      %v743 = vpop.f32.mrf.mxu0
      %744 = vmatprep.mubr.f32.mxu0 %v263
      %745 = vmatmul.mubr.f32.gmra.mxu0 %v262
      %v746 = vpop.f32.mrf.mxu0
      %v747 = vadd.f32 %v602, %v746
      %v748 = vpop.f32.mrf.mxu0
      %749 = vmatprep.mubr.f32.mxu0 %v272
      %750 = vmatmul.mubr.f32.gmra.mxu0 %v271
      %v751 = vpop.f32.mrf.mxu0
      %v752 = vadd.f32 %v607, %v751
      %v753 = vpop.f32.mrf.mxu0
      %754 = vmatprep.mubr.f32.mxu0 %v281
      %755 = vmatmul.mubr.f32.gmra.mxu0 %v280
      %v756 = vpop.f32.mrf.mxu0
      %v757 = vadd.f32 %v612, %v756
      %v758 = vpop.f32.mrf.mxu0
      %759 = vmatprep.mubr.f32.mxu0 %v290
      %760 = vmatmul.mubr.f32.gmra.mxu0 %v289
      %v761 = vpop.f32.mrf.mxu0
      %v762 = vadd.f32 %v617, %v761
      %v763 = vpop.f32.mrf.mxu0
      %764 = vmatprep.mubr.f32.mxu0 %v299
      %765 = vmatmul.mubr.f32.gmra.mxu0 %v298
      %v766 = vpop.f32.mrf.mxu0
      %v767 = vadd.f32 %v622, %v766
      %v768 = vpop.f32.mrf.mxu0
      %769 = vmatprep.mubr.f32.mxu0 %v308
      %770 = vmatmul.mubr.f32.gmra.mxu0 %v307
      %v771 = vpop.f32.mrf.mxu0
      %v772 = vadd.f32 %v627, %v771
      %v773 = vpop.f32.mrf.mxu0
      %774 = vmatprep.mubr.f32.mxu0 %v317
      %775 = vmatmul.mubr.f32.gmra.mxu0 %v316
      %v776 = vpop.f32.mrf.mxu0
      %v777 = vadd.f32 %v632, %v776
      %v778 = vpop.f32.mrf.mxu0
      %779 = vmatprep.mubr.f32.mxu0 %v326
      %780 = vmatmul.mubr.f32.gmra.mxu0 %v325
      %v781 = vpop.f32.mrf.mxu0
      %v782 = vadd.f32 %v637, %v781
      %v783 = vpop.f32.mrf.mxu0
      %784 = vmatprep.mubr.f32.mxu0 %v335
      %785 = vmatmul.mubr.f32.gmra.mxu0 %v334
      %v786 = vpop.f32.mrf.mxu0
      %v787 = vadd.f32 %v642, %v786
      %v788 = vpop.f32.mrf.mxu0
      %789 = vmatprep.mubr.f32.mxu0 %v344
      %790 = vmatmul.mubr.f32.gmra.mxu0 %v343
      %v791 = vpop.f32.mrf.mxu0
      %v792 = vadd.f32 %v647, %v791
      %v793 = vpop.f32.mrf.mxu0
      %794 = vmatprep.mubr.f32.mxu0 %v353
      %795 = vmatmul.mubr.f32.gmra.mxu0 %v352
      %v796 = vpop.f32.mrf.mxu0
      %v797 = vadd.f32 %v652, %v796
      %v798 = vpop.f32.mrf.mxu0
      %799 = vdwg.mxu0
      %800 = vmatprep.subr.mxu0 0.0
      %801 = vmatpush1.msra.mxu0 %v438
      %802 = vmatprep.subr.mxu0 0.0
      %803 = vmatpush1.msra.mxu0 %v437
      %804 = vmatprep.subr.mxu0 0.0
      %805 = vmatpush1.msra.mxu0 %v436
      %806 = vmatprep.subr.mxu0 0.0
      %807 = vmatpush1.msra.mxu0 %v435
      %808 = vmatprep.subr.mxu0 0.0
      %809 = vmatpush1.msra.mxu0 %v434
      %810 = vmatprep.subr.mxu0 0.0
      %811 = vmatpush1.msra.mxu0 %v433
      %812 = vmatprep.subr.mxu0 0.0
      %813 = vmatpush1.msra.mxu0 %v432
      %814 = vmatprep.subr.mxu0 0.0
      %815 = vmatpush1.msra.mxu0 %v431
      %816 = vmatprep.subr.mxu0 0.0
      %817 = vmatpush1.msra.mxu0 %v430
      %818 = vmatprep.subr.mxu0 0.0
      %819 = vmatpush1.msra.mxu0 %v429
      %820 = vmatprep.subr.mxu0 0.0
      %821 = vmatpush1.msra.mxu0 %v428
      %822 = vmatprep.subr.mxu0 0.0
      %823 = vmatpush1.msra.mxu0 %v427
      %824 = vmatprep.subr.mxu0 0.0
      %825 = vmatpush1.msra.mxu0 %v426
      %826 = vmatprep.subr.mxu0 0.0
      %827 = vmatpush1.msra.mxu0 %v425
      %828 = vmatprep.subr.mxu0 0.0
      %829 = vmatpush1.msra.mxu0 %v424
      %830 = vmatprep.subr.mxu0 0.0
      %831 = vmatpush1.msra.mxu0 %v423
      %832 = vmatprep.subr.mxu0 0.0
      %833 = vmatpush2.msra.mxu0 %v454
      %834 = vmatprep.subr.mxu0 0.0
      %835 = vmatpush2.msra.mxu0 %v453
      %836 = vmatprep.subr.mxu0 0.0
      %837 = vmatpush2.msra.mxu0 %v452
      %838 = vmatprep.subr.mxu0 0.0
      %839 = vmatpush2.msra.mxu0 %v451
      %840 = vmatprep.subr.mxu0 0.0
      %841 = vmatpush2.msra.mxu0 %v450
      %842 = vmatprep.subr.mxu0 0.0
      %843 = vmatpush2.msra.mxu0 %v449
      %844 = vmatprep.subr.mxu0 0.0
      %845 = vmatpush2.msra.mxu0 %v448
      %846 = vmatprep.subr.mxu0 0.0
      %847 = vmatpush2.msra.mxu0 %v447
      %848 = vmatprep.subr.mxu0 0.0
      %849 = vmatpush2.msra.mxu0 %v446
      %850 = vmatprep.subr.mxu0 0.0
      %851 = vmatpush2.msra.mxu0 %v445
      %852 = vmatprep.subr.mxu0 0.0
      %853 = vmatpush2.msra.mxu0 %v444
      %854 = vmatprep.subr.mxu0 0.0
      %855 = vmatpush2.msra.mxu0 %v443
      %856 = vmatprep.subr.mxu0 0.0
      %857 = vmatpush2.msra.mxu0 %v442
      %858 = vmatprep.subr.mxu0 0.0
      %859 = vmatpush2.msra.mxu0 %v441
      %860 = vmatprep.subr.mxu0 0.0
      %861 = vmatpush2.msra.mxu0 %v440
      %862 = vmatprep.subr.mxu0 0.0
      %863 = vmatpush2.msra.mxu0 %v439
      %864 = vmatprep.mubr.f32.mxu0 %v220
      %865 = vmatmul.mubr.f32.gmra.mxu0 %v219
      %v866 = vpop.f32.mrf.mxu0
      %v867 = vadd.f32 %v722, %v866
      %v868 = vpop.f32.mrf.mxu0
      %869 = vmatprep.mubr.f32.mxu0 %v229
      %870 = vmatmul.mubr.f32.gmra.mxu0 %v228
      %v871 = vpop.f32.mrf.mxu0
      %v872 = vadd.f32 %v727, %v871
      %v873 = vpop.f32.mrf.mxu0
      %874 = vmatprep.mubr.f32.mxu0 %v238
      %875 = vmatmul.mubr.f32.gmra.mxu0 %v237
      %v876 = vpop.f32.mrf.mxu0
      %v877 = vadd.f32 %v732, %v876
      %v878 = vpop.f32.mrf.mxu0
      %879 = vmatprep.mubr.f32.mxu0 %v247
      %880 = vmatmul.mubr.f32.gmra.mxu0 %v246
      %v881 = vpop.f32.mrf.mxu0
      %v882 = vadd.f32 %v737, %v881
      %v883 = vpop.f32.mrf.mxu0
      %884 = vmatprep.mubr.f32.mxu0 %v256
      %885 = vmatmul.mubr.f32.gmra.mxu0 %v255
      %v886 = vpop.f32.mrf.mxu0
      %v887 = vadd.f32 %v742, %v886
      %v888 = vpop.f32.mrf.mxu0
      %889 = vmatprep.mubr.f32.mxu0 %v265
      %890 = vmatmul.mubr.f32.gmra.mxu0 %v264
      %v891 = vpop.f32.mrf.mxu0
      %v892 = vadd.f32 %v747, %v891
      %v893 = vpop.f32.mrf.mxu0
      %894 = vmatprep.mubr.f32.mxu0 %v274
      %895 = vmatmul.mubr.f32.gmra.mxu0 %v273
      %v896 = vpop.f32.mrf.mxu0
      %v897 = vadd.f32 %v752, %v896
      %v898 = vpop.f32.mrf.mxu0
      %899 = vmatprep.mubr.f32.mxu0 %v283
      %900 = vmatmul.mubr.f32.gmra.mxu0 %v282
      %v901 = vpop.f32.mrf.mxu0
      %v902 = vadd.f32 %v757, %v901
      %v903 = vpop.f32.mrf.mxu0
      %904 = vmatprep.mubr.f32.mxu0 %v292
      %905 = vmatmul.mubr.f32.gmra.mxu0 %v291
      %v906 = vpop.f32.mrf.mxu0
      %v907 = vadd.f32 %v762, %v906
      %v908 = vpop.f32.mrf.mxu0
      %909 = vmatprep.mubr.f32.mxu0 %v301
      %910 = vmatmul.mubr.f32.gmra.mxu0 %v300
      %v911 = vpop.f32.mrf.mxu0
      %v912 = vadd.f32 %v767, %v911
      %v913 = vpop.f32.mrf.mxu0
      %914 = vmatprep.mubr.f32.mxu0 %v310
      %915 = vmatmul.mubr.f32.gmra.mxu0 %v309
      %v916 = vpop.f32.mrf.mxu0
      %v917 = vadd.f32 %v772, %v916
      %v918 = vpop.f32.mrf.mxu0
      %919 = vmatprep.mubr.f32.mxu0 %v319
      %920 = vmatmul.mubr.f32.gmra.mxu0 %v318
      %v921 = vpop.f32.mrf.mxu0
      %v922 = vadd.f32 %v777, %v921
      %v923 = vpop.f32.mrf.mxu0
      %924 = vmatprep.mubr.f32.mxu0 %v328
      %925 = vmatmul.mubr.f32.gmra.mxu0 %v327
      %v926 = vpop.f32.mrf.mxu0
      %v927 = vadd.f32 %v782, %v926
      %v928 = vpop.f32.mrf.mxu0
      %929 = vmatprep.mubr.f32.mxu0 %v337
      %930 = vmatmul.mubr.f32.gmra.mxu0 %v336
      %v931 = vpop.f32.mrf.mxu0
      %v932 = vadd.f32 %v787, %v931
      %v933 = vpop.f32.mrf.mxu0
      %934 = vmatprep.mubr.f32.mxu0 %v346
      %935 = vmatmul.mubr.f32.gmra.mxu0 %v345
      %v936 = vpop.f32.mrf.mxu0
      %v937 = vadd.f32 %v792, %v936
      %v938 = vpop.f32.mrf.mxu0
      %939 = vmatprep.mubr.f32.mxu0 %v355
      %940 = vmatmul.mubr.f32.gmra.mxu0 %v354
      %v941 = vpop.f32.mrf.mxu0
      %v942 = vadd.f32 %v797, %v941
      %v943 = vpop.f32.mrf.mxu0
      %944 = vdwg.mxu0
      %945 = vmatprep.subr.mxu0 0.0
      %946 = vmatpush1.msra.mxu0 %v470
      %947 = vmatprep.subr.mxu0 0.0
      %948 = vmatpush1.msra.mxu0 %v469
      %949 = vmatprep.subr.mxu0 0.0
      %950 = vmatpush1.msra.mxu0 %v468
      %951 = vmatprep.subr.mxu0 0.0
      %952 = vmatpush1.msra.mxu0 %v467
      %953 = vmatprep.subr.mxu0 0.0
      %954 = vmatpush1.msra.mxu0 %v466
      %955 = vmatprep.subr.mxu0 0.0
      %956 = vmatpush1.msra.mxu0 %v465
      %957 = vmatprep.subr.mxu0 0.0
      %958 = vmatpush1.msra.mxu0 %v464
      %959 = vmatprep.subr.mxu0 0.0
      %960 = vmatpush1.msra.mxu0 %v463
      %961 = vmatprep.subr.mxu0 0.0
      %962 = vmatpush1.msra.mxu0 %v462
      %963 = vmatprep.subr.mxu0 0.0
      %964 = vmatpush1.msra.mxu0 %v461
      %965 = vmatprep.subr.mxu0 0.0
      %966 = vmatpush1.msra.mxu0 %v460
      %967 = vmatprep.subr.mxu0 0.0
      %968 = vmatpush1.msra.mxu0 %v459
      %969 = vmatprep.subr.mxu0 0.0
      %970 = vmatpush1.msra.mxu0 %v458
      %971 = vmatprep.subr.mxu0 0.0
      %972 = vmatpush1.msra.mxu0 %v457
      %973 = vmatprep.subr.mxu0 0.0
      %974 = vmatpush1.msra.mxu0 %v456
      %975 = vmatprep.subr.mxu0 0.0
      %976 = vmatpush1.msra.mxu0 %v455
      %977 = vmatprep.subr.mxu0 0.0
      %978 = vmatpush2.msra.mxu0 %v486
      %979 = vmatprep.subr.mxu0 0.0
      %980 = vmatpush2.msra.mxu0 %v485
      %981 = vmatprep.subr.mxu0 0.0
      %982 = vmatpush2.msra.mxu0 %v484
      %983 = vmatprep.subr.mxu0 0.0
      %984 = vmatpush2.msra.mxu0 %v483
      %985 = vmatprep.subr.mxu0 0.0
      %986 = vmatpush2.msra.mxu0 %v482
      %987 = vmatprep.subr.mxu0 0.0
      %988 = vmatpush2.msra.mxu0 %v481
      %989 = vmatprep.subr.mxu0 0.0
      %990 = vmatpush2.msra.mxu0 %v480
      %991 = vmatprep.subr.mxu0 0.0
      %992 = vmatpush2.msra.mxu0 %v479
      %993 = vmatprep.subr.mxu0 0.0
      %994 = vmatpush2.msra.mxu0 %v478
      %995 = vmatprep.subr.mxu0 0.0
      %996 = vmatpush2.msra.mxu0 %v477
      %997 = vmatprep.subr.mxu0 0.0
      %998 = vmatpush2.msra.mxu0 %v476
      %999 = vmatprep.subr.mxu0 0.0
      %1000 = vmatpush2.msra.mxu0 %v475
      %1001 = vmatprep.subr.mxu0 0.0
      %1002 = vmatpush2.msra.mxu0 %v474
      %1003 = vmatprep.subr.mxu0 0.0
      %1004 = vmatpush2.msra.mxu0 %v473
      %1005 = vmatprep.subr.mxu0 0.0
      %1006 = vmatpush2.msra.mxu0 %v472
      %1007 = vmatprep.subr.mxu0 0.0
      %1008 = vmatpush2.msra.mxu0 %v471
      %1009 = vmatprep.mubr.f32.mxu0 %v222
      %1010 = vmatmul.mubr.f32.gmra.mxu0 %v221
      %v1011 = vpop.f32.mrf.mxu0
      %v1012 = vadd.f32 %v867, %v1011
      %v1013 = vpop.f32.mrf.mxu0
      %1014 = vmatprep.mubr.f32.mxu0 %v231
      %1015 = vmatmul.mubr.f32.gmra.mxu0 %v230
      %v1016 = vpop.f32.mrf.mxu0
      %v1017 = vadd.f32 %v872, %v1016
      %v1018 = vpop.f32.mrf.mxu0
      %1019 = vmatprep.mubr.f32.mxu0 %v240
      %1020 = vmatmul.mubr.f32.gmra.mxu0 %v239
      %v1021 = vpop.f32.mrf.mxu0
      %v1022 = vadd.f32 %v877, %v1021
      %v1023 = vpop.f32.mrf.mxu0
      %1024 = vmatprep.mubr.f32.mxu0 %v249
      %1025 = vmatmul.mubr.f32.gmra.mxu0 %v248
      %v1026 = vpop.f32.mrf.mxu0
      %v1027 = vadd.f32 %v882, %v1026
      %v1028 = vpop.f32.mrf.mxu0
      %1029 = vmatprep.mubr.f32.mxu0 %v258
      %1030 = vmatmul.mubr.f32.gmra.mxu0 %v257
      %v1031 = vpop.f32.mrf.mxu0
      %v1032 = vadd.f32 %v887, %v1031
      %v1033 = vpop.f32.mrf.mxu0
      %1034 = vmatprep.mubr.f32.mxu0 %v267
      %1035 = vmatmul.mubr.f32.gmra.mxu0 %v266
      %v1036 = vpop.f32.mrf.mxu0
      %v1037 = vadd.f32 %v892, %v1036
      %v1038 = vpop.f32.mrf.mxu0
      %1039 = vmatprep.mubr.f32.mxu0 %v276
      %1040 = vmatmul.mubr.f32.gmra.mxu0 %v275
      %v1041 = vpop.f32.mrf.mxu0
      %v1042 = vadd.f32 %v897, %v1041
      %v1043 = vpop.f32.mrf.mxu0
      %1044 = vmatprep.mubr.f32.mxu0 %v285
      %1045 = vmatmul.mubr.f32.gmra.mxu0 %v284
      %v1046 = vpop.f32.mrf.mxu0
      %v1047 = vadd.f32 %v902, %v1046
      %v1048 = vpop.f32.mrf.mxu0
      %1049 = vmatprep.mubr.f32.mxu0 %v294
      %1050 = vmatmul.mubr.f32.gmra.mxu0 %v293
      %v1051 = vpop.f32.mrf.mxu0
      %v1052 = vadd.f32 %v907, %v1051
      %v1053 = vpop.f32.mrf.mxu0
      %1054 = vmatprep.mubr.f32.mxu0 %v303
      %1055 = vmatmul.mubr.f32.gmra.mxu0 %v302
      %v1056 = vpop.f32.mrf.mxu0
      %v1057 = vadd.f32 %v912, %v1056
      %v1058 = vpop.f32.mrf.mxu0
      %1059 = vmatprep.mubr.f32.mxu0 %v312
      %1060 = vmatmul.mubr.f32.gmra.mxu0 %v311
      %v1061 = vpop.f32.mrf.mxu0
      %v1062 = vadd.f32 %v917, %v1061
      %v1063 = vpop.f32.mrf.mxu0
      %1064 = vmatprep.mubr.f32.mxu0 %v321
      %1065 = vmatmul.mubr.f32.gmra.mxu0 %v320
      %v1066 = vpop.f32.mrf.mxu0
      %v1067 = vadd.f32 %v922, %v1066
      %v1068 = vpop.f32.mrf.mxu0
      %1069 = vmatprep.mubr.f32.mxu0 %v330
      %1070 = vmatmul.mubr.f32.gmra.mxu0 %v329
      %v1071 = vpop.f32.mrf.mxu0
      %v1072 = vadd.f32 %v927, %v1071
      %v1073 = vpop.f32.mrf.mxu0
      %1074 = vmatprep.mubr.f32.mxu0 %v339
      %1075 = vmatmul.mubr.f32.gmra.mxu0 %v338
      %v1076 = vpop.f32.mrf.mxu0
      %v1077 = vadd.f32 %v932, %v1076
      %v1078 = vpop.f32.mrf.mxu0
      %1079 = vmatprep.mubr.f32.mxu0 %v348
      %1080 = vmatmul.mubr.f32.gmra.mxu0 %v347
      %v1081 = vpop.f32.mrf.mxu0
      %v1082 = vadd.f32 %v937, %v1081
      %v1083 = vpop.f32.mrf.mxu0
      %1084 = vmatprep.mubr.f32.mxu0 %v357
      %1085 = vmatmul.mubr.f32.gmra.mxu0 %v356
      %v1086 = vpop.f32.mrf.mxu0
      %v1087 = vadd.f32 %v942, %v1086
      %v1088 = vpop.f32.mrf.mxu0
      %1089 = vdwg.mxu0
      %1090 = vmatprep.subr.mxu0 0.0
      %1091 = vmatpush1.msra.mxu0 %v502
      %1092 = vmatprep.subr.mxu0 0.0
      %1093 = vmatpush1.msra.mxu0 %v501
      %1094 = vmatprep.subr.mxu0 0.0
      %1095 = vmatpush1.msra.mxu0 %v500
      %1096 = vmatprep.subr.mxu0 0.0
      %1097 = vmatpush1.msra.mxu0 %v499
      %1098 = vmatprep.subr.mxu0 0.0
      %1099 = vmatpush1.msra.mxu0 %v498
      %1100 = vmatprep.subr.mxu0 0.0
      %1101 = vmatpush1.msra.mxu0 %v497
      %1102 = vmatprep.subr.mxu0 0.0
      %1103 = vmatpush1.msra.mxu0 %v496
      %1104 = vmatprep.subr.mxu0 0.0
      %1105 = vmatpush1.msra.mxu0 %v495
      %1106 = vmatprep.subr.mxu0 0.0
      %1107 = vmatpush1.msra.mxu0 %v494
      %1108 = vmatprep.subr.mxu0 0.0
      %1109 = vmatpush1.msra.mxu0 %v493
      %1110 = vmatprep.subr.mxu0 0.0
      %1111 = vmatpush1.msra.mxu0 %v492
      %1112 = vmatprep.subr.mxu0 0.0
      %1113 = vmatpush1.msra.mxu0 %v491
      %1114 = vmatprep.subr.mxu0 0.0
      %1115 = vmatpush1.msra.mxu0 %v490
      %1116 = vmatprep.subr.mxu0 0.0
      %1117 = vmatpush1.msra.mxu0 %v489
      %1118 = vmatprep.subr.mxu0 0.0
      %1119 = vmatpush1.msra.mxu0 %v488
      %1120 = vmatprep.subr.mxu0 0.0
      %1121 = vmatpush1.msra.mxu0 %v487
      %1122 = vmatprep.subr.mxu0 0.0
      %1123 = vmatpush2.msra.mxu0 0.0
      %1124 = vmatprep.subr.mxu0 0.0
      %1125 = vmatpush2.msra.mxu0 0.0
      %1126 = vmatprep.subr.mxu0 0.0
      %1127 = vmatpush2.msra.mxu0 0.0
      %1128 = vmatprep.subr.mxu0 0.0
      %1129 = vmatpush2.msra.mxu0 0.0
      %1130 = vmatprep.subr.mxu0 0.0
      %1131 = vmatpush2.msra.mxu0 0.0
      %1132 = vmatprep.subr.mxu0 0.0
      %1133 = vmatpush2.msra.mxu0 0.0
      %1134 = vmatprep.subr.mxu0 0.0
      %1135 = vmatpush2.msra.mxu0 0.0
      %1136 = vmatprep.subr.mxu0 0.0
      %1137 = vmatpush2.msra.mxu0 0.0
      %1138 = vmatprep.subr.mxu0 0.0
      %1139 = vmatpush2.msra.mxu0 0.0
      %1140 = vmatprep.subr.mxu0 0.0
      %1141 = vmatpush2.msra.mxu0 0.0
      %1142 = vmatprep.subr.mxu0 0.0
      %1143 = vmatpush2.msra.mxu0 0.0
      %1144 = vmatprep.subr.mxu0 0.0
      %1145 = vmatpush2.msra.mxu0 0.0
      %1146 = vmatprep.subr.mxu0 0.0
      %1147 = vmatpush2.msra.mxu0 0.0
      %1148 = vmatprep.subr.mxu0 0.0
      %1149 = vmatpush2.msra.mxu0 0.0
      %1150 = vmatprep.subr.mxu0 0.0
      %1151 = vmatpush2.msra.mxu0 0.0
      %1152 = vmatprep.subr.mxu0 0.0
      %1153 = vmatpush2.msra.mxu0 0.0
      %1154 = vmatprep.mubr.f32.mxu0 0.0
      %1155 = vmatmul.mubr.f32.gmra.mxu0 %v223
      %v1156 = vpop.f32.mrf.mxu0
      %v1157 = vadd.f32 %v1012, %v1156
      %v1158 = vpop.f32.mrf.mxu0
      %1159 = vmatprep.mubr.f32.mxu0 0.0
      %1160 = vmatmul.mubr.f32.gmra.mxu0 %v232
      %v1161 = vpop.f32.mrf.mxu0
      %v1162 = vadd.f32 %v1017, %v1161
      %v1163 = vpop.f32.mrf.mxu0
      %1164 = vmatprep.mubr.f32.mxu0 0.0
      %1165 = vmatmul.mubr.f32.gmra.mxu0 %v241
      %v1166 = vpop.f32.mrf.mxu0
      %v1167 = vadd.f32 %v1022, %v1166
      %v1168 = vpop.f32.mrf.mxu0
      %1169 = vmatprep.mubr.f32.mxu0 0.0
      %1170 = vmatmul.mubr.f32.gmra.mxu0 %v250
      %v1171 = vpop.f32.mrf.mxu0
      %v1172 = vadd.f32 %v1027, %v1171
      %v1173 = vpop.f32.mrf.mxu0
      %1174 = vmatprep.mubr.f32.mxu0 0.0
      %1175 = vmatmul.mubr.f32.gmra.mxu0 %v259
      %v1176 = vpop.f32.mrf.mxu0
      %v1177 = vadd.f32 %v1032, %v1176
      %v1178 = vpop.f32.mrf.mxu0
      %1179 = vmatprep.mubr.f32.mxu0 0.0
      %1180 = vmatmul.mubr.f32.gmra.mxu0 %v268
      %v1181 = vpop.f32.mrf.mxu0
      %v1182 = vadd.f32 %v1037, %v1181
      %v1183 = vpop.f32.mrf.mxu0
      %1184 = vmatprep.mubr.f32.mxu0 0.0
      %1185 = vmatmul.mubr.f32.gmra.mxu0 %v277
      %v1186 = vpop.f32.mrf.mxu0
      %v1187 = vadd.f32 %v1042, %v1186
      %v1188 = vpop.f32.mrf.mxu0
      %1189 = vmatprep.mubr.f32.mxu0 0.0
      %1190 = vmatmul.mubr.f32.gmra.mxu0 %v286
      %v1191 = vpop.f32.mrf.mxu0
      %v1192 = vadd.f32 %v1047, %v1191
      %v1193 = vpop.f32.mrf.mxu0
      %1194 = vmatprep.mubr.f32.mxu0 0.0
      %1195 = vmatmul.mubr.f32.gmra.mxu0 %v295
      %v1196 = vpop.f32.mrf.mxu0
      %v1197 = vadd.f32 %v1052, %v1196
      %v1198 = vpop.f32.mrf.mxu0
      %1199 = vmatprep.mubr.f32.mxu0 0.0
      %1200 = vmatmul.mubr.f32.gmra.mxu0 %v304
      %v1201 = vpop.f32.mrf.mxu0
      %v1202 = vadd.f32 %v1057, %v1201
      %v1203 = vpop.f32.mrf.mxu0
      %1204 = vmatprep.mubr.f32.mxu0 0.0
      %1205 = vmatmul.mubr.f32.gmra.mxu0 %v313
      %v1206 = vpop.f32.mrf.mxu0
      %v1207 = vadd.f32 %v1062, %v1206
      %v1208 = vpop.f32.mrf.mxu0
      %1209 = vmatprep.mubr.f32.mxu0 0.0
      %1210 = vmatmul.mubr.f32.gmra.mxu0 %v322
      %v1211 = vpop.f32.mrf.mxu0
      %v1212 = vadd.f32 %v1067, %v1211
      %v1213 = vpop.f32.mrf.mxu0
      %1214 = vmatprep.mubr.f32.mxu0 0.0
      %1215 = vmatmul.mubr.f32.gmra.mxu0 %v331
      %v1216 = vpop.f32.mrf.mxu0
      %v1217 = vadd.f32 %v1072, %v1216
      %v1218 = vpop.f32.mrf.mxu0
      %1219 = vmatprep.mubr.f32.mxu0 0.0
      %1220 = vmatmul.mubr.f32.gmra.mxu0 %v340
      %v1221 = vpop.f32.mrf.mxu0
      %v1222 = vadd.f32 %v1077, %v1221
      %v1223 = vpop.f32.mrf.mxu0
      %1224 = vmatprep.mubr.f32.mxu0 0.0
      %1225 = vmatmul.mubr.f32.gmra.mxu0 %v349
      %v1226 = vpop.f32.mrf.mxu0
      %v1227 = vadd.f32 %v1082, %v1226
      %v1228 = vpop.f32.mrf.mxu0
      %1229 = vmatprep.mubr.f32.mxu0 0.0
      %1230 = vmatmul.mubr.f32.gmra.mxu0 %v358
      %v1231 = vpop.f32.mrf.mxu0
      %v1232 = vadd.f32 %v1087, %v1231
      %v1233 = vpop.f32.mrf.mxu0
      %1234 = vdwg.mxu0
      %v1235 = vmax.f32 %v1157, 0.0
      %v1236 = vmax.f32 %v1162, 0.0
      %v1237 = vmax.f32 %v1167, 0.0
      %v1238 = vmax.f32 %v1172, 0.0
      %v1239 = vmax.f32 %v1177, 0.0
      %v1240 = vmax.f32 %v1182, 0.0
      %v1241 = vmax.f32 %v1187, 0.0
      %v1242 = vmax.f32 %v1192, 0.0
      %v1243 = vmax.f32 %v1197, 0.0
      %v1244 = vmax.f32 %v1202, 0.0
      %v1245 = vmax.f32 %v1207, 0.0
      %v1246 = vmax.f32 %v1212, 0.0
      %v1247 = vmax.f32 %v1217, 0.0
      %v1248 = vmax.f32 %v1222, 0.0
      %v1249 = vmax.f32 %v1227, 0.0
      %v1250 = vmax.f32 %v1232, 0.0
      %1251 = vst [vmem:[%s209] sm:$0xff] %v1235
      %1252 = vst [vmem:[%s209 + $0x8] sm:$0xff] %v1236
      %1253 = vst [vmem:[%s209 + $0x10] sm:$0xff] %v1237
      %1254 = vst [vmem:[%s209 + $0x18] sm:$0xff] %v1238
      %1255 = vst [vmem:[%s209 + $0x20] sm:$0xff] %v1239
      %1256 = vst [vmem:[%s209 + $0x28] sm:$0xff] %v1240
      %1257 = vst [vmem:[%s209 + $0x30] sm:$0xff] %v1241
      %1258 = vst [vmem:[%s209 + $0x38] sm:$0xff] %v1242
      %1259 = vst [vmem:[%s209 + $0x40] sm:$0xff] %v1243
      %1260 = vst [vmem:[%s209 + $0x48] sm:$0xff] %v1244
      %1261 = vst [vmem:[%s209 + $0x50] sm:$0xff] %v1245
      %1262 = vst [vmem:[%s209 + $0x58] sm:$0xff] %v1246
      %1263 = vst [vmem:[%s209 + $0x60] sm:$0xff] %v1247
      %1264 = vst [vmem:[%s209 + $0x68] sm:$0xff] %v1248
      %1265 = vst [vmem:[%s209 + $0x70] sm:$0xff] %v1249
      %1266 = vst [vmem:[%s209 + $0x78] sm:$0xff] %v1250
      %v1267 = vadd.f32 %v1235, %v1236
      %v1268 = vadd.f32 %v1267, %v1237
      %v1269 = vadd.f32 %v1268, %v1238
      %v1270 = vadd.f32 %v1269, %v1239
      %v1271 = vadd.f32 %v1270, %v1240
      %v1272 = vadd.f32 %v1271, %v1241
      %v1273 = vadd.f32 %v1272, %v1242
      %v1274 = vadd.f32 %v1273, %v1243
      %v1275 = vadd.f32 %v1274, %v1244
      %v1276 = vadd.f32 %v1275, %v1245
      %v1277 = vadd.f32 %v1276, %v1246
      %v1278 = vadd.f32 %v1277, %v1247
      %v1279 = vadd.f32 %v1278, %v1248
      %v1280 = vadd.f32 %v1279, %v1249
      %v1281 = vadd.f32 %v1280, %v1250
      %v1282 = vrot.slane %v1281, 4
      %v1283 = vadd.f32 %v1281, %v1282
      %v1284 = vrot.slane %v1283, 2
      %v1285 = vadd.f32 %v1283, %v1284
      %v1286 = vrot.slane %v1285, 1
      %v1287 = vadd.f32 %v1285, %v1286
      %v1288 = vmul.f32 %v1235, %v1235
      %v1289 = vmul.f32 %v1236, %v1236
      %v1290 = vmul.f32 %v1237, %v1237
      %v1291 = vmul.f32 %v1238, %v1238
      %v1292 = vmul.f32 %v1239, %v1239
      %v1293 = vmul.f32 %v1240, %v1240
      %v1294 = vmul.f32 %v1241, %v1241
      %v1295 = vmul.f32 %v1242, %v1242
      %v1296 = vmul.f32 %v1243, %v1243
      %v1297 = vmul.f32 %v1244, %v1244
      %v1298 = vmul.f32 %v1245, %v1245
      %v1299 = vmul.f32 %v1246, %v1246
      %v1300 = vmul.f32 %v1247, %v1247
      %v1301 = vmul.f32 %v1248, %v1248
      %v1302 = vmul.f32 %v1249, %v1249
      %v1303 = vmul.f32 %v1250, %v1250
      %v1304 = vadd.f32 %v1288, %v1289
      %v1305 = vadd.f32 %v1304, %v1290
      %v1306 = vadd.f32 %v1305, %v1291
      %v1307 = vadd.f32 %v1306, %v1292
      %v1308 = vadd.f32 %v1307, %v1293
      %v1309 = vadd.f32 %v1308, %v1294
      %v1310 = vadd.f32 %v1309, %v1295
      %v1311 = vadd.f32 %v1310, %v1296
      %v1312 = vadd.f32 %v1311, %v1297
      %v1313 = vadd.f32 %v1312, %v1298
      %v1314 = vadd.f32 %v1313, %v1299
      %v1315 = vadd.f32 %v1314, %v1300
      %v1316 = vadd.f32 %v1315, %v1301
      %v1317 = vadd.f32 %v1316, %v1302
      %v1318 = vadd.f32 %v1317, %v1303
      %v1319 = vrot.slane %v1318, 4
      %v1320 = vadd.f32 %v1318, %v1319
      %v1321 = vrot.slane %v1320, 2
      %v1322 = vadd.f32 %v1320, %v1321
      %v1323 = vrot.slane %v1322, 1
      %v1324 = vadd.f32 %v1322, %v1323
      %vm1325 = vcmask 1040384
      %v1326 = vsel %vm1325, %v1287, %v1324
      %1327 = vst [vmem:[%s214] sm:$0x3] %v1326
      %s1328 = smul.u32 16, %s16
      %p1329 = scmp.lt.s32.totalorder %s1328, 63
      %s1330 = scalar_select %p1329, %s1328, 63
      %s1331 = smul.addr %s1330, 8
      %s1332 = scalar_lea.vmem %s3, %s1331
      %p1333 = scmp.lt.s32.totalorder %s16, 3
      %s1334 = scalar_select %p1333, %s16, 3
      %s1335 = smul.addr %s1334, 2
      %s1336 = scalar_lea.vmem %s4, %s1335
      // Predicated region
      $region33: #{mynet_forward.8} parent=31 // pred_check
        %p1337 = pneg %p102
      $region34: #{mynet_forward.8} parent=31 // pred_check_branch
        %1339 = sbr.rel (%p1337) target = $region36
      $region35: #{mynet_forward.8} parent=31 // pred_region
        %s1340 = smul.u32 16, %s16
      $region36: #{mynet_forward.8} parent=31 // pred_fallthru
        _
      // Predicated region
      $region37: #{mynet_forward.8} parent=31 // pred_check
        %p1341 = pneg %p128
      $region38: #{mynet_forward.8} parent=31 // pred_check_branch
        %1343 = sbr.rel (%p1341) target = $region40
      $region39: #{mynet_forward.8} parent=31 // pred_region
        _
      $region40: #{mynet_forward.8} parent=31 // pred_fallthru
        _
    $region32: #{mynet_forward.8} parent=5 // pred_fallthru
      _
    %p1344 = scmp.le.s32.totalorder 2, %s11
    // Predicated region
    $region41: #{mynet_forward.8} parent=5 // pred_check
      %p1345 = pneg %p1344
    $region42: #{mynet_forward.8} parent=5 // pred_check_branch
      %1347 = sbr.rel (%p1345) target = $region44
    $region43: #{mynet_forward.8} parent=5 // pred_region
      %s1348 = ssub.s32 %s11, 2
      // Predicated region
      $region45: #{mynet_forward.8} parent=43 // pred_check
        %p1349 = pneg %p108
      $region46: #{mynet_forward.8} parent=43 // pred_check_branch
        %1351 = sbr.rel (%p1349) target = $region48
      $region47: #{mynet_forward.8} parent=43 // pred_region
        %s1352 = smul.u32 16, %s17
        %p1353 = scmp.lt.s32.totalorder %s1352, 63
        %s1354 = scalar_select %p1353, %s1352, 63
        %s1355 = smul.addr %s1354, 8
        %s1356 = scalar_lea.vmem %s3, %s1355
      $region48: #{mynet_forward.8} parent=43 // pred_fallthru
        _
      // Predicated region
      $region49: #{mynet_forward.8} parent=43 // pred_check
        %p1357 = pneg %p134
      $region50: #{mynet_forward.8} parent=43 // pred_check_branch
        %1359 = sbr.rel (%p1357) target = $region52
      $region51: #{mynet_forward.8} parent=43 // pred_region
        %p1360 = scmp.lt.s32.totalorder %s17, 3
        %s1361 = scalar_select %p1360, %s17, 3
        %s1362 = smul.addr %s1361, 2
        %s1363 = scalar_lea.vmem %s4, %s1362
      $region52: #{mynet_forward.8} parent=43 // pred_fallthru
        _
    $region44: #{mynet_forward.8} parent=5 // pred_fallthru
      _
  $region6: #{mynet_forward.8} parent=0 // loop_footer
    %s15 = sadd.s32 1, %s11
  $region7: #{mynet_forward.8} parent=0 // loop_footer_branch
    %10 = sbr.rel target = $region3
  $region8: #{mynet_forward.8} parent=0 // loop_exit
    _

</llo_original>
